<compile_context>
chip_gen: v7x
topology: tpu7x:2x2x1
jax: 0.10.0
libtpu: 0.0.40
codegen_flags: <defaults>
</compile_context>

<pallas_src>
import functools

import jax
import jax.numpy as jnp
import numpy as np
from jax.experimental import pallas as pl
from jax.experimental.pallas import tpu as pltpu


def _leaky_relu(x, slope=0.2):
    # max(x, slope*x): 2 VPU ops instead of cmp+mul+select.
    return jnp.maximum(x, slope * x)


def _conv3x3_rows_valid(h, w_ref, b_ref, n_rows_in, W):
    """3x3 conv over a flat (Cin, n_rows_in*W) slab.

    Vertical direction is VALID (the slab already carries the halo / zero
    rows); horizontal direction is SAME via left/right column masks.
    Per-tap accumulation: nine (Cout,Cin)@(Cin,L) bf16 MXU dots into an f32
    accumulator -- no (9*Cin, L) im2col slab is ever materialized.

    h     : (Cin, n_rows_in*W) bf16
    w_ref : (9, Cout, Cin)     bf16  (tap-major, k = dy*3 + dx)
    b_ref : (Cout, 1)          f32
    returns (Cout, (n_rows_in-2)*W) f32 (bias added, no activation)
    """
    cin = h.shape[0]
    cout = w_ref.shape[1]
    Lo = (n_rows_in - 2) * W

    # Hoisted, pre-broadcast column masks (reused by the 3 taps per side).
    col = jax.lax.broadcasted_iota(jnp.int32, (1, Lo), 1) % W
    not_left = jnp.broadcast_to(col != 0, (cin, Lo))
    not_right = jnp.broadcast_to(col != (W - 1), (cin, Lo))
    zero = jnp.zeros((), h.dtype)

    # 1-element flat pad on each side so every tap offset dy*W + dx is a
    # non-negative, in-bounds static lane slice (cross-row reads are masked).
    zcol = jnp.zeros((cin, 1), h.dtype)
    hp = jnp.concatenate([zcol, h, zcol], axis=1)        # (Cin, n_rows_in*W + 2)

    acc = jnp.broadcast_to(b_ref[...], (cout, Lo)).astype(jnp.float32)
    k = 0
    for dy in range(3):
        for dx in range(3):
            tap = hp[:, dy * W + dx: dy * W + dx + Lo]   # (Cin, Lo) bf16
            if dx == 0:
                tap = jnp.where(not_left, tap, zero)
            elif dx == 2:
                tap = jnp.where(not_right, tap, zero)
            acc = acc + jnp.dot(w_ref[k], tap,
                                preferred_element_type=jnp.float32)
            k += 1
    return acc


def _fused_net_kernel(x_ref, w1_ref, b1_ref, w2_ref, b2_ref, w3_ref, b3_ref,
                      o_ref, *, H, W, TH):
    """Fused conv1+LReLU -> conv2+LReLU -> conv3 for one TH-row output tile.

    x_ref : (1, Cin8, (H+4)*W) bf16  whole image, 2 zero rows padded top/bottom
    w1_ref: (9, CE, Cin8) bf16 ; b1_ref: (CE, 1) f32
    w2_ref: (9, CE, CE)   bf16 ; b2_ref: (CE, 1) f32
    w3_ref: (C,  CE)      bf16 ; b3_ref: (C, 1)  f32
    o_ref : (1, C, TH*W) f32
    """
    t = pl.program_id(1)
    r0 = t * TH                        # first output row of this tile

    slab_rows = TH + 4                 # input rows needed (2-row halo per side)
    mid_rows = TH + 2                  # conv1-output rows needed by conv2
    L_mid = mid_rows * W

    # Input slab: padded rows [r0, r0 + TH + 4), as a flat lane slice.
    start = r0 * W
    if (TH * W) % 128 == 0:
        start = pl.multiple_of(start, 128)
    x_slab = x_ref[0, :, pl.ds(start, slab_rows * W)]    # (Cin8, slab_rows*W)

    # conv1 (3x3 SAME) + LeakyReLU over the haloed slab -> TH+2 rows.
    h1 = _leaky_relu(_conv3x3_rows_valid(x_slab, w1_ref, b1_ref, slab_rows, W))
    # Halo rows that fall outside the image are conv2's SAME padding: force
    # them to exactly zero (the conv1 bias would otherwise make them nonzero).
    lane = jax.lax.broadcasted_iota(jnp.int32, (1, L_mid), 1)
    top_bad = jnp.logical_and(lane < W, r0 == 0)
    bot_bad = jnp.logical_and(lane >= (TH + 1) * W, r0 + TH >= H)
    h1 = jnp.where(jnp.logical_or(top_bad, bot_bad), 0.0, h1)
    h1 = h1.astype(jnp.bfloat16)

    # conv2 (3x3 SAME) + LeakyReLU -> TH rows.
    h2 = _leaky_relu(_conv3x3_rows_valid(h1, w2_ref, b2_ref, mid_rows, W))
    h2 = h2.astype(jnp.bfloat16)

    # conv3 (1x1).
    out = jnp.dot(w3_ref[...], h2, preferred_element_type=jnp.float32)
    out = out + b3_ref[...]
    o_ref[0] = out.astype(o_ref.dtype)


def _pick_tile_rows(H, W, chan_embed):
    """Largest row tile that divides H, keeps the f32 conv slabs to a few MiB
    (fits default scoped VMEM on every generation incl. v7x), is lane-dense
    (TH*W % 128 == 0), and leaves >= 2 tiles so the spatial grid axis can be
    megacore-parallel even at batch 1."""
    budget_bytes = 4 << 20                      # per f32 activation slab
    max_rows = max(1, budget_bytes // (chan_embed * W * 4))
    divisors = [d for d in range(1, H + 1) if H % d == 0 and d <= max_rows]
    dense = [d for d in divisors if (d * W) % 128 == 0]
    if not dense:
        return H                                # full-dim block is always legal
    multi = [d for d in dense if d <= H // 2] or dense
    return max(multi)


@jax.jit
def network_forward(x_nchw, params):
    """Matches `network.forward`; NCHW in/out like PyTorch."""
    N, C, H, W = x_nchw.shape
    w1, b1 = params["w1"], params["b1"]
    w2, b2 = params["w2"], params["b2"]
    w3, b3 = params["w3"], params["b3"]
    CE = w1.shape[0]

    TH = _pick_tile_rows(H, W, CE)
    n_tiles = H // TH
    C_pad = -(-C // 8) * 8                      # sublane-align conv1 input chans

    # Weights: OIHW -> tap-major (9, Cout, Cin), cast to bf16 for the MXU.
    w1t = jnp.transpose(w1, (2, 3, 0, 1)).reshape(9, CE, C)
    w1t = jnp.pad(w1t, ((0, 0), (0, 0), (0, C_pad - C))).astype(jnp.bfloat16)
    w2t = jnp.transpose(w2, (2, 3, 0, 1)).reshape(9, CE, CE).astype(jnp.bfloat16)
    w3m = w3.reshape(C, CE).astype(jnp.bfloat16)
    b1c = b1.reshape(CE, 1).astype(jnp.float32)
    b2c = b2.reshape(CE, 1).astype(jnp.float32)
    b3c = b3.reshape(C, 1).astype(jnp.float32)

    # Input: channels padded to C_pad, 2 zero rows top/bottom (vertical SAME
    # padding + tile halo), spatial flattened onto lanes, cast to bf16.
    xp = jnp.pad(x_nchw, ((0, 0), (0, C_pad - C), (2, 2), (0, 0)))
    L_img = (H + 4) * W
    x_flat = xp.reshape(N, C_pad, L_img).astype(jnp.bfloat16)

    kernel = functools.partial(_fused_net_kernel, H=H, W=W, TH=TH)

    flops = 2 * N * H * W * (9 * C_pad * CE + 9 * CE * CE + CE * C)
    bytes_accessed = (N * C_pad * L_img * 2 + N * C * H * W * 4
                      + (9 * CE * C_pad + 9 * CE * CE + C * CE) * 2
                      + (2 * CE + C) * 4)

    # Explicit scoped-VMEM budget (v5e default is only 16 MiB): actual need
    # with generous headroom, capped at 32 MiB.
    act_bytes = CE * (TH + 4) * W * 4
    need = 2 * (C_pad * L_img * 2 + C * TH * W * 4) + 16 * act_bytes + (1 << 20)
    vmem_limit = int(min(max(4 * need, 8 << 20), 32 << 20))

    out = pl.pallas_call(
        kernel,
        out_shape=jax.ShapeDtypeStruct((N, C, H * W), jnp.float32),
        grid=(N, n_tiles),
        in_specs=[
            pl.BlockSpec((1, C_pad, L_img), lambda n, t: (n, 0, 0)),
            pl.BlockSpec((9, CE, C_pad), lambda n, t: (0, 0, 0)),
            pl.BlockSpec((CE, 1), lambda n, t: (0, 0)),
            pl.BlockSpec((9, CE, CE), lambda n, t: (0, 0, 0)),
            pl.BlockSpec((CE, 1), lambda n, t: (0, 0)),
            pl.BlockSpec((C, CE), lambda n, t: (0, 0)),
            pl.BlockSpec((C, 1), lambda n, t: (0, 0)),
        ],
        out_specs=pl.BlockSpec((1, C, TH * W), lambda n, t: (n, 0, t)),
        compiler_params=pltpu.CompilerParams(
            dimension_semantics=("parallel", "parallel"),
            vmem_limit_bytes=vmem_limit),
        cost_estimate=pl.CostEstimate(flops=int(flops), transcendentals=0,
                                      bytes_accessed=int(bytes_accessed)),
    )(x_flat, w1t, b1c, w2t, b2c, w3m, b3c)
    return out.reshape(N, C, H, W)


def init_params(key, n_chan, chan_embed=48):
    """Deterministic synthetic parameters, PyTorch OIHW layout & uniform bounds."""
    ks = jax.random.split(key, 6)

    def u(k, shape, fan_in):
        bound = 1.0 / np.sqrt(fan_in)
        return jax.random.uniform(k, shape, jnp.float32, -bound, bound)

    w1 = u(ks[0], (chan_embed, n_chan, 3, 3), n_chan * 9)
    b1 = u(ks[1], (chan_embed,), n_chan * 9)
    w2 = u(ks[2], (chan_embed, chan_embed, 3, 3), chan_embed * 9)
    b2 = u(ks[3], (chan_embed,), chan_embed * 9)
    w3 = u(ks[4], (n_chan, chan_embed, 1, 1), chan_embed)
    b3 = u(ks[5], (n_chan,), chan_embed)
    return dict(w1=w1, b1=b1, w2=w2, b2=b2, w3=w3, b3=b3)


def _reference_forward(x_nchw, params):
    """Pure-JAX f32 reference (lax conv in NCHW) for a correctness cross-check."""
    def conv(x, w, b, act, pad):
        y = jax.lax.conv_general_dilated(
            x, w, window_strides=(1, 1), padding=[(pad, pad), (pad, pad)],
            dimension_numbers=("NCHW", "OIHW", "NCHW"))
        y = y + b[None, :, None, None]
        return jnp.where(y >= 0, y, 0.2 * y) if act else y

    x = conv(x_nchw, params["w1"], params["b1"], True, 1)
    x = conv(x, params["w2"], params["b2"], True, 1)
    x = conv(x, params["w3"], params["b3"], False, 0)
    return x


if __name__ == "__main__":
    key = jax.random.PRNGKey(0)
    k_x, k_p = jax.random.split(key)

    N, C, H, W = 2, 4, 16, 16          # small shapes consistent with the module
    x = jax.random.normal(k_x, (N, C, H, W), jnp.float32)
    params = init_params(k_p, n_chan=C, chan_embed=48)

    out = jax.block_until_ready(network_forward(x, params))
    ref = jax.block_until_ready(_reference_forward(x, params))

    assert out.shape == (N, C, H, W)
    # bf16 MXU inputs -> loosen tolerance vs. the f32 reference (expected).
    np.testing.assert_allclose(np.asarray(out), np.asarray(ref),
                               rtol=2e-2, atol=2e-2)
    print("KERNEL_OK")
</pallas_src>

<mosaic_0001>
module attributes {stable_mosaic.version = 11 : i64} {
  func.func @_fused_net_kernel(%arg0: i32, %arg1: i32, %arg2: memref<1x8x320xbf16, #tpu.memory_space<vmem>>, %arg3: memref<9x48x8xbf16, #tpu.memory_space<vmem>>, %arg4: memref<48x1xf32, #tpu.memory_space<vmem>>, %arg5: memref<9x48x48xbf16, #tpu.memory_space<vmem>>, %arg6: memref<48x1xf32, #tpu.memory_space<vmem>>, %arg7: memref<4x48xbf16, #tpu.memory_space<vmem>>, %arg8: memref<4x1xf32, #tpu.memory_space<vmem>>, %arg9: memref<1x4x128xf32, #tpu.memory_space<vmem>>) attributes {dimension_semantics = [#tpu.dimension_semantics<parallel>, #tpu.dimension_semantics<parallel>], iteration_bounds = array<i64: 2, 2>, scalar_prefetch = 0 : i64, scratch_operands = 0 : i64, tpu.core_type = #tpu.core_type<tc>, window_params = [{transform_indices = @transform_0, window_bounds = array<i64: 1, 8, 320>}, {pipeline_mode = #tpu.pipeline_mode<synchronous>, transform_indices = @transform_1, window_bounds = array<i64: 9, 48, 8>}, {pipeline_mode = #tpu.pipeline_mode<synchronous>, transform_indices = @transform_2, window_bounds = array<i64: 48, 1>}, {pipeline_mode = #tpu.pipeline_mode<synchronous>, transform_indices = @transform_3, window_bounds = array<i64: 9, 48, 48>}, {pipeline_mode = #tpu.pipeline_mode<synchronous>, transform_indices = @transform_4, window_bounds = array<i64: 48, 1>}, {pipeline_mode = #tpu.pipeline_mode<synchronous>, transform_indices = @transform_5, window_bounds = array<i64: 4, 48>}, {pipeline_mode = #tpu.pipeline_mode<synchronous>, transform_indices = @transform_6, window_bounds = array<i64: 4, 1>}, {transform_indices = @transform_7, window_bounds = array<i64: 1, 4, 128>}]} {
    %c8_i32 = arith.constant 8 : i32
    %0 = arith.muli %arg1, %c8_i32 : i32
    %c16_i32 = arith.constant 16 : i32
    %1 = arith.muli %0, %c16_i32 : i32
    %2 = tpu.assume_multiple %1, 128 : i32
    %c0 = arith.constant 0 : index
    %c0_0 = arith.constant 0 : index
    %3 = arith.index_cast %2 : i32 to index
    %4 = vector.load %arg2[%c0, %c0_0, %3] : memref<1x8x320xbf16, #tpu.memory_space<vmem>>, vector<1x8x192xbf16>
    %5 = vector.shape_cast %4 : vector<1x8x192xbf16> to vector<8x192xbf16>
    %6 = tpu.iota {dimensions = array<i32: 1>} : vector<1x160xi32>
    %c16_i32_1 = arith.constant 16 : i32
    %c0_i32 = arith.constant 0 : i32
    %7 = arith.cmpi eq, %c16_i32_1, %c0_i32 : i32
    %c1_i32 = arith.constant 1 : i32
    %8 = arith.select %7, %c1_i32, %c16_i32_1 : i32
    %9 = vector.broadcast %8 : i32 to vector<1x160xi32>
    %10 = arith.remsi %6, %9 : vector<1x160xi32>
    %c0_i32_2 = arith.constant 0 : i32
    %11 = vector.broadcast %c0_i32_2 : i32 to vector<1x160xi32>
    %12 = arith.cmpi ne, %10, %11 : vector<1x160xi32>
    %c0_i32_3 = arith.constant 0 : i32
    %13 = vector.broadcast %c0_i32_3 : i32 to vector<1x160xi32>
    %14 = arith.cmpi slt, %10, %13 : vector<1x160xi32>
    %c0_i32_4 = arith.constant 0 : i32
    %15 = arith.cmpi slt, %8, %c0_i32_4 : i32
    %16 = vector.broadcast %15 : i1 to vector<1x160xi1>
    %17 = vector.broadcast %16 : vector<1x160xi1> to vector<1x160xi1>
    %18 = arith.xori %14, %17 : vector<1x160xi1>
    %19 = arith.andi %18, %12 : vector<1x160xi1>
    %20 = vector.broadcast %8 : i32 to vector<1x160xi32>
    %21 = arith.addi %10, %20 : vector<1x160xi32>
    %22 = arith.select %19, %21, %10 : vector<1x160xi1>, vector<1x160xi32>
    %c0_i32_5 = arith.constant 0 : i32
    %23 = vector.broadcast %c0_i32_5 : i32 to vector<1x160xi32>
    %24 = arith.cmpi ne, %22, %23 : vector<1x160xi32>
    %25 = vector.shape_cast %24 : vector<1x160xi1> to vector<1x160xi1>
    %26 = vector.broadcast %25 : vector<1x160xi1> to vector<8x160xi1>
    %c15_i32 = arith.constant 15 : i32
    %27 = vector.broadcast %c15_i32 : i32 to vector<1x160xi32>
    %28 = arith.cmpi ne, %22, %27 : vector<1x160xi32>
    %29 = vector.shape_cast %28 : vector<1x160xi1> to vector<1x160xi1>
    %30 = vector.broadcast %29 : vector<1x160xi1> to vector<8x160xi1>
    %cst = arith.constant 0.000000e+00 : bf16
    %31 = vector.broadcast %cst : bf16 to vector<8x1xbf16>
    %32 = tpu.concatenate %31, %5, %31 in 1 : vector<8x1xbf16>, vector<8x192xbf16>, vector<8x1xbf16> -> vector<8x194xbf16>
    %c0_6 = arith.constant 0 : index
    %c0_7 = arith.constant 0 : index
    %33 = vector.load %arg4[%c0_6, %c0_7] : memref<48x1xf32, #tpu.memory_space<vmem>>, vector<48x1xf32>
    %34 = vector.shape_cast %33 : vector<48x1xf32> to vector<48x1xf32>
    %35 = vector.broadcast %34 : vector<48x1xf32> to vector<48x160xf32>
    %36 = vector.extract_strided_slice %32 {offsets = [0, 0], sizes = [8, 160], strides = [1, 1]} : vector<8x194xbf16> to vector<8x160xbf16>
    %cst_8 = arith.constant 0.000000e+00 : bf16
    %37 = vector.broadcast %cst_8 : bf16 to vector<8x160xbf16>
    %38 = arith.select %26, %36, %37 : vector<8x160xi1>, vector<8x160xbf16>
    %c0_9 = arith.constant 0 : index
    %c0_10 = arith.constant 0 : index
    %c0_11 = arith.constant 0 : index
    %39 = vector.load %arg3[%c0_9, %c0_10, %c0_11] : memref<9x48x8xbf16, #tpu.memory_space<vmem>>, vector<1x48x8xbf16>
    %40 = vector.shape_cast %39 : vector<1x48x8xbf16> to vector<48x8xbf16>
    %cst_12 = arith.constant dense<0.000000e+00> : vector<48x160xf32>
    %41 = tpu.matmul %40, %38, %cst_12 {dimension_numbers = #tpu.dot_dimension_numbers<[1], [0], [0], [1], [0, 0, 1, 1], [], []>} : vector<48x8xbf16>, vector<8x160xbf16>, vector<48x160xf32> -> vector<48x160xf32>
    %42 = arith.addf %35, %41 : vector<48x160xf32>
    %43 = vector.extract_strided_slice %32 {offsets = [0, 1], sizes = [8, 160], strides = [1, 1]} : vector<8x194xbf16> to vector<8x160xbf16>
    %c1 = arith.constant 1 : index
    %c0_13 = arith.constant 0 : index
    %c0_14 = arith.constant 0 : index
    %44 = vector.load %arg3[%c1, %c0_13, %c0_14] : memref<9x48x8xbf16, #tpu.memory_space<vmem>>, vector<1x48x8xbf16>
    %45 = vector.shape_cast %44 : vector<1x48x8xbf16> to vector<48x8xbf16>
    %cst_15 = arith.constant dense<0.000000e+00> : vector<48x160xf32>
    %46 = tpu.matmul %45, %43, %cst_15 {dimension_numbers = #tpu.dot_dimension_numbers<[1], [0], [0], [1], [0, 0, 1, 1], [], []>} : vector<48x8xbf16>, vector<8x160xbf16>, vector<48x160xf32> -> vector<48x160xf32>
    %47 = arith.addf %42, %46 : vector<48x160xf32>
    %48 = vector.extract_strided_slice %32 {offsets = [0, 2], sizes = [8, 160], strides = [1, 1]} : vector<8x194xbf16> to vector<8x160xbf16>
    %cst_16 = arith.constant 0.000000e+00 : bf16
    %49 = vector.broadcast %cst_16 : bf16 to vector<8x160xbf16>
    %50 = arith.select %30, %48, %49 : vector<8x160xi1>, vector<8x160xbf16>
    %c2 = arith.constant 2 : index
    %c0_17 = arith.constant 0 : index
    %c0_18 = arith.constant 0 : index
    %51 = vector.load %arg3[%c2, %c0_17, %c0_18] : memref<9x48x8xbf16, #tpu.memory_space<vmem>>, vector<1x48x8xbf16>
    %52 = vector.shape_cast %51 : vector<1x48x8xbf16> to vector<48x8xbf16>
    %cst_19 = arith.constant dense<0.000000e+00> : vector<48x160xf32>
    %53 = tpu.matmul %52, %50, %cst_19 {dimension_numbers = #tpu.dot_dimension_numbers<[1], [0], [0], [1], [0, 0, 1, 1], [], []>} : vector<48x8xbf16>, vector<8x160xbf16>, vector<48x160xf32> -> vector<48x160xf32>
    %54 = arith.addf %47, %53 : vector<48x160xf32>
    %55 = vector.extract_strided_slice %32 {offsets = [0, 16], sizes = [8, 160], strides = [1, 1]} : vector<8x194xbf16> to vector<8x160xbf16>
    %cst_20 = arith.constant 0.000000e+00 : bf16
    %56 = vector.broadcast %cst_20 : bf16 to vector<8x160xbf16>
    %57 = arith.select %26, %55, %56 : vector<8x160xi1>, vector<8x160xbf16>
    %c3 = arith.constant 3 : index
    %c0_21 = arith.constant 0 : index
    %c0_22 = arith.constant 0 : index
    %58 = vector.load %arg3[%c3, %c0_21, %c0_22] : memref<9x48x8xbf16, #tpu.memory_space<vmem>>, vector<1x48x8xbf16>
    %59 = vector.shape_cast %58 : vector<1x48x8xbf16> to vector<48x8xbf16>
    %cst_23 = arith.constant dense<0.000000e+00> : vector<48x160xf32>
    %60 = tpu.matmul %59, %57, %cst_23 {dimension_numbers = #tpu.dot_dimension_numbers<[1], [0], [0], [1], [0, 0, 1, 1], [], []>} : vector<48x8xbf16>, vector<8x160xbf16>, vector<48x160xf32> -> vector<48x160xf32>
    %61 = arith.addf %54, %60 : vector<48x160xf32>
    %62 = vector.extract_strided_slice %32 {offsets = [0, 17], sizes = [8, 160], strides = [1, 1]} : vector<8x194xbf16> to vector<8x160xbf16>
    %c4 = arith.constant 4 : index
    %c0_24 = arith.constant 0 : index
    %c0_25 = arith.constant 0 : index
    %63 = vector.load %arg3[%c4, %c0_24, %c0_25] : memref<9x48x8xbf16, #tpu.memory_space<vmem>>, vector<1x48x8xbf16>
    %64 = vector.shape_cast %63 : vector<1x48x8xbf16> to vector<48x8xbf16>
    %cst_26 = arith.constant dense<0.000000e+00> : vector<48x160xf32>
    %65 = tpu.matmul %64, %62, %cst_26 {dimension_numbers = #tpu.dot_dimension_numbers<[1], [0], [0], [1], [0, 0, 1, 1], [], []>} : vector<48x8xbf16>, vector<8x160xbf16>, vector<48x160xf32> -> vector<48x160xf32>
    %66 = arith.addf %61, %65 : vector<48x160xf32>
    %67 = vector.extract_strided_slice %32 {offsets = [0, 18], sizes = [8, 160], strides = [1, 1]} : vector<8x194xbf16> to vector<8x160xbf16>
    %cst_27 = arith.constant 0.000000e+00 : bf16
    %68 = vector.broadcast %cst_27 : bf16 to vector<8x160xbf16>
    %69 = arith.select %30, %67, %68 : vector<8x160xi1>, vector<8x160xbf16>
    %c5 = arith.constant 5 : index
    %c0_28 = arith.constant 0 : index
    %c0_29 = arith.constant 0 : index
    %70 = vector.load %arg3[%c5, %c0_28, %c0_29] : memref<9x48x8xbf16, #tpu.memory_space<vmem>>, vector<1x48x8xbf16>
    %71 = vector.shape_cast %70 : vector<1x48x8xbf16> to vector<48x8xbf16>
    %cst_30 = arith.constant dense<0.000000e+00> : vector<48x160xf32>
    %72 = tpu.matmul %71, %69, %cst_30 {dimension_numbers = #tpu.dot_dimension_numbers<[1], [0], [0], [1], [0, 0, 1, 1], [], []>} : vector<48x8xbf16>, vector<8x160xbf16>, vector<48x160xf32> -> vector<48x160xf32>
    %73 = arith.addf %66, %72 : vector<48x160xf32>
    %74 = vector.extract_strided_slice %32 {offsets = [0, 32], sizes = [8, 160], strides = [1, 1]} : vector<8x194xbf16> to vector<8x160xbf16>
    %cst_31 = arith.constant 0.000000e+00 : bf16
    %75 = vector.broadcast %cst_31 : bf16 to vector<8x160xbf16>
    %76 = arith.select %26, %74, %75 : vector<8x160xi1>, vector<8x160xbf16>
    %c6 = arith.constant 6 : index
    %c0_32 = arith.constant 0 : index
    %c0_33 = arith.constant 0 : index
    %77 = vector.load %arg3[%c6, %c0_32, %c0_33] : memref<9x48x8xbf16, #tpu.memory_space<vmem>>, vector<1x48x8xbf16>
    %78 = vector.shape_cast %77 : vector<1x48x8xbf16> to vector<48x8xbf16>
    %cst_34 = arith.constant dense<0.000000e+00> : vector<48x160xf32>
    %79 = tpu.matmul %78, %76, %cst_34 {dimension_numbers = #tpu.dot_dimension_numbers<[1], [0], [0], [1], [0, 0, 1, 1], [], []>} : vector<48x8xbf16>, vector<8x160xbf16>, vector<48x160xf32> -> vector<48x160xf32>
    %80 = arith.addf %73, %79 : vector<48x160xf32>
    %81 = vector.extract_strided_slice %32 {offsets = [0, 33], sizes = [8, 160], strides = [1, 1]} : vector<8x194xbf16> to vector<8x160xbf16>
    %c7 = arith.constant 7 : index
    %c0_35 = arith.constant 0 : index
    %c0_36 = arith.constant 0 : index
    %82 = vector.load %arg3[%c7, %c0_35, %c0_36] : memref<9x48x8xbf16, #tpu.memory_space<vmem>>, vector<1x48x8xbf16>
    %83 = vector.shape_cast %82 : vector<1x48x8xbf16> to vector<48x8xbf16>
    %cst_37 = arith.constant dense<0.000000e+00> : vector<48x160xf32>
    %84 = tpu.matmul %83, %81, %cst_37 {dimension_numbers = #tpu.dot_dimension_numbers<[1], [0], [0], [1], [0, 0, 1, 1], [], []>} : vector<48x8xbf16>, vector<8x160xbf16>, vector<48x160xf32> -> vector<48x160xf32>
    %85 = arith.addf %80, %84 : vector<48x160xf32>
    %86 = vector.extract_strided_slice %32 {offsets = [0, 34], sizes = [8, 160], strides = [1, 1]} : vector<8x194xbf16> to vector<8x160xbf16>
    %cst_38 = arith.constant 0.000000e+00 : bf16
    %87 = vector.broadcast %cst_38 : bf16 to vector<8x160xbf16>
    %88 = arith.select %30, %86, %87 : vector<8x160xi1>, vector<8x160xbf16>
    %c8 = arith.constant 8 : index
    %c0_39 = arith.constant 0 : index
    %c0_40 = arith.constant 0 : index
    %89 = vector.load %arg3[%c8, %c0_39, %c0_40] : memref<9x48x8xbf16, #tpu.memory_space<vmem>>, vector<1x48x8xbf16>
    %90 = vector.shape_cast %89 : vector<1x48x8xbf16> to vector<48x8xbf16>
    %cst_41 = arith.constant dense<0.000000e+00> : vector<48x160xf32>
    %91 = tpu.matmul %90, %88, %cst_41 {dimension_numbers = #tpu.dot_dimension_numbers<[1], [0], [0], [1], [0, 0, 1, 1], [], []>} : vector<48x8xbf16>, vector<8x160xbf16>, vector<48x160xf32> -> vector<48x160xf32>
    %92 = arith.addf %85, %91 : vector<48x160xf32>
    %cst_42 = arith.constant 2.000000e-01 : f32
    %93 = vector.broadcast %cst_42 : f32 to vector<48x160xf32>
    %94 = arith.mulf %93, %92 : vector<48x160xf32>
    %95 = arith.maximumf %92, %94 : vector<48x160xf32>
    %96 = tpu.iota {dimensions = array<i32: 1>} : vector<1x160xi32>
    %c16_i32_43 = arith.constant 16 : i32
    %97 = vector.broadcast %c16_i32_43 : i32 to vector<1x160xi32>
    %98 = arith.cmpi slt, %96, %97 : vector<1x160xi32>
    %c0_i32_44 = arith.constant 0 : i32
    %99 = arith.cmpi eq, %0, %c0_i32_44 : i32
    %100 = vector.broadcast %99 : i1 to vector<1x160xi1>
    %101 = arith.andi %98, %100 : vector<1x160xi1>
    %c144_i32 = arith.constant 144 : i32
    %102 = vector.broadcast %c144_i32 : i32 to vector<1x160xi32>
    %103 = arith.cmpi sge, %96, %102 : vector<1x160xi32>
    %c8_i32_45 = arith.constant 8 : i32
    %104 = arith.addi %0, %c8_i32_45 : i32
    %c16_i32_46 = arith.constant 16 : i32
    %105 = arith.cmpi sge, %104, %c16_i32_46 : i32
    %106 = vector.broadcast %105 : i1 to vector<1x160xi1>
    %107 = arith.andi %103, %106 : vector<1x160xi1>
    %108 = arith.ori %101, %107 : vector<1x160xi1>
    %cst_47 = arith.constant 0.000000e+00 : f32
    %109 = vector.shape_cast %108 : vector<1x160xi1> to vector<1x160xi1>
    %110 = vector.broadcast %109 : vector<1x160xi1> to vector<48x160xi1>
    %111 = vector.broadcast %cst_47 : f32 to vector<48x160xf32>
    %112 = arith.select %110, %111, %95 : vector<48x160xi1>, vector<48x160xf32>
    %113 = arith.truncf %112 : vector<48x160xf32> to vector<48x160xbf16>
    %114 = tpu.iota {dimensions = array<i32: 1>} : vector<1x128xi32>
    %c16_i32_48 = arith.constant 16 : i32
    %c0_i32_49 = arith.constant 0 : i32
    %115 = arith.cmpi eq, %c16_i32_48, %c0_i32_49 : i32
    %c1_i32_50 = arith.constant 1 : i32
    %116 = arith.select %115, %c1_i32_50, %c16_i32_48 : i32
    %117 = vector.broadcast %116 : i32 to vector<1x128xi32>
    %118 = arith.remsi %114, %117 : vector<1x128xi32>
    %c0_i32_51 = arith.constant 0 : i32
    %119 = vector.broadcast %c0_i32_51 : i32 to vector<1x128xi32>
    %120 = arith.cmpi ne, %118, %119 : vector<1x128xi32>
    %c0_i32_52 = arith.constant 0 : i32
    %121 = vector.broadcast %c0_i32_52 : i32 to vector<1x128xi32>
    %122 = arith.cmpi slt, %118, %121 : vector<1x128xi32>
    %c0_i32_53 = arith.constant 0 : i32
    %123 = arith.cmpi slt, %116, %c0_i32_53 : i32
    %124 = vector.broadcast %123 : i1 to vector<1x128xi1>
    %125 = vector.broadcast %124 : vector<1x128xi1> to vector<1x128xi1>
    %126 = arith.xori %122, %125 : vector<1x128xi1>
    %127 = arith.andi %126, %120 : vector<1x128xi1>
    %128 = vector.broadcast %116 : i32 to vector<1x128xi32>
    %129 = arith.addi %118, %128 : vector<1x128xi32>
    %130 = arith.select %127, %129, %118 : vector<1x128xi1>, vector<1x128xi32>
    %c0_i32_54 = arith.constant 0 : i32
    %131 = vector.broadcast %c0_i32_54 : i32 to vector<1x128xi32>
    %132 = arith.cmpi ne, %130, %131 : vector<1x128xi32>
    %133 = vector.shape_cast %132 : vector<1x128xi1> to vector<1x128xi1>
    %134 = vector.broadcast %133 : vector<1x128xi1> to vector<48x128xi1>
    %c15_i32_55 = arith.constant 15 : i32
    %135 = vector.broadcast %c15_i32_55 : i32 to vector<1x128xi32>
    %136 = arith.cmpi ne, %130, %135 : vector<1x128xi32>
    %137 = vector.shape_cast %136 : vector<1x128xi1> to vector<1x128xi1>
    %138 = vector.broadcast %137 : vector<1x128xi1> to vector<48x128xi1>
    %cst_56 = arith.constant 0.000000e+00 : bf16
    %139 = vector.broadcast %cst_56 : bf16 to vector<48x1xbf16>
    %140 = tpu.concatenate %139, %113, %139 in 1 : vector<48x1xbf16>, vector<48x160xbf16>, vector<48x1xbf16> -> vector<48x162xbf16>
    %c0_57 = arith.constant 0 : index
    %c0_58 = arith.constant 0 : index
    %141 = vector.load %arg6[%c0_57, %c0_58] : memref<48x1xf32, #tpu.memory_space<vmem>>, vector<48x1xf32>
    %142 = vector.shape_cast %141 : vector<48x1xf32> to vector<48x1xf32>
    %143 = vector.broadcast %142 : vector<48x1xf32> to vector<48x128xf32>
    %144 = vector.extract_strided_slice %140 {offsets = [0, 0], sizes = [48, 128], strides = [1, 1]} : vector<48x162xbf16> to vector<48x128xbf16>
    %cst_59 = arith.constant 0.000000e+00 : bf16
    %145 = vector.broadcast %cst_59 : bf16 to vector<48x128xbf16>
    %146 = arith.select %134, %144, %145 : vector<48x128xi1>, vector<48x128xbf16>
    %c0_60 = arith.constant 0 : index
    %c0_61 = arith.constant 0 : index
    %c0_62 = arith.constant 0 : index
    %147 = vector.load %arg5[%c0_60, %c0_61, %c0_62] : memref<9x48x48xbf16, #tpu.memory_space<vmem>>, vector<1x48x48xbf16>
    %148 = vector.shape_cast %147 : vector<1x48x48xbf16> to vector<48x48xbf16>
    %cst_63 = arith.constant dense<0.000000e+00> : vector<48x128xf32>
    %149 = tpu.matmul %148, %146, %cst_63 {dimension_numbers = #tpu.dot_dimension_numbers<[1], [0], [0], [1], [0, 0, 1, 1], [], []>} : vector<48x48xbf16>, vector<48x128xbf16>, vector<48x128xf32> -> vector<48x128xf32>
    %150 = arith.addf %143, %149 : vector<48x128xf32>
    %151 = vector.extract_strided_slice %140 {offsets = [0, 1], sizes = [48, 128], strides = [1, 1]} : vector<48x162xbf16> to vector<48x128xbf16>
    %c1_64 = arith.constant 1 : index
    %c0_65 = arith.constant 0 : index
    %c0_66 = arith.constant 0 : index
    %152 = vector.load %arg5[%c1_64, %c0_65, %c0_66] : memref<9x48x48xbf16, #tpu.memory_space<vmem>>, vector<1x48x48xbf16>
    %153 = vector.shape_cast %152 : vector<1x48x48xbf16> to vector<48x48xbf16>
    %cst_67 = arith.constant dense<0.000000e+00> : vector<48x128xf32>
    %154 = tpu.matmul %153, %151, %cst_67 {dimension_numbers = #tpu.dot_dimension_numbers<[1], [0], [0], [1], [0, 0, 1, 1], [], []>} : vector<48x48xbf16>, vector<48x128xbf16>, vector<48x128xf32> -> vector<48x128xf32>
    %155 = arith.addf %150, %154 : vector<48x128xf32>
    %156 = vector.extract_strided_slice %140 {offsets = [0, 2], sizes = [48, 128], strides = [1, 1]} : vector<48x162xbf16> to vector<48x128xbf16>
    %cst_68 = arith.constant 0.000000e+00 : bf16
    %157 = vector.broadcast %cst_68 : bf16 to vector<48x128xbf16>
    %158 = arith.select %138, %156, %157 : vector<48x128xi1>, vector<48x128xbf16>
    %c2_69 = arith.constant 2 : index
    %c0_70 = arith.constant 0 : index
    %c0_71 = arith.constant 0 : index
    %159 = vector.load %arg5[%c2_69, %c0_70, %c0_71] : memref<9x48x48xbf16, #tpu.memory_space<vmem>>, vector<1x48x48xbf16>
    %160 = vector.shape_cast %159 : vector<1x48x48xbf16> to vector<48x48xbf16>
    %cst_72 = arith.constant dense<0.000000e+00> : vector<48x128xf32>
    %161 = tpu.matmul %160, %158, %cst_72 {dimension_numbers = #tpu.dot_dimension_numbers<[1], [0], [0], [1], [0, 0, 1, 1], [], []>} : vector<48x48xbf16>, vector<48x128xbf16>, vector<48x128xf32> -> vector<48x128xf32>
    %162 = arith.addf %155, %161 : vector<48x128xf32>
    %163 = vector.extract_strided_slice %140 {offsets = [0, 16], sizes = [48, 128], strides = [1, 1]} : vector<48x162xbf16> to vector<48x128xbf16>
    %cst_73 = arith.constant 0.000000e+00 : bf16
    %164 = vector.broadcast %cst_73 : bf16 to vector<48x128xbf16>
    %165 = arith.select %134, %163, %164 : vector<48x128xi1>, vector<48x128xbf16>
    %c3_74 = arith.constant 3 : index
    %c0_75 = arith.constant 0 : index
    %c0_76 = arith.constant 0 : index
    %166 = vector.load %arg5[%c3_74, %c0_75, %c0_76] : memref<9x48x48xbf16, #tpu.memory_space<vmem>>, vector<1x48x48xbf16>
    %167 = vector.shape_cast %166 : vector<1x48x48xbf16> to vector<48x48xbf16>
    %cst_77 = arith.constant dense<0.000000e+00> : vector<48x128xf32>
    %168 = tpu.matmul %167, %165, %cst_77 {dimension_numbers = #tpu.dot_dimension_numbers<[1], [0], [0], [1], [0, 0, 1, 1], [], []>} : vector<48x48xbf16>, vector<48x128xbf16>, vector<48x128xf32> -> vector<48x128xf32>
    %169 = arith.addf %162, %168 : vector<48x128xf32>
    %170 = vector.extract_strided_slice %140 {offsets = [0, 17], sizes = [48, 128], strides = [1, 1]} : vector<48x162xbf16> to vector<48x128xbf16>
    %c4_78 = arith.constant 4 : index
    %c0_79 = arith.constant 0 : index
    %c0_80 = arith.constant 0 : index
    %171 = vector.load %arg5[%c4_78, %c0_79, %c0_80] : memref<9x48x48xbf16, #tpu.memory_space<vmem>>, vector<1x48x48xbf16>
    %172 = vector.shape_cast %171 : vector<1x48x48xbf16> to vector<48x48xbf16>
    %cst_81 = arith.constant dense<0.000000e+00> : vector<48x128xf32>
    %173 = tpu.matmul %172, %170, %cst_81 {dimension_numbers = #tpu.dot_dimension_numbers<[1], [0], [0], [1], [0, 0, 1, 1], [], []>} : vector<48x48xbf16>, vector<48x128xbf16>, vector<48x128xf32> -> vector<48x128xf32>
    %174 = arith.addf %169, %173 : vector<48x128xf32>
    %175 = vector.extract_strided_slice %140 {offsets = [0, 18], sizes = [48, 128], strides = [1, 1]} : vector<48x162xbf16> to vector<48x128xbf16>
    %cst_82 = arith.constant 0.000000e+00 : bf16
    %176 = vector.broadcast %cst_82 : bf16 to vector<48x128xbf16>
    %177 = arith.select %138, %175, %176 : vector<48x128xi1>, vector<48x128xbf16>
    %c5_83 = arith.constant 5 : index
    %c0_84 = arith.constant 0 : index
    %c0_85 = arith.constant 0 : index
    %178 = vector.load %arg5[%c5_83, %c0_84, %c0_85] : memref<9x48x48xbf16, #tpu.memory_space<vmem>>, vector<1x48x48xbf16>
    %179 = vector.shape_cast %178 : vector<1x48x48xbf16> to vector<48x48xbf16>
    %cst_86 = arith.constant dense<0.000000e+00> : vector<48x128xf32>
    %180 = tpu.matmul %179, %177, %cst_86 {dimension_numbers = #tpu.dot_dimension_numbers<[1], [0], [0], [1], [0, 0, 1, 1], [], []>} : vector<48x48xbf16>, vector<48x128xbf16>, vector<48x128xf32> -> vector<48x128xf32>
    %181 = arith.addf %174, %180 : vector<48x128xf32>
    %182 = vector.extract_strided_slice %140 {offsets = [0, 32], sizes = [48, 128], strides = [1, 1]} : vector<48x162xbf16> to vector<48x128xbf16>
    %cst_87 = arith.constant 0.000000e+00 : bf16
    %183 = vector.broadcast %cst_87 : bf16 to vector<48x128xbf16>
    %184 = arith.select %134, %182, %183 : vector<48x128xi1>, vector<48x128xbf16>
    %c6_88 = arith.constant 6 : index
    %c0_89 = arith.constant 0 : index
    %c0_90 = arith.constant 0 : index
    %185 = vector.load %arg5[%c6_88, %c0_89, %c0_90] : memref<9x48x48xbf16, #tpu.memory_space<vmem>>, vector<1x48x48xbf16>
    %186 = vector.shape_cast %185 : vector<1x48x48xbf16> to vector<48x48xbf16>
    %cst_91 = arith.constant dense<0.000000e+00> : vector<48x128xf32>
    %187 = tpu.matmul %186, %184, %cst_91 {dimension_numbers = #tpu.dot_dimension_numbers<[1], [0], [0], [1], [0, 0, 1, 1], [], []>} : vector<48x48xbf16>, vector<48x128xbf16>, vector<48x128xf32> -> vector<48x128xf32>
    %188 = arith.addf %181, %187 : vector<48x128xf32>
    %189 = vector.extract_strided_slice %140 {offsets = [0, 33], sizes = [48, 128], strides = [1, 1]} : vector<48x162xbf16> to vector<48x128xbf16>
    %c7_92 = arith.constant 7 : index
    %c0_93 = arith.constant 0 : index
    %c0_94 = arith.constant 0 : index
    %190 = vector.load %arg5[%c7_92, %c0_93, %c0_94] : memref<9x48x48xbf16, #tpu.memory_space<vmem>>, vector<1x48x48xbf16>
    %191 = vector.shape_cast %190 : vector<1x48x48xbf16> to vector<48x48xbf16>
    %cst_95 = arith.constant dense<0.000000e+00> : vector<48x128xf32>
    %192 = tpu.matmul %191, %189, %cst_95 {dimension_numbers = #tpu.dot_dimension_numbers<[1], [0], [0], [1], [0, 0, 1, 1], [], []>} : vector<48x48xbf16>, vector<48x128xbf16>, vector<48x128xf32> -> vector<48x128xf32>
    %193 = arith.addf %188, %192 : vector<48x128xf32>
    %194 = vector.extract_strided_slice %140 {offsets = [0, 34], sizes = [48, 128], strides = [1, 1]} : vector<48x162xbf16> to vector<48x128xbf16>
    %cst_96 = arith.constant 0.000000e+00 : bf16
    %195 = vector.broadcast %cst_96 : bf16 to vector<48x128xbf16>
    %196 = arith.select %138, %194, %195 : vector<48x128xi1>, vector<48x128xbf16>
    %c8_97 = arith.constant 8 : index
    %c0_98 = arith.constant 0 : index
    %c0_99 = arith.constant 0 : index
    %197 = vector.load %arg5[%c8_97, %c0_98, %c0_99] : memref<9x48x48xbf16, #tpu.memory_space<vmem>>, vector<1x48x48xbf16>
    %198 = vector.shape_cast %197 : vector<1x48x48xbf16> to vector<48x48xbf16>
    %cst_100 = arith.constant dense<0.000000e+00> : vector<48x128xf32>
    %199 = tpu.matmul %198, %196, %cst_100 {dimension_numbers = #tpu.dot_dimension_numbers<[1], [0], [0], [1], [0, 0, 1, 1], [], []>} : vector<48x48xbf16>, vector<48x128xbf16>, vector<48x128xf32> -> vector<48x128xf32>
    %200 = arith.addf %193, %199 : vector<48x128xf32>
    %cst_101 = arith.constant 2.000000e-01 : f32
    %201 = vector.broadcast %cst_101 : f32 to vector<48x128xf32>
    %202 = arith.mulf %201, %200 : vector<48x128xf32>
    %203 = arith.maximumf %200, %202 : vector<48x128xf32>
    %204 = arith.truncf %203 : vector<48x128xf32> to vector<48x128xbf16>
    %c0_102 = arith.constant 0 : index
    %c0_103 = arith.constant 0 : index
    %205 = vector.load %arg7[%c0_102, %c0_103] : memref<4x48xbf16, #tpu.memory_space<vmem>>, vector<4x48xbf16>
    %cst_104 = arith.constant dense<0.000000e+00> : vector<4x128xf32>
    %206 = tpu.matmul %205, %204, %cst_104 {dimension_numbers = #tpu.dot_dimension_numbers<[1], [0], [0], [1], [0, 0, 1, 1], [], []>} : vector<4x48xbf16>, vector<48x128xbf16>, vector<4x128xf32> -> vector<4x128xf32>
    %c0_105 = arith.constant 0 : index
    %c0_106 = arith.constant 0 : index
    %207 = vector.load %arg8[%c0_105, %c0_106] : memref<4x1xf32, #tpu.memory_space<vmem>>, vector<4x1xf32>
    %208 = vector.broadcast %207 : vector<4x1xf32> to vector<4x128xf32>
    %209 = arith.addf %206, %208 : vector<4x128xf32>
    %c0_107 = arith.constant 0 : index
    %c0_108 = arith.constant 0 : index
    %c0_109 = arith.constant 0 : index
    %210 = vector.load %arg9[%c0_107, %c0_108, %c0_109] : memref<1x4x128xf32, #tpu.memory_space<vmem>>, vector<1x4x128xf32>
    %211 = vector.shape_cast %210 : vector<1x4x128xf32> to vector<4x128xf32>
    %212 = vector.shape_cast %209 : vector<4x128xf32> to vector<1x4x128xf32>
    tpu.vector_store %arg9[%c0_107, %c0_108, %c0_109], %212 {strides = array<i32>} : memref<1x4x128xf32, #tpu.memory_space<vmem>>, vector<1x4x128xf32>,
    return
  }
  func.func @transform_0(%arg0: i32, %arg1: i32) -> (i32, i32, i32) {
    %c0_i32 = arith.constant 0 : i32
    %c0_i32_0 = arith.constant 0 : i32
    %c0_i32_1 = arith.constant 0 : i32
    return %arg0, %c0_i32, %c0_i32_0 : i32, i32, i32
  }
  func.func @transform_1(%arg0: i32, %arg1: i32) -> (i32, i32, i32) {
    %c0_i32 = arith.constant 0 : i32
    %c0_i32_0 = arith.constant 0 : i32
    %c0_i32_1 = arith.constant 0 : i32
    %c0_i32_2 = arith.constant 0 : i32
    return %c0_i32, %c0_i32_0, %c0_i32_1 : i32, i32, i32
  }
  func.func @transform_2(%arg0: i32, %arg1: i32) -> (i32, i32) {
    %c0_i32 = arith.constant 0 : i32
    %c0_i32_0 = arith.constant 0 : i32
    %c0_i32_1 = arith.constant 0 : i32
    return %c0_i32, %c0_i32_0 : i32, i32
  }
  func.func @transform_3(%arg0: i32, %arg1: i32) -> (i32, i32, i32) {
    %c0_i32 = arith.constant 0 : i32
    %c0_i32_0 = arith.constant 0 : i32
    %c0_i32_1 = arith.constant 0 : i32
    %c0_i32_2 = arith.constant 0 : i32
    return %c0_i32, %c0_i32_0, %c0_i32_1 : i32, i32, i32
  }
  func.func @transform_4(%arg0: i32, %arg1: i32) -> (i32, i32) {
    %c0_i32 = arith.constant 0 : i32
    %c0_i32_0 = arith.constant 0 : i32
    %c0_i32_1 = arith.constant 0 : i32
    return %c0_i32, %c0_i32_0 : i32, i32
  }
  func.func @transform_5(%arg0: i32, %arg1: i32) -> (i32, i32) {
    %c0_i32 = arith.constant 0 : i32
    %c0_i32_0 = arith.constant 0 : i32
    %c0_i32_1 = arith.constant 0 : i32
    return %c0_i32, %c0_i32_0 : i32, i32
  }
  func.func @transform_6(%arg0: i32, %arg1: i32) -> (i32, i32) {
    %c0_i32 = arith.constant 0 : i32
    %c0_i32_0 = arith.constant 0 : i32
    %c0_i32_1 = arith.constant 0 : i32
    return %c0_i32, %c0_i32_0 : i32, i32
  }
  func.func @transform_7(%arg0: i32, %arg1: i32) -> (i32, i32, i32) {
    %c0_i32 = arith.constant 0 : i32
    %c0_i32_0 = arith.constant 0 : i32
    return %arg0, %c0_i32, %arg1 : i32, i32, i32
  }
}

</mosaic_0001>

<llo_original>
// kernel: network_forward.1
$region0: #{network_forward.1}
  #allocation0 [shape = 'u32[]', space=smem, size = 0x4, offset = 0x4, fixed_abs, tag = 'smem constant byte address 0x4 - core index']
  #allocation1 [shape = 'u32[144,128]{1,0:T(1,128)}', space=vmem, size = 0x12000, scoped, tag = 'internal scratch']
  %s0 = inlined_call_operand.vmem [shape: bf16[2,8,320], index: 0, kind: input, shape index: {}]
  %s1 = inlined_call_operand.vmem [shape: bf16[9,48,8], index: 1, kind: input, shape index: {}]
  %s2 = inlined_call_operand.vmem [shape: f32[48,1], index: 2, kind: input, shape index: {}]
  %s3 = inlined_call_operand.vmem [shape: bf16[9,48,48], index: 3, kind: input, shape index: {}]
  %s4 = inlined_call_operand.vmem [shape: f32[48,1], index: 4, kind: input, shape index: {}]
  %s5 = inlined_call_operand.vmem [shape: bf16[4,48], index: 5, kind: input, shape index: {}]
  %s6 = inlined_call_operand.vmem [shape: f32[4,1], index: 6, kind: input, shape index: {}]
  %s7 = inlined_call_operand.vmem [shape: f32[2,4,256], index: 7, kind: output, shape index: {}]
  %s8 = sld [smem:[#allocation0]]
  $region61: #{network_forward.1} parent=0
    _
  %s10 = ssub.s32 1, %s8
  %s11 = scalar_select 0, %s10, %s8
  loop: start=0, step=1, limit=6
  $region2: #{network_forward.1} parent=0 // loop_pre_header
    _
  $region3: #{network_forward.1} parent=0 // loop_header
    %s13 = sphi 0, %s17
    %p14 = scmp.ge.s32.totalorder %s13, 6
    %s20 = sphi 0, %s32
    %s21 = sphi 0, %s28
    %s22 = sphi 0, %s20
    %s23 = sphi 0, %s21
    %s24 = sphi 0, %s22
    %s25 = sphi 0, %s23
    %s35 = sphi 0, %s37
    %s38 = sphi 0, %s35
    %s39 = sphi 0, %s38
    %s55 = sphi 0, %s39
    %s59 = sphi 0, %s59
    %s61 = sphi 0, %s59
    %s62 = sphi 0, %s61
    %s76 = sphi 0, %s62
    %s80 = sphi 0, %s80
    %s82 = sphi 0, %s80
    %s83 = sphi 0, %s82
    %s97 = sphi 0, %s83
    %s101 = sphi 0, %s101
    %s103 = sphi 0, %s101
    %s104 = sphi 0, %s103
    %s118 = sphi 0, %s104
    %s122 = sphi 0, %s122
    %s124 = sphi 0, %s122
    %s125 = sphi 0, %s124
    %s139 = sphi 0, %s125
    %s143 = sphi 0, %s143
    %s145 = sphi 0, %s143
    %s146 = sphi 0, %s145
    %s160 = sphi 0, %s146
    %s164 = sphi 0, %s164
    %s166 = sphi 0, %s164
    %s167 = sphi 0, %s166
    %s181 = sphi 0, %s167
    %s189 = sphi 0, %s191
    %s192 = sphi 0, %s189
    %s193 = sphi 0, %s192
    %s209 = sphi 0, %s193
  $region4: #{network_forward.1} parent=0 // loop_header_branch
    %16 = sbr.rel (%p14) target = $region8
  $region5: #{network_forward.1} parent=0 // loop_body
    %s18 = ssub.s32 %s13, 1
    %s19 = ssub.s32 %s13, 2
    %s26 = sadd.s32 1, %s21
    %p27 = scmp.ge.s32.totalorder %s26, 2
    %s28 = scalar_select %p27, 0, %s26
    %s29 = sadd.s32 1, %s20
    %s30 = scalar_select %p27, %s29, %s20
    %p31 = scmp.ge.s32.totalorder %s30, 2
    %s32 = scalar_select %p31, 0, %s30
    %s33 = ssub.s32 %s20, %s32
    %p34 = scmp.eq.s32.totalorder %s33, 0
    %s36 = sadd.s32 %s35, 1
    %s37 = scalar_select %p34, %s35, %s36
    %p40 = pneg %p34
    %p41 = scmp.eq.s32.totalorder %s13, 3
    %p42 = por %p40, %p41
    %p43 = scmp.ne.s32.totalorder %s35, %s38
    %p44 = scmp.eq.s32.totalorder %s13, 0
    %p45 = por %p43, %p44
    %p46 = scmp.ne.s32.totalorder %s35, %s38
    %p47 = scmp.eq.s32.totalorder %s18, 3
    %p48 = por %p46, %p47
    %p49 = scmp.ne.s32.totalorder %s38, %s39
    %p50 = scmp.eq.s32.totalorder %s18, 0
    %p51 = por %p49, %p50
    %p52 = scmp.ne.s32.totalorder %s38, %s39
    %p53 = scmp.eq.s32.totalorder %s19, 3
    %p54 = por %p52, %p53
    %p56 = scmp.ne.s32.totalorder %s39, %s55
    %p57 = scmp.eq.s32.totalorder %s19, 0
    %p58 = por %p56, %p57
    %s60 = sadd.s32 %s59, 1
    %p63 = scmp.eq.s32.totalorder %s13, 3
    %p64 = scmp.ne.s32.totalorder %s59, %s61
    %p65 = scmp.eq.s32.totalorder %s13, 0
    %p66 = por %p64, %p65
    %p67 = scmp.ne.s32.totalorder %s59, %s61
    %p68 = scmp.eq.s32.totalorder %s18, 3
    %p69 = por %p67, %p68
    %p70 = scmp.ne.s32.totalorder %s61, %s62
    %p71 = scmp.eq.s32.totalorder %s18, 0
    %p72 = por %p70, %p71
    %p73 = scmp.ne.s32.totalorder %s61, %s62
    %p74 = scmp.eq.s32.totalorder %s19, 3
    %p75 = por %p73, %p74
    %p77 = scmp.ne.s32.totalorder %s62, %s76
    %p78 = scmp.eq.s32.totalorder %s19, 0
    %p79 = por %p77, %p78
    %s81 = sadd.s32 %s80, 1
    %p84 = scmp.eq.s32.totalorder %s13, 3
    %p85 = scmp.ne.s32.totalorder %s80, %s82
    %p86 = scmp.eq.s32.totalorder %s13, 0
    %p87 = por %p85, %p86
    %p88 = scmp.ne.s32.totalorder %s80, %s82
    %p89 = scmp.eq.s32.totalorder %s18, 3
    %p90 = por %p88, %p89
    %p91 = scmp.ne.s32.totalorder %s82, %s83
    %p92 = scmp.eq.s32.totalorder %s18, 0
    %p93 = por %p91, %p92
    %p94 = scmp.ne.s32.totalorder %s82, %s83
    %p95 = scmp.eq.s32.totalorder %s19, 3
    %p96 = por %p94, %p95
    %p98 = scmp.ne.s32.totalorder %s83, %s97
    %p99 = scmp.eq.s32.totalorder %s19, 0
    %p100 = por %p98, %p99
    %s102 = sadd.s32 %s101, 1
    %p105 = scmp.eq.s32.totalorder %s13, 3
    %p106 = scmp.ne.s32.totalorder %s101, %s103
    %p107 = scmp.eq.s32.totalorder %s13, 0
    %p108 = por %p106, %p107
    %p109 = scmp.ne.s32.totalorder %s101, %s103
    %p110 = scmp.eq.s32.totalorder %s18, 3
    %p111 = por %p109, %p110
    %p112 = scmp.ne.s32.totalorder %s103, %s104
    %p113 = scmp.eq.s32.totalorder %s18, 0
    %p114 = por %p112, %p113
    %p115 = scmp.ne.s32.totalorder %s103, %s104
    %p116 = scmp.eq.s32.totalorder %s19, 3
    %p117 = por %p115, %p116
    %p119 = scmp.ne.s32.totalorder %s104, %s118
    %p120 = scmp.eq.s32.totalorder %s19, 0
    %p121 = por %p119, %p120
    %s123 = sadd.s32 %s122, 1
    %p126 = scmp.eq.s32.totalorder %s13, 3
    %p127 = scmp.ne.s32.totalorder %s122, %s124
    %p128 = scmp.eq.s32.totalorder %s13, 0
    %p129 = por %p127, %p128
    %p130 = scmp.ne.s32.totalorder %s122, %s124
    %p131 = scmp.eq.s32.totalorder %s18, 3
    %p132 = por %p130, %p131
    %p133 = scmp.ne.s32.totalorder %s124, %s125
    %p134 = scmp.eq.s32.totalorder %s18, 0
    %p135 = por %p133, %p134
    %p136 = scmp.ne.s32.totalorder %s124, %s125
    %p137 = scmp.eq.s32.totalorder %s19, 3
    %p138 = por %p136, %p137
    %p140 = scmp.ne.s32.totalorder %s125, %s139
    %p141 = scmp.eq.s32.totalorder %s19, 0
    %p142 = por %p140, %p141
    %s144 = sadd.s32 %s143, 1
    %p147 = scmp.eq.s32.totalorder %s13, 3
    %p148 = scmp.ne.s32.totalorder %s143, %s145
    %p149 = scmp.eq.s32.totalorder %s13, 0
    %p150 = por %p148, %p149
    %p151 = scmp.ne.s32.totalorder %s143, %s145
    %p152 = scmp.eq.s32.totalorder %s18, 3
    %p153 = por %p151, %p152
    %p154 = scmp.ne.s32.totalorder %s145, %s146
    %p155 = scmp.eq.s32.totalorder %s18, 0
    %p156 = por %p154, %p155
    %p157 = scmp.ne.s32.totalorder %s145, %s146
    %p158 = scmp.eq.s32.totalorder %s19, 3
    %p159 = por %p157, %p158
    %p161 = scmp.ne.s32.totalorder %s146, %s160
    %p162 = scmp.eq.s32.totalorder %s19, 0
    %p163 = por %p161, %p162
    %s165 = sadd.s32 %s164, 1
    %p168 = scmp.eq.s32.totalorder %s13, 3
    %p169 = scmp.ne.s32.totalorder %s164, %s166
    %p170 = scmp.eq.s32.totalorder %s13, 0
    %p171 = por %p169, %p170
    %p172 = scmp.ne.s32.totalorder %s164, %s166
    %p173 = scmp.eq.s32.totalorder %s18, 3
    %p174 = por %p172, %p173
    %p175 = scmp.ne.s32.totalorder %s166, %s167
    %p176 = scmp.eq.s32.totalorder %s18, 0
    %p177 = por %p175, %p176
    %p178 = scmp.ne.s32.totalorder %s166, %s167
    %p179 = scmp.eq.s32.totalorder %s19, 3
    %p180 = por %p178, %p179
    %p182 = scmp.ne.s32.totalorder %s167, %s181
    %p183 = scmp.eq.s32.totalorder %s19, 0
    %p184 = por %p182, %p183
    %s185 = ssub.s32 %s20, %s32
    %s186 = ssub.s32 %s21, %s28
    %s187 = sor.u32 %s185, %s186
    %p188 = scmp.eq.s32.totalorder %s187, 0
    %s190 = sadd.s32 %s189, 1
    %s191 = scalar_select %p188, %s189, %s190
    %p194 = pneg %p188
    %p195 = scmp.eq.s32.totalorder %s13, 3
    %p196 = por %p194, %p195
    %p197 = scmp.ne.s32.totalorder %s189, %s192
    %p198 = scmp.eq.s32.totalorder %s13, 0
    %p199 = por %p197, %p198
    %p200 = scmp.ne.s32.totalorder %s189, %s192
    %p201 = scmp.eq.s32.totalorder %s18, 3
    %p202 = por %p200, %p201
    %p203 = scmp.ne.s32.totalorder %s192, %s193
    %p204 = scmp.eq.s32.totalorder %s18, 0
    %p205 = por %p203, %p204
    %p206 = scmp.ne.s32.totalorder %s192, %s193
    %p207 = scmp.eq.s32.totalorder %s19, 3
    %p208 = por %p206, %p207
    %p210 = scmp.ne.s32.totalorder %s193, %s209
    %p211 = scmp.eq.s32.totalorder %s19, 0
    %p212 = por %p210, %p211
    %p213 = scmp.le.s32.totalorder 1, %s13
    %p214 = scmp.lt.s32.totalorder %s13, 5
    %p215 = pnand %p213, %p214
    %p216 = pneg %p215
    // Predicated region
    $region9: #{network_forward.1} parent=5 // pred_check
      _
    $region10: #{network_forward.1} parent=5 // pred_check_branch
      %218 = sbr.rel (%p215) target = $region12
    $region11: #{network_forward.1} parent=5 // pred_region
      %s219 = ssub.s32 %s13, 1
      // Predicated region
      $region13: #{network_forward.1} parent=11 // pred_check
        %p220 = pneg %p72
      $region14: #{network_forward.1} parent=11 // pred_check_branch
        %222 = sbr.rel (%p220) target = $region16
      $region15: #{network_forward.1} parent=11 // pred_region
        _
      $region16: #{network_forward.1} parent=11 // pred_fallthru
        _
      // Predicated region
      $region17: #{network_forward.1} parent=11 // pred_check
        %p223 = pneg %p93
      $region18: #{network_forward.1} parent=11 // pred_check_branch
        %225 = sbr.rel (%p223) target = $region20
      $region19: #{network_forward.1} parent=11 // pred_region
        _
      $region20: #{network_forward.1} parent=11 // pred_fallthru
        _
      // Predicated region
      $region21: #{network_forward.1} parent=11 // pred_check
        %p226 = pneg %p114
      $region22: #{network_forward.1} parent=11 // pred_check_branch
        %228 = sbr.rel (%p226) target = $region24
      $region23: #{network_forward.1} parent=11 // pred_region
        _
      $region24: #{network_forward.1} parent=11 // pred_fallthru
        _
      // Predicated region
      $region25: #{network_forward.1} parent=11 // pred_check
        %p229 = pneg %p135
      $region26: #{network_forward.1} parent=11 // pred_check_branch
        %231 = sbr.rel (%p229) target = $region28
      $region27: #{network_forward.1} parent=11 // pred_region
        _
      $region28: #{network_forward.1} parent=11 // pred_fallthru
        _
      // Predicated region
      $region29: #{network_forward.1} parent=11 // pred_check
        %p232 = pneg %p156
      $region30: #{network_forward.1} parent=11 // pred_check_branch
        %234 = sbr.rel (%p232) target = $region32
      $region31: #{network_forward.1} parent=11 // pred_region
        _
      $region32: #{network_forward.1} parent=11 // pred_fallthru
        _
      // Predicated region
      $region33: #{network_forward.1} parent=11 // pred_check
        %p235 = pneg %p177
      $region34: #{network_forward.1} parent=11 // pred_check_branch
        %237 = sbr.rel (%p235) target = $region36
      $region35: #{network_forward.1} parent=11 // pred_region
        _
      $region36: #{network_forward.1} parent=11 // pred_fallthru
        _
    $region12: #{network_forward.1} parent=5 // pred_fallthru
      _
    %p238 = scmp.lt.s32.totalorder %s13, 4
    // Predicated region
    $region37: #{network_forward.1} parent=5 // pred_check
      %p239 = pneg %p238
    $region38: #{network_forward.1} parent=5 // pred_check_branch
      %241 = sbr.rel (%p239) target = $region40
    $region39: #{network_forward.1} parent=5 // pred_region
      // Predicated region
      $region41: #{network_forward.1} parent=39 // pred_check
        %p242 = pneg %p45
      $region42: #{network_forward.1} parent=39 // pred_check_branch
        %244 = sbr.rel (%p242) target = $region44
      $region43: #{network_forward.1} parent=39 // pred_region
        %p245 = scmp.lt.s32.totalorder %s20, 1
        %s246 = scalar_select %p245, %s20, 1
        %s247 = smul.addr %s246, 3
        %s248 = smul.addr %s247, 4
        %s249 = scalar_lea.vmem %s0, %s248
      $region44: #{network_forward.1} parent=39 // pred_fallthru
        _
    $region40: #{network_forward.1} parent=5 // pred_fallthru
      _
    %p250 = scmp.le.s32.totalorder 1, %s13
    %p251 = scmp.lt.s32.totalorder %s13, 5
    %p252 = pnand %p250, %p251
    %p253 = pneg %p252
    // Predicated region
    $region45: #{network_forward.1} parent=5 // pred_check
      _
    $region46: #{network_forward.1} parent=5 // pred_check_branch
      %255 = sbr.rel (%p252) target = $region48
    $region47: #{network_forward.1} parent=5 // pred_region
      %s256 = ssub.s32 %s13, 1
      %p257 = scmp.lt.s32.totalorder %s22, 1
      %s258 = scalar_select %p257, %s22, 1
      %s259 = smul.addr %s258, 3
      %s260 = smul.addr %s259, 4
      %s261 = scalar_lea.vmem %s0, %s260
      %p262 = pneg %p51
      %p263 = pneg %p48
      %p264 = pneg %p72
      %p265 = pneg %p69
      %p266 = pneg %p93
      %p267 = pneg %p90
      %p268 = pneg %p114
      %p269 = pneg %p111
      %p270 = pneg %p135
      %p271 = pneg %p132
      %p272 = pneg %p156
      %p273 = pneg %p153
      %p274 = pneg %p177
      %p275 = pneg %p174
      %p276 = pneg %p205
      %p277 = pneg %p202
      %p278 = scmp.lt.s32.totalorder %s22, 1
      %s279 = scalar_select %p278, %s22, 1
      %p280 = scmp.lt.s32.totalorder %s23, 1
      %s281 = scalar_select %p280, %s23, 1
      %s282 = smul.addr %s279, 2
      %s283 = sadd.s32 %s281, %s282
      %s284 = smul.addr %s283, 4
      %s285 = scalar_lea.vmem %s7, %s284
      %p286 = scmp.lt.s32.totalorder %s22, 1
      %s287 = scalar_select %p286, %s22, 1
      %s288 = smul.addr %s287, 3
      %s289 = smul.addr %s288, 4
      %s290 = scalar_lea.vmem %s0, %s289
      %p291 = scmp.lt.s32.totalorder %s22, 1
      %s292 = scalar_select %p291, %s22, 1
      %p293 = scmp.lt.s32.totalorder %s23, 1
      %s294 = scalar_select %p293, %s23, 1
      %s295 = smul.addr %s292, 2
      %s296 = sadd.s32 %s294, %s295
      %s297 = smul.addr %s296, 4
      %s298 = scalar_lea.vmem %s7, %s297
      %s302 = smul.u32 %s23, 8
      %s303 = smul.u32 %s23, 128
      %s304 = sshra.s32 %s303, 7
      %s305 = sand.u32 %s303, 127
      %s306 = smul.addr %s304, 4
      %s307 = scalar_lea.vmem %s290, %s306
      %v308 = vld [vmem:[%s307] sm:$0xff]
      %v309 = vlaneseq
      %v310 = vand.u32 %v309, 127
      %v311 = vadd.s32 %v310, 128
      %vm312 = vcmp.lt.s32.totalorder %v310, 0
      %v313 = vsub.s32 0, %v310
      %v314 = vsel %vm312, %v313, %v310
      %v315 = vshrl.u32 %v314, 4
      %v316 = vand.u32 %v314, 15
      %v317 = vsub.s32 0, %v316
      %v318 = vsel %vm312, %v317, %v316
      %vm319 = vcmp.lt.s32.totalorder %v311, 0
      %v320 = vsub.s32 0, %v311
      %v321 = vsel %vm319, %v320, %v311
      %v322 = vshrl.u32 %v321, 4
      %v323 = vand.u32 %v321, 15
      %v324 = vsub.s32 0, %v323
      %v325 = vsel %vm319, %v324, %v323
      %vm326 = vcmp.ne.s32.totalorder %v318, 0
      %vm327 = vcmp.ne.s32.totalorder %v325, 0
      %vm328 = vcmp.lt.s32.totalorder %v318, 0
      %vm329 = vcmp.lt.s32.totalorder %v325, 0
      %vm330 = vmand %vm328, %vm326
      %vm331 = vmand %vm329, %vm327
      %v332 = vadd.s32 %v318, 16
      %v333 = vadd.s32 %v325, 16
      %v334 = vsel %vm330, %v332, %v318
      %v335 = vsel %vm331, %v333, %v325
      %vm336 = vcmp.ne.s32.totalorder %v334, 0
      %vm337 = vcmp.ne.s32.totalorder %v335, 0
      %v338 = vsel %vm336, 1, 0
      %v339 = vsel %vm337, 1, 0
      %vm340 = vcmp.eq.s32.totalorder %v338, 1
      %vm341 = vcmp.eq.s32.totalorder %v339, 1
      %vm342 = vcmp.ne.s32.totalorder %v334, 15
      %vm343 = vcmp.ne.s32.totalorder %v335, 15
      %v344 = vsel %vm342, 1, 0
      %v345 = vsel %vm343, 1, 0
      %vm346 = vcmp.eq.s32.totalorder %v344, 1
      %vm347 = vcmp.eq.s32.totalorder %v345, 1
      %v349 = vunpack.c.l.b16 %v308
      %v350 = vunpack.c.h.b16 %v308
      %v351 = vpack.c.b16 %v349, %v349
      %v352 = vpack.c.b16 %v350, %v350
      %353 = vrot.lane.b32.xlu0 %v351, 1
      %v354 = vpop.permute.xlu0 %353
      %355 = vrot.lane.b32.xlu0 %v352, 1
      %v356 = vpop.permute.xlu0 %355
      %vm357 = vcmask 7168
      %v358 = vsel %vm357, %v354, %v356
      %vm359 = vcmask 7168
      %v362 = vsel %vm359, 0, %v354
      %vm364 = vcmask 531456
      %v366 = vsel %vm364, %v358, 0
      %v368 = vld [vmem:[%s2] sm:$0xff]
      %v369 = vld [vmem:[%s2 + $0x8] sm:$0xff]
      %v370 = vld [vmem:[%s2 + $0x10] sm:$0xff]
      %v371 = vld [vmem:[%s2 + $0x18] sm:$0xff]
      %v372 = vld [vmem:[%s2 + $0x20] sm:$0xff]
      %v373 = vld [vmem:[%s2 + $0x28] sm:$0xff]
      %375 = vset.pattern.permute.xlu0 0
      %376 = vperm.xlu0 %375, %v368
      %v377 = vpop.permute.xlu0 %376
      %380 = vset.pattern.permute.xlu0 0
      %381 = vperm.xlu0 %380, %v369
      %v382 = vpop.permute.xlu0 %381
      %385 = vset.pattern.permute.xlu0 0
      %386 = vperm.xlu0 %385, %v370
      %v387 = vpop.permute.xlu0 %386
      %390 = vset.pattern.permute.xlu0 0
      %391 = vperm.xlu0 %390, %v371
      %v392 = vpop.permute.xlu0 %391
      %395 = vset.pattern.permute.xlu0 0
      %396 = vperm.xlu0 %395, %v372
      %v397 = vpop.permute.xlu0 %396
      %400 = vset.pattern.permute.xlu0 0
      %401 = vperm.xlu0 %400, %v373
      %v402 = vpop.permute.xlu0 %401
      %vm404 = vmpackc.low %vm341, %vm340
      %v405 = vsel %vm404, 65537, 0
      %v406 = vlaneseq
      %v407 = vshrl.u32 %v406, 7
      %v408 = vsub.s32 0, %v407
      %v409 = vrot.slane %v405, %v408
      %v410 = vlaneseq
      %v411 = vshrl.u32 %v410, 7
      %v412 = vsub.s32 4, %v411
      %v413 = vrot.slane %v405, %v412
      %vm414 = vcmp.ne.s16.totalorder %v409, 0
      %vm415 = vcmp.ne.s16.totalorder %v413, 0
      %v416 = vsel %vm414, %v362, 0
      %v417 = vsel %vm415, %v366, 0
      %v418 = vld [vmem:[%s1] sm:$0xf]
      %v419 = vld [vmem:[%s1 + $0x4] sm:$0xf]
      %v420 = vld [vmem:[%s1 + $0x8] sm:$0xf]
      %v421 = vld [vmem:[%s1 + $0xc] sm:$0xf]
      %v422 = vld [vmem:[%s1 + $0x10] sm:$0xf]
      %v423 = vld [vmem:[%s1 + $0x14] sm:$0xf]
      %v430 = vunpack.c.l.b16 %v418
      %v431 = vunpack.c.l.b16 %v419
      %v432 = vunpack.c.l.b16 %v420
      %v433 = vunpack.c.l.b16 %v421
      %v434 = vunpack.c.l.b16 %v422
      %v435 = vunpack.c.l.b16 %v423
      %v436 = vpack.c.b16 %v431, %v430
      %v437 = vpack.c.b16 %v433, %v432
      %v438 = vpack.c.b16 %v435, %v434
      %vm439 = vcmask 64512
      %v441 = vsel %vm439, %v436, 0
      %v444 = vsel %vm439, %v437, 0
      %v447 = vsel %vm439, %v438, 0
      %vm449 = vcmask 1043456
      %v451 = vsel %vm449, %v416, 0
      %v454 = vsel %vm449, %v417, 0
      %456 = vmatprep.subr.bf16.mxu0 %v454
      %457 = vmatpush1.bf16.msra.mxu0 %v451
      %458 = vmatprep.subr.bf16.mxu0 0
      %459 = vmatpush1.bf16.msra.mxu0 0
      %460 = vmatprep.subr.bf16.mxu0 0
      %461 = vmatpush1.bf16.msra.mxu0 0
      %462 = vmatprep.subr.bf16.mxu0 0
      %463 = vmatpush1.bf16.msra.mxu0 0
      %464 = vmatprep.subr.bf16.mxu0 0
      %465 = vmatpush1.bf16.msra.mxu0 0
      %466 = vmatprep.subr.bf16.mxu0 0
      %467 = vmatpush1.bf16.msra.mxu0 0
      %468 = vmatprep.subr.bf16.mxu0 0
      %469 = vmatpush1.bf16.msra.mxu0 0
      %470 = vmatprep.subr.bf16.mxu0 0
      %471 = vmatpush1.bf16.msra.mxu0 0
      %472 = vmatprep.subr.bf16.mxu0 0
      %473 = vmatpush1.bf16.msra.mxu0 0
      %474 = vmatprep.subr.bf16.mxu0 0
      %475 = vmatpush1.bf16.msra.mxu0 0
      %476 = vmatprep.subr.bf16.mxu0 0
      %477 = vmatpush1.bf16.msra.mxu0 0
      %478 = vmatprep.subr.bf16.mxu0 0
      %479 = vmatpush1.bf16.msra.mxu0 0
      %480 = vmatprep.subr.bf16.mxu0 0
      %481 = vmatpush1.bf16.msra.mxu0 0
      %482 = vmatprep.subr.bf16.mxu0 0
      %483 = vmatpush1.bf16.msra.mxu0 0
      %484 = vmatprep.subr.bf16.mxu0 0
      %485 = vmatpush1.bf16.msra.mxu0 0
      %486 = vmatprep.subr.bf16.mxu0 0
      %487 = vmatpush1.bf16.msra.mxu0 0
      %488 = vmatprep.mubr.bf16.mxu0 0
      %489 = vmatmul.mubr.bf16.gmra.mrb[0].mxu0 %v441
      %v490 = vpop.f32.mrb[0].mxu0
      %v491 = vadd.f32 0.0, %v490
      %v492 = vpop.f32.mrb[0].mxu0
      %v493 = vadd.f32 0.0, %v492
      %v494 = vpop.f32.mrb[0].mxu0
      %v495 = vadd.f32 0.0, %v494
      %v496 = vpop.f32.mrb[0].mxu0
      %v497 = vadd.f32 0.0, %v496
      %498 = vmatprep.mubr.bf16.mxu0 0
      %499 = vmatmul.mubr.bf16.gmra.mrb[0].mxu0 %v444
      %v500 = vpop.f32.mrb[0].mxu0
      %v501 = vadd.f32 0.0, %v500
      %v502 = vpop.f32.mrb[0].mxu0
      %v503 = vadd.f32 0.0, %v502
      %v504 = vpop.f32.mrb[0].mxu0
      %v505 = vadd.f32 0.0, %v504
      %v506 = vpop.f32.mrb[0].mxu0
      %v507 = vadd.f32 0.0, %v506
      %508 = vmatprep.mubr.bf16.mxu0 0
      %509 = vmatmul.mubr.bf16.gmra.mrb[0].mxu0 %v447
      %v510 = vpop.f32.mrb[0].mxu0
      %v511 = vadd.f32 0.0, %v510
      %v512 = vpop.f32.mrb[0].mxu0
      %v513 = vadd.f32 0.0, %v512
      %v514 = vpop.f32.mrb[0].mxu0
      %v515 = vadd.f32 0.0, %v514
      %v516 = vpop.f32.mrb[0].mxu0
      %v517 = vadd.f32 0.0, %v516
      %518 = vdwg.mxu0
      %v519 = vadd.f32 %v377, %v491
      %v520 = vadd.f32 %v377, %v493
      %v521 = vadd.f32 %v382, %v495
      %v522 = vadd.f32 %v382, %v497
      %v523 = vadd.f32 %v387, %v501
      %v524 = vadd.f32 %v387, %v503
      %v525 = vadd.f32 %v392, %v505
      %v526 = vadd.f32 %v392, %v507
      %v527 = vadd.f32 %v397, %v511
      %v528 = vadd.f32 %v397, %v513
      %v529 = vadd.f32 %v402, %v515
      %v530 = vadd.f32 %v402, %v517
      %s531 = scalar_lea.vmem %s1, 24
      %v532 = vld [vmem:[%s531] sm:$0xf]
      %v533 = vld [vmem:[%s531 + $0x4] sm:$0xf]
      %v534 = vld [vmem:[%s531 + $0x8] sm:$0xf]
      %v535 = vld [vmem:[%s531 + $0xc] sm:$0xf]
      %v536 = vld [vmem:[%s531 + $0x10] sm:$0xf]
      %v537 = vld [vmem:[%s531 + $0x14] sm:$0xf]
      %v544 = vunpack.c.l.b16 %v532
      %v545 = vunpack.c.l.b16 %v533
      %v546 = vunpack.c.l.b16 %v534
      %v547 = vunpack.c.l.b16 %v535
      %v548 = vunpack.c.l.b16 %v536
      %v549 = vunpack.c.l.b16 %v537
      %v550 = vpack.c.b16 %v545, %v544
      %v551 = vpack.c.b16 %v547, %v546
      %v552 = vpack.c.b16 %v549, %v548
      %555 = vrot.lane.b32.xlu0 %v362, 127
      %v556 = vpop.permute.xlu0 %555
      %557 = vrot.lane.b32.xlu0 %v366, 127
      %v558 = vpop.permute.xlu0 %557
      %vm559 = vcmask 1039360
      %v560 = vsel %vm559, %v556, %v558
      %v562 = vsel %vm439, %v550, 0
      %v565 = vsel %vm439, %v551, 0
      %v568 = vsel %vm439, %v552, 0
      %v571 = vsel %vm449, %v560, 0
      %v574 = vsel %vm449, %v558, 0
      %576 = vmatprep.subr.bf16.mxu0 %v574
      %577 = vmatpush1.bf16.msra.mxu0 %v571
      %578 = vmatprep.subr.bf16.mxu0 0
      %579 = vmatpush1.bf16.msra.mxu0 0
      %580 = vmatprep.subr.bf16.mxu0 0
      %581 = vmatpush1.bf16.msra.mxu0 0
      %582 = vmatprep.subr.bf16.mxu0 0
      %583 = vmatpush1.bf16.msra.mxu0 0
      %584 = vmatprep.subr.bf16.mxu0 0
      %585 = vmatpush1.bf16.msra.mxu0 0
      %586 = vmatprep.subr.bf16.mxu0 0
      %587 = vmatpush1.bf16.msra.mxu0 0
      %588 = vmatprep.subr.bf16.mxu0 0
      %589 = vmatpush1.bf16.msra.mxu0 0
      %590 = vmatprep.subr.bf16.mxu0 0
      %591 = vmatpush1.bf16.msra.mxu0 0
      %592 = vmatprep.subr.bf16.mxu0 0
      %593 = vmatpush1.bf16.msra.mxu0 0
      %594 = vmatprep.subr.bf16.mxu0 0
      %595 = vmatpush1.bf16.msra.mxu0 0
      %596 = vmatprep.subr.bf16.mxu0 0
      %597 = vmatpush1.bf16.msra.mxu0 0
      %598 = vmatprep.subr.bf16.mxu0 0
      %599 = vmatpush1.bf16.msra.mxu0 0
      %600 = vmatprep.subr.bf16.mxu0 0
      %601 = vmatpush1.bf16.msra.mxu0 0
      %602 = vmatprep.subr.bf16.mxu0 0
      %603 = vmatpush1.bf16.msra.mxu0 0
      %604 = vmatprep.subr.bf16.mxu0 0
      %605 = vmatpush1.bf16.msra.mxu0 0
      %606 = vmatprep.subr.bf16.mxu0 0
      %607 = vmatpush1.bf16.msra.mxu0 0
      %608 = vmatprep.mubr.bf16.mxu0 0
      %609 = vmatmul.mubr.bf16.gmra.mrb[0].mxu0 %v562
      %v610 = vpop.f32.mrb[0].mxu0
      %v611 = vadd.f32 0.0, %v610
      %v612 = vpop.f32.mrb[0].mxu0
      %v613 = vadd.f32 0.0, %v612
      %v614 = vpop.f32.mrb[0].mxu0
      %v615 = vadd.f32 0.0, %v614
      %v616 = vpop.f32.mrb[0].mxu0
      %v617 = vadd.f32 0.0, %v616
      %618 = vmatprep.mubr.bf16.mxu0 0
      %619 = vmatmul.mubr.bf16.gmra.mrb[0].mxu0 %v565
      %v620 = vpop.f32.mrb[0].mxu0
      %v621 = vadd.f32 0.0, %v620
      %v622 = vpop.f32.mrb[0].mxu0
      %v623 = vadd.f32 0.0, %v622
      %v624 = vpop.f32.mrb[0].mxu0
      %v625 = vadd.f32 0.0, %v624
      %v626 = vpop.f32.mrb[0].mxu0
      %v627 = vadd.f32 0.0, %v626
      %628 = vmatprep.mubr.bf16.mxu0 0
      %629 = vmatmul.mubr.bf16.gmra.mrb[0].mxu0 %v568
      %v630 = vpop.f32.mrb[0].mxu0
      %v631 = vadd.f32 0.0, %v630
      %v632 = vpop.f32.mrb[0].mxu0
      %v633 = vadd.f32 0.0, %v632
      %v634 = vpop.f32.mrb[0].mxu0
      %v635 = vadd.f32 0.0, %v634
      %v636 = vpop.f32.mrb[0].mxu0
      %v637 = vadd.f32 0.0, %v636
      %638 = vdwg.mxu0
      %v639 = vadd.f32 %v519, %v611
      %v640 = vadd.f32 %v520, %v613
      %v641 = vadd.f32 %v521, %v615
      %v642 = vadd.f32 %v522, %v617
      %v643 = vadd.f32 %v523, %v621
      %v644 = vadd.f32 %v524, %v623
      %v645 = vadd.f32 %v525, %v625
      %v646 = vadd.f32 %v526, %v627
      %v647 = vadd.f32 %v527, %v631
      %v648 = vadd.f32 %v528, %v633
      %v649 = vadd.f32 %v529, %v635
      %v650 = vadd.f32 %v530, %v637
      %vm651 = vmpackc.low %vm347, %vm346
      %v652 = vsel %vm651, 65537, 0
      %v653 = vlaneseq
      %v654 = vshrl.u32 %v653, 7
      %v655 = vsub.s32 0, %v654
      %v656 = vrot.slane %v652, %v655
      %v657 = vlaneseq
      %v658 = vshrl.u32 %v657, 7
      %v659 = vsub.s32 4, %v658
      %v660 = vrot.slane %v652, %v659
      %661 = vrot.lane.b32.xlu0 %v656, 2
      %v662 = vpop.permute.xlu0 %661
      %663 = vrot.lane.b32.xlu0 %v660, 2
      %v664 = vpop.permute.xlu0 %663
      %vm665 = vcmask 15360
      %v666 = vsel %vm665, %v662, %v664
      %vm667 = vcmp.ne.s16.totalorder %v662, 0
      %vm668 = vcmp.ne.s16.totalorder %v666, 0
      %v669 = vsel %vm667, %v362, 0
      %v670 = vsel %vm668, %v366, 0
      %s671 = scalar_lea.vmem %s1, 48
      %v672 = vld [vmem:[%s671] sm:$0xf]
      %v673 = vld [vmem:[%s671 + $0x4] sm:$0xf]
      %v674 = vld [vmem:[%s671 + $0x8] sm:$0xf]
      %v675 = vld [vmem:[%s671 + $0xc] sm:$0xf]
      %v676 = vld [vmem:[%s671 + $0x10] sm:$0xf]
      %v677 = vld [vmem:[%s671 + $0x14] sm:$0xf]
      %v684 = vunpack.c.l.b16 %v672
      %v685 = vunpack.c.l.b16 %v673
      %v686 = vunpack.c.l.b16 %v674
      %v687 = vunpack.c.l.b16 %v675
      %v688 = vunpack.c.l.b16 %v676
      %v689 = vunpack.c.l.b16 %v677
      %v690 = vpack.c.b16 %v685, %v684
      %v691 = vpack.c.b16 %v687, %v686
      %v692 = vpack.c.b16 %v689, %v688
      %695 = vrot.lane.b32.xlu0 %v669, 126
      %v696 = vpop.permute.xlu0 %695
      %697 = vrot.lane.b32.xlu0 %v670, 126
      %v698 = vpop.permute.xlu0 %697
      %vm699 = vcmask 1031168
      %v700 = vsel %vm699, %v696, %v698
      %v702 = vsel %vm439, %v690, 0
      %v705 = vsel %vm439, %v691, 0
      %v708 = vsel %vm439, %v692, 0
      %v711 = vsel %vm449, %v700, 0
      %v714 = vsel %vm449, %v698, 0
      %716 = vmatprep.subr.bf16.mxu0 %v714
      %717 = vmatpush1.bf16.msra.mxu0 %v711
      %718 = vmatprep.subr.bf16.mxu0 0
      %719 = vmatpush1.bf16.msra.mxu0 0
      %720 = vmatprep.subr.bf16.mxu0 0
      %721 = vmatpush1.bf16.msra.mxu0 0
      %722 = vmatprep.subr.bf16.mxu0 0
      %723 = vmatpush1.bf16.msra.mxu0 0
      %724 = vmatprep.subr.bf16.mxu0 0
      %725 = vmatpush1.bf16.msra.mxu0 0
      %726 = vmatprep.subr.bf16.mxu0 0
      %727 = vmatpush1.bf16.msra.mxu0 0
      %728 = vmatprep.subr.bf16.mxu0 0
      %729 = vmatpush1.bf16.msra.mxu0 0
      %730 = vmatprep.subr.bf16.mxu0 0
      %731 = vmatpush1.bf16.msra.mxu0 0
      %732 = vmatprep.subr.bf16.mxu0 0
      %733 = vmatpush1.bf16.msra.mxu0 0
      %734 = vmatprep.subr.bf16.mxu0 0
      %735 = vmatpush1.bf16.msra.mxu0 0
      %736 = vmatprep.subr.bf16.mxu0 0
      %737 = vmatpush1.bf16.msra.mxu0 0
      %738 = vmatprep.subr.bf16.mxu0 0
      %739 = vmatpush1.bf16.msra.mxu0 0
      %740 = vmatprep.subr.bf16.mxu0 0
      %741 = vmatpush1.bf16.msra.mxu0 0
      %742 = vmatprep.subr.bf16.mxu0 0
      %743 = vmatpush1.bf16.msra.mxu0 0
      %744 = vmatprep.subr.bf16.mxu0 0
      %745 = vmatpush1.bf16.msra.mxu0 0
      %746 = vmatprep.subr.bf16.mxu0 0
      %747 = vmatpush1.bf16.msra.mxu0 0
      %748 = vmatprep.mubr.bf16.mxu0 0
      %749 = vmatmul.mubr.bf16.gmra.mrb[0].mxu0 %v702
      %v750 = vpop.f32.mrb[0].mxu0
      %v751 = vadd.f32 0.0, %v750
      %v752 = vpop.f32.mrb[0].mxu0
      %v753 = vadd.f32 0.0, %v752
      %v754 = vpop.f32.mrb[0].mxu0
      %v755 = vadd.f32 0.0, %v754
      %v756 = vpop.f32.mrb[0].mxu0
      %v757 = vadd.f32 0.0, %v756
      %758 = vmatprep.mubr.bf16.mxu0 0
      %759 = vmatmul.mubr.bf16.gmra.mrb[0].mxu0 %v705
      %v760 = vpop.f32.mrb[0].mxu0
      %v761 = vadd.f32 0.0, %v760
      %v762 = vpop.f32.mrb[0].mxu0
      %v763 = vadd.f32 0.0, %v762
      %v764 = vpop.f32.mrb[0].mxu0
      %v765 = vadd.f32 0.0, %v764
      %v766 = vpop.f32.mrb[0].mxu0
      %v767 = vadd.f32 0.0, %v766
      %768 = vmatprep.mubr.bf16.mxu0 0
      %769 = vmatmul.mubr.bf16.gmra.mrb[0].mxu0 %v708
      %v770 = vpop.f32.mrb[0].mxu0
      %v771 = vadd.f32 0.0, %v770
      %v772 = vpop.f32.mrb[0].mxu0
      %v773 = vadd.f32 0.0, %v772
      %v774 = vpop.f32.mrb[0].mxu0
      %v775 = vadd.f32 0.0, %v774
      %v776 = vpop.f32.mrb[0].mxu0
      %v777 = vadd.f32 0.0, %v776
      %778 = vdwg.mxu0
      %v779 = vadd.f32 %v639, %v751
      %v780 = vadd.f32 %v640, %v753
      %v781 = vadd.f32 %v641, %v755
      %v782 = vadd.f32 %v642, %v757
      %v783 = vadd.f32 %v643, %v761
      %v784 = vadd.f32 %v644, %v763
      %v785 = vadd.f32 %v645, %v765
      %v786 = vadd.f32 %v646, %v767
      %v787 = vadd.f32 %v647, %v771
      %v788 = vadd.f32 %v648, %v773
      %v789 = vadd.f32 %v649, %v775
      %v790 = vadd.f32 %v650, %v777
      %791 = vrot.lane.b32.xlu0 %v409, 16
      %v792 = vpop.permute.xlu0 %791
      %793 = vrot.lane.b32.xlu0 %v413, 16
      %v794 = vpop.permute.xlu0 %793
      %vm795 = vcmask 130048
      %v796 = vsel %vm795, %v792, %v794
      %vm797 = vcmp.ne.s16.totalorder %v792, 0
      %vm798 = vcmp.ne.s16.totalorder %v796, 0
      %v799 = vsel %vm797, %v362, 0
      %v800 = vsel %vm798, %v366, 0
      %s801 = scalar_lea.vmem %s1, 72
      %v802 = vld [vmem:[%s801] sm:$0xf]
      %v803 = vld [vmem:[%s801 + $0x4] sm:$0xf]
      %v804 = vld [vmem:[%s801 + $0x8] sm:$0xf]
      %v805 = vld [vmem:[%s801 + $0xc] sm:$0xf]
      %v806 = vld [vmem:[%s801 + $0x10] sm:$0xf]
      %v807 = vld [vmem:[%s801 + $0x14] sm:$0xf]
      %v814 = vunpack.c.l.b16 %v802
      %v815 = vunpack.c.l.b16 %v803
      %v816 = vunpack.c.l.b16 %v804
      %v817 = vunpack.c.l.b16 %v805
      %v818 = vunpack.c.l.b16 %v806
      %v819 = vunpack.c.l.b16 %v807
      %v820 = vpack.c.b16 %v815, %v814
      %v821 = vpack.c.b16 %v817, %v816
      %v822 = vpack.c.b16 %v819, %v818
      %825 = vrot.lane.b32.xlu0 %v799, 112
      %v826 = vpop.permute.xlu0 %825
      %827 = vrot.lane.b32.xlu0 %v800, 112
      %v828 = vpop.permute.xlu0 %827
      %vm829 = vcmask 916480
      %v830 = vsel %vm829, %v826, %v828
      %v832 = vsel %vm439, %v820, 0
      %v835 = vsel %vm439, %v821, 0
      %v838 = vsel %vm439, %v822, 0
      %v841 = vsel %vm449, %v830, 0
      %v844 = vsel %vm449, %v828, 0
      %846 = vmatprep.subr.bf16.mxu0 %v844
      %847 = vmatpush1.bf16.msra.mxu0 %v841
      %848 = vmatprep.subr.bf16.mxu0 0
      %849 = vmatpush1.bf16.msra.mxu0 0
      %850 = vmatprep.subr.bf16.mxu0 0
      %851 = vmatpush1.bf16.msra.mxu0 0
      %852 = vmatprep.subr.bf16.mxu0 0
      %853 = vmatpush1.bf16.msra.mxu0 0
      %854 = vmatprep.subr.bf16.mxu0 0
      %855 = vmatpush1.bf16.msra.mxu0 0
      %856 = vmatprep.subr.bf16.mxu0 0
      %857 = vmatpush1.bf16.msra.mxu0 0
      %858 = vmatprep.subr.bf16.mxu0 0
      %859 = vmatpush1.bf16.msra.mxu0 0
      %860 = vmatprep.subr.bf16.mxu0 0
      %861 = vmatpush1.bf16.msra.mxu0 0
      %862 = vmatprep.subr.bf16.mxu0 0
      %863 = vmatpush1.bf16.msra.mxu0 0
      %864 = vmatprep.subr.bf16.mxu0 0
      %865 = vmatpush1.bf16.msra.mxu0 0
      %866 = vmatprep.subr.bf16.mxu0 0
      %867 = vmatpush1.bf16.msra.mxu0 0
      %868 = vmatprep.subr.bf16.mxu0 0
      %869 = vmatpush1.bf16.msra.mxu0 0
      %870 = vmatprep.subr.bf16.mxu0 0
      %871 = vmatpush1.bf16.msra.mxu0 0
      %872 = vmatprep.subr.bf16.mxu0 0
      %873 = vmatpush1.bf16.msra.mxu0 0
      %874 = vmatprep.subr.bf16.mxu0 0
      %875 = vmatpush1.bf16.msra.mxu0 0
      %876 = vmatprep.subr.bf16.mxu0 0
      %877 = vmatpush1.bf16.msra.mxu0 0
      %878 = vmatprep.mubr.bf16.mxu0 0
      %879 = vmatmul.mubr.bf16.gmra.mrb[0].mxu0 %v832
      %v880 = vpop.f32.mrb[0].mxu0
      %v881 = vadd.f32 0.0, %v880
      %v882 = vpop.f32.mrb[0].mxu0
      %v883 = vadd.f32 0.0, %v882
      %v884 = vpop.f32.mrb[0].mxu0
      %v885 = vadd.f32 0.0, %v884
      %v886 = vpop.f32.mrb[0].mxu0
      %v887 = vadd.f32 0.0, %v886
      %888 = vmatprep.mubr.bf16.mxu0 0
      %889 = vmatmul.mubr.bf16.gmra.mrb[0].mxu0 %v835
      %v890 = vpop.f32.mrb[0].mxu0
      %v891 = vadd.f32 0.0, %v890
      %v892 = vpop.f32.mrb[0].mxu0
      %v893 = vadd.f32 0.0, %v892
      %v894 = vpop.f32.mrb[0].mxu0
      %v895 = vadd.f32 0.0, %v894
      %v896 = vpop.f32.mrb[0].mxu0
      %v897 = vadd.f32 0.0, %v896
      %898 = vmatprep.mubr.bf16.mxu0 0
      %899 = vmatmul.mubr.bf16.gmra.mrb[0].mxu0 %v838
      %v900 = vpop.f32.mrb[0].mxu0
      %v901 = vadd.f32 0.0, %v900
      %v902 = vpop.f32.mrb[0].mxu0
      %v903 = vadd.f32 0.0, %v902
      %v904 = vpop.f32.mrb[0].mxu0
      %v905 = vadd.f32 0.0, %v904
      %v906 = vpop.f32.mrb[0].mxu0
      %v907 = vadd.f32 0.0, %v906
      %908 = vdwg.mxu0
      %v909 = vadd.f32 %v779, %v881
      %v910 = vadd.f32 %v780, %v883
      %v911 = vadd.f32 %v781, %v885
      %v912 = vadd.f32 %v782, %v887
      %v913 = vadd.f32 %v783, %v891
      %v914 = vadd.f32 %v784, %v893
      %v915 = vadd.f32 %v785, %v895
      %v916 = vadd.f32 %v786, %v897
      %v917 = vadd.f32 %v787, %v901
      %v918 = vadd.f32 %v788, %v903
      %v919 = vadd.f32 %v789, %v905
      %v920 = vadd.f32 %v790, %v907
      %s921 = scalar_lea.vmem %s1, 96
      %v922 = vld [vmem:[%s921] sm:$0xf]
      %v923 = vld [vmem:[%s921 + $0x4] sm:$0xf]
      %v924 = vld [vmem:[%s921 + $0x8] sm:$0xf]
      %v925 = vld [vmem:[%s921 + $0xc] sm:$0xf]
      %v926 = vld [vmem:[%s921 + $0x10] sm:$0xf]
      %v927 = vld [vmem:[%s921 + $0x14] sm:$0xf]
      %v934 = vunpack.c.l.b16 %v922
      %v935 = vunpack.c.l.b16 %v923
      %v936 = vunpack.c.l.b16 %v924
      %v937 = vunpack.c.l.b16 %v925
      %v938 = vunpack.c.l.b16 %v926
      %v939 = vunpack.c.l.b16 %v927
      %v940 = vpack.c.b16 %v935, %v934
      %v941 = vpack.c.b16 %v937, %v936
      %v942 = vpack.c.b16 %v939, %v938
      %943 = vrot.lane.b32.xlu0 %v362, 111
      %v944 = vpop.permute.xlu0 %943
      %945 = vrot.lane.b32.xlu0 %v366, 111
      %v946 = vpop.permute.xlu0 %945
      %vm947 = vcmask 908288
      %v948 = vsel %vm947, %v944, %v946
      %v950 = vsel %vm439, %v940, 0
      %v953 = vsel %vm439, %v941, 0
      %v956 = vsel %vm439, %v942, 0
      %v959 = vsel %vm449, %v948, 0
      %v962 = vsel %vm449, %v946, 0
      %964 = vmatprep.subr.bf16.mxu0 %v962
      %965 = vmatpush1.bf16.msra.mxu0 %v959
      %966 = vmatprep.subr.bf16.mxu0 0
      %967 = vmatpush1.bf16.msra.mxu0 0
      %968 = vmatprep.subr.bf16.mxu0 0
      %969 = vmatpush1.bf16.msra.mxu0 0
      %970 = vmatprep.subr.bf16.mxu0 0
      %971 = vmatpush1.bf16.msra.mxu0 0
      %972 = vmatprep.subr.bf16.mxu0 0
      %973 = vmatpush1.bf16.msra.mxu0 0
      %974 = vmatprep.subr.bf16.mxu0 0
      %975 = vmatpush1.bf16.msra.mxu0 0
      %976 = vmatprep.subr.bf16.mxu0 0
      %977 = vmatpush1.bf16.msra.mxu0 0
      %978 = vmatprep.subr.bf16.mxu0 0
      %979 = vmatpush1.bf16.msra.mxu0 0
      %980 = vmatprep.subr.bf16.mxu0 0
      %981 = vmatpush1.bf16.msra.mxu0 0
      %982 = vmatprep.subr.bf16.mxu0 0
      %983 = vmatpush1.bf16.msra.mxu0 0
      %984 = vmatprep.subr.bf16.mxu0 0
      %985 = vmatpush1.bf16.msra.mxu0 0
      %986 = vmatprep.subr.bf16.mxu0 0
      %987 = vmatpush1.bf16.msra.mxu0 0
      %988 = vmatprep.subr.bf16.mxu0 0
      %989 = vmatpush1.bf16.msra.mxu0 0
      %990 = vmatprep.subr.bf16.mxu0 0
      %991 = vmatpush1.bf16.msra.mxu0 0
      %992 = vmatprep.subr.bf16.mxu0 0
      %993 = vmatpush1.bf16.msra.mxu0 0
      %994 = vmatprep.subr.bf16.mxu0 0
      %995 = vmatpush1.bf16.msra.mxu0 0
      %996 = vmatprep.mubr.bf16.mxu0 0
      %997 = vmatmul.mubr.bf16.gmra.mrb[0].mxu0 %v950
      %v998 = vpop.f32.mrb[0].mxu0
      %v999 = vadd.f32 0.0, %v998
      %v1000 = vpop.f32.mrb[0].mxu0
      %v1001 = vadd.f32 0.0, %v1000
      %v1002 = vpop.f32.mrb[0].mxu0
      %v1003 = vadd.f32 0.0, %v1002
      %v1004 = vpop.f32.mrb[0].mxu0
      %v1005 = vadd.f32 0.0, %v1004
      %1006 = vmatprep.mubr.bf16.mxu0 0
      %1007 = vmatmul.mubr.bf16.gmra.mrb[0].mxu0 %v953
      %v1008 = vpop.f32.mrb[0].mxu0
      %v1009 = vadd.f32 0.0, %v1008
      %v1010 = vpop.f32.mrb[0].mxu0
      %v1011 = vadd.f32 0.0, %v1010
      %v1012 = vpop.f32.mrb[0].mxu0
      %v1013 = vadd.f32 0.0, %v1012
      %v1014 = vpop.f32.mrb[0].mxu0
      %v1015 = vadd.f32 0.0, %v1014
      %1016 = vmatprep.mubr.bf16.mxu0 0
      %1017 = vmatmul.mubr.bf16.gmra.mrb[0].mxu0 %v956
      %v1018 = vpop.f32.mrb[0].mxu0
      %v1019 = vadd.f32 0.0, %v1018
      %v1020 = vpop.f32.mrb[0].mxu0
      %v1021 = vadd.f32 0.0, %v1020
      %v1022 = vpop.f32.mrb[0].mxu0
      %v1023 = vadd.f32 0.0, %v1022
      %v1024 = vpop.f32.mrb[0].mxu0
      %v1025 = vadd.f32 0.0, %v1024
      %1026 = vdwg.mxu0
      %v1027 = vadd.f32 %v909, %v999
      %v1028 = vadd.f32 %v910, %v1001
      %v1029 = vadd.f32 %v911, %v1003
      %v1030 = vadd.f32 %v912, %v1005
      %v1031 = vadd.f32 %v913, %v1009
      %v1032 = vadd.f32 %v914, %v1011
      %v1033 = vadd.f32 %v915, %v1013
      %v1034 = vadd.f32 %v916, %v1015
      %v1035 = vadd.f32 %v917, %v1019
      %v1036 = vadd.f32 %v918, %v1021
      %v1037 = vadd.f32 %v919, %v1023
      %v1038 = vadd.f32 %v920, %v1025
      %1039 = vrot.lane.b32.xlu0 %v656, 18
      %v1040 = vpop.permute.xlu0 %1039
      %1041 = vrot.lane.b32.xlu0 %v660, 18
      %v1042 = vpop.permute.xlu0 %1041
      %vm1043 = vcmask 146432
      %v1044 = vsel %vm1043, %v1040, %v1042
      %vm1045 = vcmp.ne.s16.totalorder %v1040, 0
      %vm1046 = vcmp.ne.s16.totalorder %v1044, 0
      %v1047 = vsel %vm1045, %v362, 0
      %v1048 = vsel %vm1046, %v366, 0
      %s1049 = scalar_lea.vmem %s1, 120
      %v1050 = vld [vmem:[%s1049] sm:$0xf]
      %v1051 = vld [vmem:[%s1049 + $0x4] sm:$0xf]
      %v1052 = vld [vmem:[%s1049 + $0x8] sm:$0xf]
      %v1053 = vld [vmem:[%s1049 + $0xc] sm:$0xf]
      %v1054 = vld [vmem:[%s1049 + $0x10] sm:$0xf]
      %v1055 = vld [vmem:[%s1049 + $0x14] sm:$0xf]
      %v1062 = vunpack.c.l.b16 %v1050
      %v1063 = vunpack.c.l.b16 %v1051
      %v1064 = vunpack.c.l.b16 %v1052
      %v1065 = vunpack.c.l.b16 %v1053
      %v1066 = vunpack.c.l.b16 %v1054
      %v1067 = vunpack.c.l.b16 %v1055
      %v1068 = vpack.c.b16 %v1063, %v1062
      %v1069 = vpack.c.b16 %v1065, %v1064
      %v1070 = vpack.c.b16 %v1067, %v1066
      %1073 = vrot.lane.b32.xlu0 %v1047, 110
      %v1074 = vpop.permute.xlu0 %1073
      %1075 = vrot.lane.b32.xlu0 %v1048, 110
      %v1076 = vpop.permute.xlu0 %1075
      %vm1077 = vcmask 900096
      %v1078 = vsel %vm1077, %v1074, %v1076
      %v1080 = vsel %vm439, %v1068, 0
      %v1083 = vsel %vm439, %v1069, 0
      %v1086 = vsel %vm439, %v1070, 0
      %v1089 = vsel %vm449, %v1078, 0
      %v1092 = vsel %vm449, %v1076, 0
      %1094 = vmatprep.subr.bf16.mxu0 %v1092
      %1095 = vmatpush1.bf16.msra.mxu0 %v1089
      %1096 = vmatprep.subr.bf16.mxu0 0
      %1097 = vmatpush1.bf16.msra.mxu0 0
      %1098 = vmatprep.subr.bf16.mxu0 0
      %1099 = vmatpush1.bf16.msra.mxu0 0
      %1100 = vmatprep.subr.bf16.mxu0 0
      %1101 = vmatpush1.bf16.msra.mxu0 0
      %1102 = vmatprep.subr.bf16.mxu0 0
      %1103 = vmatpush1.bf16.msra.mxu0 0
      %1104 = vmatprep.subr.bf16.mxu0 0
      %1105 = vmatpush1.bf16.msra.mxu0 0
      %1106 = vmatprep.subr.bf16.mxu0 0
      %1107 = vmatpush1.bf16.msra.mxu0 0
      %1108 = vmatprep.subr.bf16.mxu0 0
      %1109 = vmatpush1.bf16.msra.mxu0 0
      %1110 = vmatprep.subr.bf16.mxu0 0
      %1111 = vmatpush1.bf16.msra.mxu0 0
      %1112 = vmatprep.subr.bf16.mxu0 0
      %1113 = vmatpush1.bf16.msra.mxu0 0
      %1114 = vmatprep.subr.bf16.mxu0 0
      %1115 = vmatpush1.bf16.msra.mxu0 0
      %1116 = vmatprep.subr.bf16.mxu0 0
      %1117 = vmatpush1.bf16.msra.mxu0 0
      %1118 = vmatprep.subr.bf16.mxu0 0
      %1119 = vmatpush1.bf16.msra.mxu0 0
      %1120 = vmatprep.subr.bf16.mxu0 0
      %1121 = vmatpush1.bf16.msra.mxu0 0
      %1122 = vmatprep.subr.bf16.mxu0 0
      %1123 = vmatpush1.bf16.msra.mxu0 0
      %1124 = vmatprep.subr.bf16.mxu0 0
      %1125 = vmatpush1.bf16.msra.mxu0 0
      %1126 = vmatprep.mubr.bf16.mxu0 0
      %1127 = vmatmul.mubr.bf16.gmra.mrb[0].mxu0 %v1080
      %v1128 = vpop.f32.mrb[0].mxu0
      %v1129 = vadd.f32 0.0, %v1128
      %v1130 = vpop.f32.mrb[0].mxu0
      %v1131 = vadd.f32 0.0, %v1130
      %v1132 = vpop.f32.mrb[0].mxu0
      %v1133 = vadd.f32 0.0, %v1132
      %v1134 = vpop.f32.mrb[0].mxu0
      %v1135 = vadd.f32 0.0, %v1134
      %1136 = vmatprep.mubr.bf16.mxu0 0
      %1137 = vmatmul.mubr.bf16.gmra.mrb[0].mxu0 %v1083
      %v1138 = vpop.f32.mrb[0].mxu0
      %v1139 = vadd.f32 0.0, %v1138
      %v1140 = vpop.f32.mrb[0].mxu0
      %v1141 = vadd.f32 0.0, %v1140
      %v1142 = vpop.f32.mrb[0].mxu0
      %v1143 = vadd.f32 0.0, %v1142
      %v1144 = vpop.f32.mrb[0].mxu0
      %v1145 = vadd.f32 0.0, %v1144
      %1146 = vmatprep.mubr.bf16.mxu0 0
      %1147 = vmatmul.mubr.bf16.gmra.mrb[0].mxu0 %v1086
      %v1148 = vpop.f32.mrb[0].mxu0
      %v1149 = vadd.f32 0.0, %v1148
      %v1150 = vpop.f32.mrb[0].mxu0
      %v1151 = vadd.f32 0.0, %v1150
      %v1152 = vpop.f32.mrb[0].mxu0
      %v1153 = vadd.f32 0.0, %v1152
      %v1154 = vpop.f32.mrb[0].mxu0
      %v1155 = vadd.f32 0.0, %v1154
      %1156 = vdwg.mxu0
      %v1157 = vadd.f32 %v1027, %v1129
      %v1158 = vadd.f32 %v1028, %v1131
      %v1159 = vadd.f32 %v1029, %v1133
      %v1160 = vadd.f32 %v1030, %v1135
      %v1161 = vadd.f32 %v1031, %v1139
      %v1162 = vadd.f32 %v1032, %v1141
      %v1163 = vadd.f32 %v1033, %v1143
      %v1164 = vadd.f32 %v1034, %v1145
      %v1165 = vadd.f32 %v1035, %v1149
      %v1166 = vadd.f32 %v1036, %v1151
      %v1167 = vadd.f32 %v1037, %v1153
      %v1168 = vadd.f32 %v1038, %v1155
      %1169 = vrot.lane.b32.xlu0 %v409, 32
      %v1170 = vpop.permute.xlu0 %1169
      %1171 = vrot.lane.b32.xlu0 %v413, 32
      %v1172 = vpop.permute.xlu0 %1171
      %vm1173 = vcmask 261120
      %v1174 = vsel %vm1173, %v1170, %v1172
      %vm1175 = vcmp.ne.s16.totalorder %v1170, 0
      %vm1176 = vcmp.ne.s16.totalorder %v1174, 0
      %v1177 = vsel %vm1175, %v362, 0
      %v1178 = vsel %vm1176, %v366, 0
      %s1179 = scalar_lea.vmem %s1, 144
      %v1180 = vld [vmem:[%s1179] sm:$0xf]
      %v1181 = vld [vmem:[%s1179 + $0x4] sm:$0xf]
      %v1182 = vld [vmem:[%s1179 + $0x8] sm:$0xf]
      %v1183 = vld [vmem:[%s1179 + $0xc] sm:$0xf]
      %v1184 = vld [vmem:[%s1179 + $0x10] sm:$0xf]
      %v1185 = vld [vmem:[%s1179 + $0x14] sm:$0xf]
      %v1192 = vunpack.c.l.b16 %v1180
      %v1193 = vunpack.c.l.b16 %v1181
      %v1194 = vunpack.c.l.b16 %v1182
      %v1195 = vunpack.c.l.b16 %v1183
      %v1196 = vunpack.c.l.b16 %v1184
      %v1197 = vunpack.c.l.b16 %v1185
      %v1198 = vpack.c.b16 %v1193, %v1192
      %v1199 = vpack.c.b16 %v1195, %v1194
      %v1200 = vpack.c.b16 %v1197, %v1196
      %1203 = vrot.lane.b32.xlu0 %v1177, 96
      %v1204 = vpop.permute.xlu0 %1203
      %1205 = vrot.lane.b32.xlu0 %v1178, 96
      %v1206 = vpop.permute.xlu0 %1205
      %vm1207 = vcmask 785408
      %v1208 = vsel %vm1207, %v1204, %v1206
      %v1210 = vsel %vm439, %v1198, 0
      %v1213 = vsel %vm439, %v1199, 0
      %v1216 = vsel %vm439, %v1200, 0
      %v1219 = vsel %vm449, %v1208, 0
      %v1222 = vsel %vm449, %v1206, 0
      %1224 = vmatprep.subr.bf16.mxu0 %v1222
      %1225 = vmatpush1.bf16.msra.mxu0 %v1219
      %1226 = vmatprep.subr.bf16.mxu0 0
      %1227 = vmatpush1.bf16.msra.mxu0 0
      %1228 = vmatprep.subr.bf16.mxu0 0
      %1229 = vmatpush1.bf16.msra.mxu0 0
      %1230 = vmatprep.subr.bf16.mxu0 0
      %1231 = vmatpush1.bf16.msra.mxu0 0
      %1232 = vmatprep.subr.bf16.mxu0 0
      %1233 = vmatpush1.bf16.msra.mxu0 0
      %1234 = vmatprep.subr.bf16.mxu0 0
      %1235 = vmatpush1.bf16.msra.mxu0 0
      %1236 = vmatprep.subr.bf16.mxu0 0
      %1237 = vmatpush1.bf16.msra.mxu0 0
      %1238 = vmatprep.subr.bf16.mxu0 0
      %1239 = vmatpush1.bf16.msra.mxu0 0
      %1240 = vmatprep.subr.bf16.mxu0 0
      %1241 = vmatpush1.bf16.msra.mxu0 0
      %1242 = vmatprep.subr.bf16.mxu0 0
      %1243 = vmatpush1.bf16.msra.mxu0 0
      %1244 = vmatprep.subr.bf16.mxu0 0
      %1245 = vmatpush1.bf16.msra.mxu0 0
      %1246 = vmatprep.subr.bf16.mxu0 0
      %1247 = vmatpush1.bf16.msra.mxu0 0
      %1248 = vmatprep.subr.bf16.mxu0 0
      %1249 = vmatpush1.bf16.msra.mxu0 0
      %1250 = vmatprep.subr.bf16.mxu0 0
      %1251 = vmatpush1.bf16.msra.mxu0 0
      %1252 = vmatprep.subr.bf16.mxu0 0
      %1253 = vmatpush1.bf16.msra.mxu0 0
      %1254 = vmatprep.subr.bf16.mxu0 0
      %1255 = vmatpush1.bf16.msra.mxu0 0
      %1256 = vmatprep.mubr.bf16.mxu0 0
      %1257 = vmatmul.mubr.bf16.gmra.mrb[0].mxu0 %v1210
      %v1258 = vpop.f32.mrb[0].mxu0
      %v1259 = vadd.f32 0.0, %v1258
      %v1260 = vpop.f32.mrb[0].mxu0
      %v1261 = vadd.f32 0.0, %v1260
      %v1262 = vpop.f32.mrb[0].mxu0
      %v1263 = vadd.f32 0.0, %v1262
      %v1264 = vpop.f32.mrb[0].mxu0
      %v1265 = vadd.f32 0.0, %v1264
      %1266 = vmatprep.mubr.bf16.mxu0 0
      %1267 = vmatmul.mubr.bf16.gmra.mrb[0].mxu0 %v1213
      %v1268 = vpop.f32.mrb[0].mxu0
      %v1269 = vadd.f32 0.0, %v1268
      %v1270 = vpop.f32.mrb[0].mxu0
      %v1271 = vadd.f32 0.0, %v1270
      %v1272 = vpop.f32.mrb[0].mxu0
      %v1273 = vadd.f32 0.0, %v1272
      %v1274 = vpop.f32.mrb[0].mxu0
      %v1275 = vadd.f32 0.0, %v1274
      %1276 = vmatprep.mubr.bf16.mxu0 0
      %1277 = vmatmul.mubr.bf16.gmra.mrb[0].mxu0 %v1216
      %v1278 = vpop.f32.mrb[0].mxu0
      %v1279 = vadd.f32 0.0, %v1278
      %v1280 = vpop.f32.mrb[0].mxu0
      %v1281 = vadd.f32 0.0, %v1280
      %v1282 = vpop.f32.mrb[0].mxu0
      %v1283 = vadd.f32 0.0, %v1282
      %v1284 = vpop.f32.mrb[0].mxu0
      %v1285 = vadd.f32 0.0, %v1284
      %1286 = vdwg.mxu0
      %v1287 = vadd.f32 %v1157, %v1259
      %v1288 = vadd.f32 %v1158, %v1261
      %v1289 = vadd.f32 %v1159, %v1263
      %v1290 = vadd.f32 %v1160, %v1265
      %v1291 = vadd.f32 %v1161, %v1269
      %v1292 = vadd.f32 %v1162, %v1271
      %v1293 = vadd.f32 %v1163, %v1273
      %v1294 = vadd.f32 %v1164, %v1275
      %v1295 = vadd.f32 %v1165, %v1279
      %v1296 = vadd.f32 %v1166, %v1281
      %v1297 = vadd.f32 %v1167, %v1283
      %v1298 = vadd.f32 %v1168, %v1285
      %s1299 = scalar_lea.vmem %s1, 168
      %v1300 = vld [vmem:[%s1299] sm:$0xf]
      %v1301 = vld [vmem:[%s1299 + $0x4] sm:$0xf]
      %v1302 = vld [vmem:[%s1299 + $0x8] sm:$0xf]
      %v1303 = vld [vmem:[%s1299 + $0xc] sm:$0xf]
      %v1304 = vld [vmem:[%s1299 + $0x10] sm:$0xf]
      %v1305 = vld [vmem:[%s1299 + $0x14] sm:$0xf]
      %v1312 = vunpack.c.l.b16 %v1300
      %v1313 = vunpack.c.l.b16 %v1301
      %v1314 = vunpack.c.l.b16 %v1302
      %v1315 = vunpack.c.l.b16 %v1303
      %v1316 = vunpack.c.l.b16 %v1304
      %v1317 = vunpack.c.l.b16 %v1305
      %v1318 = vpack.c.b16 %v1313, %v1312
      %v1319 = vpack.c.b16 %v1315, %v1314
      %v1320 = vpack.c.b16 %v1317, %v1316
      %1321 = vrot.lane.b32.xlu0 %v362, 95
      %v1322 = vpop.permute.xlu0 %1321
      %1323 = vrot.lane.b32.xlu0 %v366, 95
      %v1324 = vpop.permute.xlu0 %1323
      %vm1325 = vcmask 777216
      %v1326 = vsel %vm1325, %v1322, %v1324
      %v1328 = vsel %vm439, %v1318, 0
      %v1331 = vsel %vm439, %v1319, 0
      %v1334 = vsel %vm439, %v1320, 0
      %v1337 = vsel %vm449, %v1326, 0
      %v1340 = vsel %vm449, %v1324, 0
      %1342 = vmatprep.subr.bf16.mxu0 %v1340
      %1343 = vmatpush1.bf16.msra.mxu0 %v1337
      %1344 = vmatprep.subr.bf16.mxu0 0
      %1345 = vmatpush1.bf16.msra.mxu0 0
      %1346 = vmatprep.subr.bf16.mxu0 0
      %1347 = vmatpush1.bf16.msra.mxu0 0
      %1348 = vmatprep.subr.bf16.mxu0 0
      %1349 = vmatpush1.bf16.msra.mxu0 0
      %1350 = vmatprep.subr.bf16.mxu0 0
      %1351 = vmatpush1.bf16.msra.mxu0 0
      %1352 = vmatprep.subr.bf16.mxu0 0
      %1353 = vmatpush1.bf16.msra.mxu0 0
      %1354 = vmatprep.subr.bf16.mxu0 0
      %1355 = vmatpush1.bf16.msra.mxu0 0
      %1356 = vmatprep.subr.bf16.mxu0 0
      %1357 = vmatpush1.bf16.msra.mxu0 0
      %1358 = vmatprep.subr.bf16.mxu0 0
      %1359 = vmatpush1.bf16.msra.mxu0 0
      %1360 = vmatprep.subr.bf16.mxu0 0
      %1361 = vmatpush1.bf16.msra.mxu0 0
      %1362 = vmatprep.subr.bf16.mxu0 0
      %1363 = vmatpush1.bf16.msra.mxu0 0
      %1364 = vmatprep.subr.bf16.mxu0 0
      %1365 = vmatpush1.bf16.msra.mxu0 0
      %1366 = vmatprep.subr.bf16.mxu0 0
      %1367 = vmatpush1.bf16.msra.mxu0 0
      %1368 = vmatprep.subr.bf16.mxu0 0
      %1369 = vmatpush1.bf16.msra.mxu0 0
      %1370 = vmatprep.subr.bf16.mxu0 0
      %1371 = vmatpush1.bf16.msra.mxu0 0
      %1372 = vmatprep.subr.bf16.mxu0 0
      %1373 = vmatpush1.bf16.msra.mxu0 0
      %1374 = vmatprep.mubr.bf16.mxu0 0
      %1375 = vmatmul.mubr.bf16.gmra.mrb[0].mxu0 %v1328
      %v1376 = vpop.f32.mrb[0].mxu0
      %v1377 = vadd.f32 0.0, %v1376
      %v1378 = vpop.f32.mrb[0].mxu0
      %v1379 = vadd.f32 0.0, %v1378
      %v1380 = vpop.f32.mrb[0].mxu0
      %v1381 = vadd.f32 0.0, %v1380
      %v1382 = vpop.f32.mrb[0].mxu0
      %v1383 = vadd.f32 0.0, %v1382
      %1384 = vmatprep.mubr.bf16.mxu0 0
      %1385 = vmatmul.mubr.bf16.gmra.mrb[0].mxu0 %v1331
      %v1386 = vpop.f32.mrb[0].mxu0
      %v1387 = vadd.f32 0.0, %v1386
      %v1388 = vpop.f32.mrb[0].mxu0
      %v1389 = vadd.f32 0.0, %v1388
      %v1390 = vpop.f32.mrb[0].mxu0
      %v1391 = vadd.f32 0.0, %v1390
      %v1392 = vpop.f32.mrb[0].mxu0
      %v1393 = vadd.f32 0.0, %v1392
      %1394 = vmatprep.mubr.bf16.mxu0 0
      %1395 = vmatmul.mubr.bf16.gmra.mrb[0].mxu0 %v1334
      %v1396 = vpop.f32.mrb[0].mxu0
      %v1397 = vadd.f32 0.0, %v1396
      %v1398 = vpop.f32.mrb[0].mxu0
      %v1399 = vadd.f32 0.0, %v1398
      %v1400 = vpop.f32.mrb[0].mxu0
      %v1401 = vadd.f32 0.0, %v1400
      %v1402 = vpop.f32.mrb[0].mxu0
      %v1403 = vadd.f32 0.0, %v1402
      %1404 = vdwg.mxu0
      %v1405 = vadd.f32 %v1287, %v1377
      %v1406 = vadd.f32 %v1288, %v1379
      %v1407 = vadd.f32 %v1289, %v1381
      %v1408 = vadd.f32 %v1290, %v1383
      %v1409 = vadd.f32 %v1291, %v1387
      %v1410 = vadd.f32 %v1292, %v1389
      %v1411 = vadd.f32 %v1293, %v1391
      %v1412 = vadd.f32 %v1294, %v1393
      %v1413 = vadd.f32 %v1295, %v1397
      %v1414 = vadd.f32 %v1296, %v1399
      %v1415 = vadd.f32 %v1297, %v1401
      %v1416 = vadd.f32 %v1298, %v1403
      %1417 = vrot.lane.b32.xlu0 %v656, 34
      %v1418 = vpop.permute.xlu0 %1417
      %1419 = vrot.lane.b32.xlu0 %v660, 34
      %v1420 = vpop.permute.xlu0 %1419
      %vm1421 = vcmask 277504
      %v1422 = vsel %vm1421, %v1418, %v1420
      %vm1423 = vcmp.ne.s16.totalorder %v1418, 0
      %vm1424 = vcmp.ne.s16.totalorder %v1422, 0
      %v1425 = vsel %vm1423, %v362, 0
      %v1426 = vsel %vm1424, %v366, 0
      %s1427 = scalar_lea.vmem %s1, 192
      %v1428 = vld [vmem:[%s1427] sm:$0xf]
      %v1429 = vld [vmem:[%s1427 + $0x4] sm:$0xf]
      %v1430 = vld [vmem:[%s1427 + $0x8] sm:$0xf]
      %v1431 = vld [vmem:[%s1427 + $0xc] sm:$0xf]
      %v1432 = vld [vmem:[%s1427 + $0x10] sm:$0xf]
      %v1433 = vld [vmem:[%s1427 + $0x14] sm:$0xf]
      %v1440 = vunpack.c.l.b16 %v1428
      %v1441 = vunpack.c.l.b16 %v1429
      %v1442 = vunpack.c.l.b16 %v1430
      %v1443 = vunpack.c.l.b16 %v1431
      %v1444 = vunpack.c.l.b16 %v1432
      %v1445 = vunpack.c.l.b16 %v1433
      %v1446 = vpack.c.b16 %v1441, %v1440
      %v1447 = vpack.c.b16 %v1443, %v1442
      %v1448 = vpack.c.b16 %v1445, %v1444
      %1451 = vrot.lane.b32.xlu0 %v1425, 94
      %v1452 = vpop.permute.xlu0 %1451
      %1453 = vrot.lane.b32.xlu0 %v1426, 94
      %v1454 = vpop.permute.xlu0 %1453
      %vm1455 = vcmask 769024
      %v1456 = vsel %vm1455, %v1452, %v1454
      %v1458 = vsel %vm439, %v1446, 0
      %v1461 = vsel %vm439, %v1447, 0
      %v1464 = vsel %vm439, %v1448, 0
      %v1467 = vsel %vm449, %v1456, 0
      %v1470 = vsel %vm449, %v1454, 0
      %1472 = vmatprep.subr.bf16.mxu0 %v1470
      %1473 = vmatpush1.bf16.msra.mxu0 %v1467
      %1474 = vmatprep.subr.bf16.mxu0 0
      %1475 = vmatpush1.bf16.msra.mxu0 0
      %1476 = vmatprep.subr.bf16.mxu0 0
      %1477 = vmatpush1.bf16.msra.mxu0 0
      %1478 = vmatprep.subr.bf16.mxu0 0
      %1479 = vmatpush1.bf16.msra.mxu0 0
      %1480 = vmatprep.subr.bf16.mxu0 0
      %1481 = vmatpush1.bf16.msra.mxu0 0
      %1482 = vmatprep.subr.bf16.mxu0 0
      %1483 = vmatpush1.bf16.msra.mxu0 0
      %1484 = vmatprep.subr.bf16.mxu0 0
      %1485 = vmatpush1.bf16.msra.mxu0 0
      %1486 = vmatprep.subr.bf16.mxu0 0
      %1487 = vmatpush1.bf16.msra.mxu0 0
      %1488 = vmatprep.subr.bf16.mxu0 0
      %1489 = vmatpush1.bf16.msra.mxu0 0
      %1490 = vmatprep.subr.bf16.mxu0 0
      %1491 = vmatpush1.bf16.msra.mxu0 0
      %1492 = vmatprep.subr.bf16.mxu0 0
      %1493 = vmatpush1.bf16.msra.mxu0 0
      %1494 = vmatprep.subr.bf16.mxu0 0
      %1495 = vmatpush1.bf16.msra.mxu0 0
      %1496 = vmatprep.subr.bf16.mxu0 0
      %1497 = vmatpush1.bf16.msra.mxu0 0
      %1498 = vmatprep.subr.bf16.mxu0 0
      %1499 = vmatpush1.bf16.msra.mxu0 0
      %1500 = vmatprep.subr.bf16.mxu0 0
      %1501 = vmatpush1.bf16.msra.mxu0 0
      %1502 = vmatprep.subr.bf16.mxu0 0
      %1503 = vmatpush1.bf16.msra.mxu0 0
      %1504 = vmatprep.mubr.bf16.mxu0 0
      %1505 = vmatmul.mubr.bf16.gmra.mrb[0].mxu0 %v1458
      %v1506 = vpop.f32.mrb[0].mxu0
      %v1507 = vadd.f32 0.0, %v1506
      %v1508 = vpop.f32.mrb[0].mxu0
      %v1509 = vadd.f32 0.0, %v1508
      %v1510 = vpop.f32.mrb[0].mxu0
      %v1511 = vadd.f32 0.0, %v1510
      %v1512 = vpop.f32.mrb[0].mxu0
      %v1513 = vadd.f32 0.0, %v1512
      %1514 = vmatprep.mubr.bf16.mxu0 0
      %1515 = vmatmul.mubr.bf16.gmra.mrb[0].mxu0 %v1461
      %v1516 = vpop.f32.mrb[0].mxu0
      %v1517 = vadd.f32 0.0, %v1516
      %v1518 = vpop.f32.mrb[0].mxu0
      %v1519 = vadd.f32 0.0, %v1518
      %v1520 = vpop.f32.mrb[0].mxu0
      %v1521 = vadd.f32 0.0, %v1520
      %v1522 = vpop.f32.mrb[0].mxu0
      %v1523 = vadd.f32 0.0, %v1522
      %1524 = vmatprep.mubr.bf16.mxu0 0
      %1525 = vmatmul.mubr.bf16.gmra.mrb[0].mxu0 %v1464
      %v1526 = vpop.f32.mrb[0].mxu0
      %v1527 = vadd.f32 0.0, %v1526
      %v1528 = vpop.f32.mrb[0].mxu0
      %v1529 = vadd.f32 0.0, %v1528
      %v1530 = vpop.f32.mrb[0].mxu0
      %v1531 = vadd.f32 0.0, %v1530
      %v1532 = vpop.f32.mrb[0].mxu0
      %v1533 = vadd.f32 0.0, %v1532
      %1534 = vdwg.mxu0
      %v1535 = vadd.f32 %v1405, %v1507
      %v1536 = vadd.f32 %v1406, %v1509
      %v1537 = vadd.f32 %v1407, %v1511
      %v1538 = vadd.f32 %v1408, %v1513
      %v1539 = vadd.f32 %v1409, %v1517
      %v1540 = vadd.f32 %v1410, %v1519
      %v1541 = vadd.f32 %v1411, %v1521
      %v1542 = vadd.f32 %v1412, %v1523
      %v1543 = vadd.f32 %v1413, %v1527
      %v1544 = vadd.f32 %v1414, %v1529
      %v1545 = vadd.f32 %v1415, %v1531
      %v1546 = vadd.f32 %v1416, %v1533
      %v1547 = vmul.f32 %v1535, 0.2
      %v1548 = vmul.f32 %v1536, 0.2
      %v1549 = vmul.f32 %v1537, 0.2
      %v1550 = vmul.f32 %v1538, 0.2
      %v1551 = vmul.f32 %v1539, 0.2
      %v1552 = vmul.f32 %v1540, 0.2
      %v1553 = vmul.f32 %v1541, 0.2
      %v1554 = vmul.f32 %v1542, 0.2
      %v1555 = vmul.f32 %v1543, 0.2
      %v1556 = vmul.f32 %v1544, 0.2
      %v1557 = vmul.f32 %v1545, 0.2
      %v1558 = vmul.f32 %v1546, 0.2
      %v1559 = vmax.f32 %v1535, %v1547
      %v1560 = vmax.f32 %v1536, %v1548
      %v1561 = vmax.f32 %v1537, %v1549
      %v1562 = vmax.f32 %v1538, %v1550
      %v1563 = vmax.f32 %v1539, %v1551
      %v1564 = vmax.f32 %v1540, %v1552
      %v1565 = vmax.f32 %v1541, %v1553
      %v1566 = vmax.f32 %v1542, %v1554
      %v1567 = vmax.f32 %v1543, %v1555
      %v1568 = vmax.f32 %v1544, %v1556
      %v1569 = vmax.f32 %v1545, %v1557
      %v1570 = vmax.f32 %v1546, %v1558
      %vm1571 = vcmp.lt.s32.totalorder %v310, 16
      %vm1572 = vcmp.lt.s32.totalorder %v311, 16
      %p1573 = scmp.eq.s32.totalorder %s302, 0
      %s1574 = scalar_select %p1573, 1, 0
      %v1575 = vstv %s1574
      %vm1576 = vcmp.eq.s32.totalorder %v1575, 1
      %vm1577 = vmand %vm1571, %vm1576
      %vm1578 = vmand %vm1572, %vm1576
      %vm1579 = vcmp.ge.s32.totalorder %v310, 144
      %vm1580 = vcmp.ge.s32.totalorder %v311, 144
      %s1581 = sadd.s32 %s302, 8
      %p1582 = scmp.ge.s32.totalorder %s1581, 16
      %s1583 = scalar_select %p1582, 1, 0
      %v1584 = vstv %s1583
      %vm1585 = vcmp.eq.s32.totalorder %v1584, 1
      %vm1586 = vmand %vm1579, %vm1585
      %vm1587 = vmand %vm1580, %vm1585
      %vm1588 = vmor %vm1577, %vm1586
      %vm1589 = vmor %vm1578, %vm1587
      %v1590 = vsel %vm1588, 1, 0
      %v1591 = vsel %vm1589, 1, 0
      %vm1592 = vcmp.eq.s32.totalorder %v1590, 1
      %vm1593 = vcmp.eq.s32.totalorder %v1591, 1
      %v1594 = vsel %vm1592, 0.0, %v1559
      %v1595 = vsel %vm1593, 0.0, %v1560
      %v1596 = vsel %vm1592, 0.0, %v1561
      %v1597 = vsel %vm1593, 0.0, %v1562
      %v1598 = vsel %vm1592, 0.0, %v1563
      %v1599 = vsel %vm1593, 0.0, %v1564
      %v1600 = vsel %vm1592, 0.0, %v1565
      %v1601 = vsel %vm1593, 0.0, %v1566
      %v1602 = vsel %vm1592, 0.0, %v1567
      %v1603 = vsel %vm1593, 0.0, %v1568
      %v1604 = vsel %vm1592, 0.0, %v1569
      %v1605 = vsel %vm1593, 0.0, %v1570
      %v1606 = vpack.c.bf16 %v1596, %v1594
      %v1607 = vpack.c.bf16 %v1597, %v1595
      %v1608 = vpack.c.bf16 %v1600, %v1598
      %v1609 = vpack.c.bf16 %v1601, %v1599
      %v1610 = vpack.c.bf16 %v1604, %v1602
      %v1611 = vpack.c.bf16 %v1605, %v1603
      %1618 = vrot.lane.b32.xlu0 %v1606, 1
      %v1619 = vpop.permute.xlu0 %1618
      %1620 = vrot.lane.b32.xlu0 %v1607, 1
      %v1621 = vpop.permute.xlu0 %1620
      %1622 = vrot.lane.b32.xlu0 %v1608, 1
      %v1623 = vpop.permute.xlu0 %1622
      %1624 = vrot.lane.b32.xlu0 %v1609, 1
      %v1625 = vpop.permute.xlu0 %1624
      %1626 = vrot.lane.b32.xlu0 %v1610, 1
      %v1627 = vpop.permute.xlu0 %1626
      %1628 = vrot.lane.b32.xlu0 %v1611, 1
      %v1629 = vpop.permute.xlu0 %1628
      %v1630 = vsel %vm357, %v1619, %v1621
      %v1631 = vsel %vm357, %v1623, %v1625
      %v1632 = vsel %vm357, %v1627, %v1629
      %v1634 = vsel %vm359, 0, %v1619
      %v1637 = vsel %vm359, 0, %v1623
      %v1640 = vsel %vm359, 0, %v1627
      %vm1642 = vcmask 269312
      %v1644 = vsel %vm1642, %v1630, 0
      %v1647 = vsel %vm1642, %v1631, 0
      %v1650 = vsel %vm1642, %v1632, 0
      %v1652 = vld [vmem:[%s4] sm:$0xff]
      %v1653 = vld [vmem:[%s4 + $0x8] sm:$0xff]
      %v1654 = vld [vmem:[%s4 + $0x10] sm:$0xff]
      %v1655 = vld [vmem:[%s4 + $0x18] sm:$0xff]
      %v1656 = vld [vmem:[%s4 + $0x20] sm:$0xff]
      %v1657 = vld [vmem:[%s4 + $0x28] sm:$0xff]
      %1659 = vset.pattern.permute.xlu0 0
      %1660 = vperm.xlu0 %1659, %v1652
      %v1661 = vpop.permute.xlu0 %1660
      %1664 = vset.pattern.permute.xlu0 0
      %1665 = vperm.xlu0 %1664, %v1653
      %v1666 = vpop.permute.xlu0 %1665
      %1669 = vset.pattern.permute.xlu0 0
      %1670 = vperm.xlu0 %1669, %v1654
      %v1671 = vpop.permute.xlu0 %1670
      %1674 = vset.pattern.permute.xlu0 0
      %1675 = vperm.xlu0 %1674, %v1655
      %v1676 = vpop.permute.xlu0 %1675
      %1679 = vset.pattern.permute.xlu0 0
      %1680 = vperm.xlu0 %1679, %v1656
      %v1681 = vpop.permute.xlu0 %1680
      %1684 = vset.pattern.permute.xlu0 0
      %1685 = vperm.xlu0 %1684, %v1657
      %v1686 = vpop.permute.xlu0 %1685
      %vm1688 = vmpackc.low %vm340, %vm340
      %v1689 = vsel %vm1688, 65537, 0
      %v1690 = vlaneseq
      %v1691 = vshrl.u32 %v1690, 7
      %v1692 = vsub.s32 0, %v1691
      %v1693 = vrot.slane %v1689, %v1692
      %vm1694 = vcmp.ne.s16.totalorder %v1693, 0
      %v1695 = vsel %vm1694, %v1634, 0
      %v1696 = vsel %vm1694, %v1637, 0
      %v1697 = vsel %vm1694, %v1640, 0
      %v1698 = vld [vmem:[%s3] sm:$0xf]
      %v1699 = vld [vmem:[%s3 + $0x4] sm:$0xf]
      %v1700 = vld [vmem:[%s3 + $0x8] sm:$0xf]
      %v1701 = vld [vmem:[%s3 + $0xc] sm:$0xf]
      %v1702 = vld [vmem:[%s3 + $0x10] sm:$0xf]
      %v1703 = vld [vmem:[%s3 + $0x14] sm:$0xf]
      %v1710 = vunpack.c.l.b16 %v1698
      %v1711 = vunpack.c.l.b16 %v1699
      %v1712 = vunpack.c.l.b16 %v1700
      %v1713 = vunpack.c.l.b16 %v1701
      %v1714 = vunpack.c.l.b16 %v1702
      %v1715 = vunpack.c.l.b16 %v1703
      %v1716 = vpack.c.b16 %v1711, %v1710
      %v1717 = vpack.c.b16 %v1713, %v1712
      %v1718 = vpack.c.b16 %v1715, %v1714
      %vm1719 = vcmask 392192
      %v1721 = vsel %vm1719, %v1716, 0
      %v1724 = vsel %vm1719, %v1717, 0
      %v1727 = vsel %vm1719, %v1718, 0
      %1729 = vmatprep.subr.bf16.mxu0 0
      %1730 = vmatpush1.bf16.msra.mxu0 %v1695
      %1731 = vmatprep.subr.bf16.mxu0 0
      %1732 = vmatpush1.bf16.msra.mxu0 %v1696
      %1733 = vmatprep.subr.bf16.mxu0 0
      %1734 = vmatpush1.bf16.msra.mxu0 %v1697
      %1735 = vmatprep.subr.bf16.mxu0 0
      %1736 = vmatpush1.bf16.msra.mxu0 0
      %1737 = vmatprep.subr.bf16.mxu0 0
      %1738 = vmatpush1.bf16.msra.mxu0 0
      %1739 = vmatprep.subr.bf16.mxu0 0
      %1740 = vmatpush1.bf16.msra.mxu0 0
      %1741 = vmatprep.subr.bf16.mxu0 0
      %1742 = vmatpush1.bf16.msra.mxu0 0
      %1743 = vmatprep.subr.bf16.mxu0 0
      %1744 = vmatpush1.bf16.msra.mxu0 0
      %1745 = vmatprep.subr.bf16.mxu0 0
      %1746 = vmatpush1.bf16.msra.mxu0 0
      %1747 = vmatprep.subr.bf16.mxu0 0
      %1748 = vmatpush1.bf16.msra.mxu0 0
      %1749 = vmatprep.subr.bf16.mxu0 0
      %1750 = vmatpush1.bf16.msra.mxu0 0
      %1751 = vmatprep.subr.bf16.mxu0 0
      %1752 = vmatpush1.bf16.msra.mxu0 0
      %1753 = vmatprep.subr.bf16.mxu0 0
      %1754 = vmatpush1.bf16.msra.mxu0 0
      %1755 = vmatprep.subr.bf16.mxu0 0
      %1756 = vmatpush1.bf16.msra.mxu0 0
      %1757 = vmatprep.subr.bf16.mxu0 0
      %1758 = vmatpush1.bf16.msra.mxu0 0
      %1759 = vmatprep.subr.bf16.mxu0 0
      %1760 = vmatpush1.bf16.msra.mxu0 0
      %1761 = vmatprep.mubr.bf16.mxu0 0
      %1762 = vmatmul.mubr.bf16.gmra.mrb[0].mxu0 %v1721
      %v1763 = vpop.f32.mrb[0].mxu0
      %v1764 = vadd.f32 0.0, %v1763
      %v1765 = vpop.f32.mrb[0].mxu0
      %v1766 = vpop.f32.mrb[0].mxu0
      %v1767 = vadd.f32 0.0, %v1766
      %v1768 = vpop.f32.mrb[0].mxu0
      %1769 = vmatprep.mubr.bf16.mxu0 0
      %1770 = vmatmul.mubr.bf16.gmra.mrb[0].mxu0 %v1724
      %v1771 = vpop.f32.mrb[0].mxu0
      %v1772 = vadd.f32 0.0, %v1771
      %v1773 = vpop.f32.mrb[0].mxu0
      %v1774 = vpop.f32.mrb[0].mxu0
      %v1775 = vadd.f32 0.0, %v1774
      %v1776 = vpop.f32.mrb[0].mxu0
      %1777 = vmatprep.mubr.bf16.mxu0 0
      %1778 = vmatmul.mubr.bf16.gmra.mrb[0].mxu0 %v1727
      %v1779 = vpop.f32.mrb[0].mxu0
      %v1780 = vadd.f32 0.0, %v1779
      %v1781 = vpop.f32.mrb[0].mxu0
      %v1782 = vpop.f32.mrb[0].mxu0
      %v1783 = vadd.f32 0.0, %v1782
      %v1784 = vpop.f32.mrb[0].mxu0
      %1785 = vdwg.mxu0
      %v1786 = vadd.f32 %v1661, %v1764
      %v1787 = vadd.f32 %v1666, %v1767
      %v1788 = vadd.f32 %v1671, %v1772
      %v1789 = vadd.f32 %v1676, %v1775
      %v1790 = vadd.f32 %v1681, %v1780
      %v1791 = vadd.f32 %v1686, %v1783
      %s1792 = scalar_lea.vmem %s3, 24
      %v1793 = vld [vmem:[%s1792] sm:$0xf]
      %v1794 = vld [vmem:[%s1792 + $0x4] sm:$0xf]
      %v1795 = vld [vmem:[%s1792 + $0x8] sm:$0xf]
      %v1796 = vld [vmem:[%s1792 + $0xc] sm:$0xf]
      %v1797 = vld [vmem:[%s1792 + $0x10] sm:$0xf]
      %v1798 = vld [vmem:[%s1792 + $0x14] sm:$0xf]
      %v1805 = vunpack.c.l.b16 %v1793
      %v1806 = vunpack.c.l.b16 %v1794
      %v1807 = vunpack.c.l.b16 %v1795
      %v1808 = vunpack.c.l.b16 %v1796
      %v1809 = vunpack.c.l.b16 %v1797
      %v1810 = vunpack.c.l.b16 %v1798
      %v1811 = vpack.c.b16 %v1806, %v1805
      %v1812 = vpack.c.b16 %v1808, %v1807
      %v1813 = vpack.c.b16 %v1810, %v1809
      %1820 = vrot.lane.b32.xlu0 %v1634, 127
      %v1821 = vpop.permute.xlu0 %1820
      %1822 = vrot.lane.b32.xlu0 %v1644, 127
      %v1823 = vpop.permute.xlu0 %1822
      %1824 = vrot.lane.b32.xlu0 %v1637, 127
      %v1825 = vpop.permute.xlu0 %1824
      %1826 = vrot.lane.b32.xlu0 %v1647, 127
      %v1827 = vpop.permute.xlu0 %1826
      %1828 = vrot.lane.b32.xlu0 %v1640, 127
      %v1829 = vpop.permute.xlu0 %1828
      %1830 = vrot.lane.b32.xlu0 %v1650, 127
      %v1831 = vpop.permute.xlu0 %1830
      %v1832 = vsel %vm559, %v1821, %v1823
      %v1833 = vsel %vm559, %v1825, %v1827
      %v1834 = vsel %vm559, %v1829, %v1831
      %v1839 = vsel %vm1719, %v1811, 0
      %v1842 = vsel %vm1719, %v1812, 0
      %v1845 = vsel %vm1719, %v1813, 0
      %1847 = vmatprep.subr.bf16.mxu0 0
      %1848 = vmatpush1.bf16.msra.mxu0 %v1832
      %1849 = vmatprep.subr.bf16.mxu0 0
      %1850 = vmatpush1.bf16.msra.mxu0 %v1833
      %1851 = vmatprep.subr.bf16.mxu0 0
      %1852 = vmatpush1.bf16.msra.mxu0 %v1834
      %1853 = vmatprep.subr.bf16.mxu0 0
      %1854 = vmatpush1.bf16.msra.mxu0 0
      %1855 = vmatprep.subr.bf16.mxu0 0
      %1856 = vmatpush1.bf16.msra.mxu0 0
      %1857 = vmatprep.subr.bf16.mxu0 0
      %1858 = vmatpush1.bf16.msra.mxu0 0
      %1859 = vmatprep.subr.bf16.mxu0 0
      %1860 = vmatpush1.bf16.msra.mxu0 0
      %1861 = vmatprep.subr.bf16.mxu0 0
      %1862 = vmatpush1.bf16.msra.mxu0 0
      %1863 = vmatprep.subr.bf16.mxu0 0
      %1864 = vmatpush1.bf16.msra.mxu0 0
      %1865 = vmatprep.subr.bf16.mxu0 0
      %1866 = vmatpush1.bf16.msra.mxu0 0
      %1867 = vmatprep.subr.bf16.mxu0 0
      %1868 = vmatpush1.bf16.msra.mxu0 0
      %1869 = vmatprep.subr.bf16.mxu0 0
      %1870 = vmatpush1.bf16.msra.mxu0 0
      %1871 = vmatprep.subr.bf16.mxu0 0
      %1872 = vmatpush1.bf16.msra.mxu0 0
      %1873 = vmatprep.subr.bf16.mxu0 0
      %1874 = vmatpush1.bf16.msra.mxu0 0
      %1875 = vmatprep.subr.bf16.mxu0 0
      %1876 = vmatpush1.bf16.msra.mxu0 0
      %1877 = vmatprep.subr.bf16.mxu0 0
      %1878 = vmatpush1.bf16.msra.mxu0 0
      %1879 = vmatprep.mubr.bf16.mxu0 0
      %1880 = vmatmul.mubr.bf16.gmra.mrb[0].mxu0 %v1839
      %v1881 = vpop.f32.mrb[0].mxu0
      %v1882 = vadd.f32 0.0, %v1881
      %v1883 = vpop.f32.mrb[0].mxu0
      %v1884 = vpop.f32.mrb[0].mxu0
      %v1885 = vadd.f32 0.0, %v1884
      %v1886 = vpop.f32.mrb[0].mxu0
      %1887 = vmatprep.mubr.bf16.mxu0 0
      %1888 = vmatmul.mubr.bf16.gmra.mrb[0].mxu0 %v1842
      %v1889 = vpop.f32.mrb[0].mxu0
      %v1890 = vadd.f32 0.0, %v1889
      %v1891 = vpop.f32.mrb[0].mxu0
      %v1892 = vpop.f32.mrb[0].mxu0
      %v1893 = vadd.f32 0.0, %v1892
      %v1894 = vpop.f32.mrb[0].mxu0
      %1895 = vmatprep.mubr.bf16.mxu0 0
      %1896 = vmatmul.mubr.bf16.gmra.mrb[0].mxu0 %v1845
      %v1897 = vpop.f32.mrb[0].mxu0
      %v1898 = vadd.f32 0.0, %v1897
      %v1899 = vpop.f32.mrb[0].mxu0
      %v1900 = vpop.f32.mrb[0].mxu0
      %v1901 = vadd.f32 0.0, %v1900
      %v1902 = vpop.f32.mrb[0].mxu0
      %1903 = vdwg.mxu0
      %v1904 = vadd.f32 %v1786, %v1882
      %v1905 = vadd.f32 %v1787, %v1885
      %v1906 = vadd.f32 %v1788, %v1890
      %v1907 = vadd.f32 %v1789, %v1893
      %v1908 = vadd.f32 %v1790, %v1898
      %v1909 = vadd.f32 %v1791, %v1901
      %vm1910 = vmpackc.low %vm346, %vm346
      %v1911 = vsel %vm1910, 65537, 0
      %v1912 = vlaneseq
      %v1913 = vshrl.u32 %v1912, 7
      %v1914 = vsub.s32 0, %v1913
      %v1915 = vrot.slane %v1911, %v1914
      %1916 = vrot.lane.b32.xlu0 %v1915, 2
      %v1917 = vpop.permute.xlu0 %1916
      %vm1918 = vcmp.ne.s16.totalorder %v1917, 0
      %v1919 = vsel %vm1918, %v1634, 0
      %v1920 = vsel %vm1918, %v1644, 0
      %v1921 = vsel %vm1918, %v1637, 0
      %v1922 = vsel %vm1918, %v1647, 0
      %v1923 = vsel %vm1918, %v1640, 0
      %v1924 = vsel %vm1918, %v1650, 0
      %s1925 = scalar_lea.vmem %s3, 48
      %v1926 = vld [vmem:[%s1925] sm:$0xf]
      %v1927 = vld [vmem:[%s1925 + $0x4] sm:$0xf]
      %v1928 = vld [vmem:[%s1925 + $0x8] sm:$0xf]
      %v1929 = vld [vmem:[%s1925 + $0xc] sm:$0xf]
      %v1930 = vld [vmem:[%s1925 + $0x10] sm:$0xf]
      %v1931 = vld [vmem:[%s1925 + $0x14] sm:$0xf]
      %v1938 = vunpack.c.l.b16 %v1926
      %v1939 = vunpack.c.l.b16 %v1927
      %v1940 = vunpack.c.l.b16 %v1928
      %v1941 = vunpack.c.l.b16 %v1929
      %v1942 = vunpack.c.l.b16 %v1930
      %v1943 = vunpack.c.l.b16 %v1931
      %v1944 = vpack.c.b16 %v1939, %v1938
      %v1945 = vpack.c.b16 %v1941, %v1940
      %v1946 = vpack.c.b16 %v1943, %v1942
      %1953 = vrot.lane.b32.xlu0 %v1919, 126
      %v1954 = vpop.permute.xlu0 %1953
      %1955 = vrot.lane.b32.xlu0 %v1920, 126
      %v1956 = vpop.permute.xlu0 %1955
      %1957 = vrot.lane.b32.xlu0 %v1921, 126
      %v1958 = vpop.permute.xlu0 %1957
      %1959 = vrot.lane.b32.xlu0 %v1922, 126
      %v1960 = vpop.permute.xlu0 %1959
      %1961 = vrot.lane.b32.xlu0 %v1923, 126
      %v1962 = vpop.permute.xlu0 %1961
      %1963 = vrot.lane.b32.xlu0 %v1924, 126
      %v1964 = vpop.permute.xlu0 %1963
      %v1965 = vsel %vm699, %v1954, %v1956
      %v1966 = vsel %vm699, %v1958, %v1960
      %v1967 = vsel %vm699, %v1962, %v1964
      %v1972 = vsel %vm1719, %v1944, 0
      %v1975 = vsel %vm1719, %v1945, 0
      %v1978 = vsel %vm1719, %v1946, 0
      %1980 = vmatprep.subr.bf16.mxu0 0
      %1981 = vmatpush1.bf16.msra.mxu0 %v1965
      %1982 = vmatprep.subr.bf16.mxu0 0
      %1983 = vmatpush1.bf16.msra.mxu0 %v1966
      %1984 = vmatprep.subr.bf16.mxu0 0
      %1985 = vmatpush1.bf16.msra.mxu0 %v1967
      %1986 = vmatprep.subr.bf16.mxu0 0
      %1987 = vmatpush1.bf16.msra.mxu0 0
      %1988 = vmatprep.subr.bf16.mxu0 0
      %1989 = vmatpush1.bf16.msra.mxu0 0
      %1990 = vmatprep.subr.bf16.mxu0 0
      %1991 = vmatpush1.bf16.msra.mxu0 0
      %1992 = vmatprep.subr.bf16.mxu0 0
      %1993 = vmatpush1.bf16.msra.mxu0 0
      %1994 = vmatprep.subr.bf16.mxu0 0
      %1995 = vmatpush1.bf16.msra.mxu0 0
      %1996 = vmatprep.subr.bf16.mxu0 0
      %1997 = vmatpush1.bf16.msra.mxu0 0
      %1998 = vmatprep.subr.bf16.mxu0 0
      %1999 = vmatpush1.bf16.msra.mxu0 0
      %2000 = vmatprep.subr.bf16.mxu0 0
      %2001 = vmatpush1.bf16.msra.mxu0 0
      %2002 = vmatprep.subr.bf16.mxu0 0
      %2003 = vmatpush1.bf16.msra.mxu0 0
      %2004 = vmatprep.subr.bf16.mxu0 0
      %2005 = vmatpush1.bf16.msra.mxu0 0
      %2006 = vmatprep.subr.bf16.mxu0 0
      %2007 = vmatpush1.bf16.msra.mxu0 0
      %2008 = vmatprep.subr.bf16.mxu0 0
      %2009 = vmatpush1.bf16.msra.mxu0 0
      %2010 = vmatprep.subr.bf16.mxu0 0
      %2011 = vmatpush1.bf16.msra.mxu0 0
      %2012 = vmatprep.mubr.bf16.mxu0 0
      %2013 = vmatmul.mubr.bf16.gmra.mrb[0].mxu0 %v1972
      %v2014 = vpop.f32.mrb[0].mxu0
      %v2015 = vadd.f32 0.0, %v2014
      %v2016 = vpop.f32.mrb[0].mxu0
      %v2017 = vpop.f32.mrb[0].mxu0
      %v2018 = vadd.f32 0.0, %v2017
      %v2019 = vpop.f32.mrb[0].mxu0
      %2020 = vmatprep.mubr.bf16.mxu0 0
      %2021 = vmatmul.mubr.bf16.gmra.mrb[0].mxu0 %v1975
      %v2022 = vpop.f32.mrb[0].mxu0
      %v2023 = vadd.f32 0.0, %v2022
      %v2024 = vpop.f32.mrb[0].mxu0
      %v2025 = vpop.f32.mrb[0].mxu0
      %v2026 = vadd.f32 0.0, %v2025
      %v2027 = vpop.f32.mrb[0].mxu0
      %2028 = vmatprep.mubr.bf16.mxu0 0
      %2029 = vmatmul.mubr.bf16.gmra.mrb[0].mxu0 %v1978
      %v2030 = vpop.f32.mrb[0].mxu0
      %v2031 = vadd.f32 0.0, %v2030
      %v2032 = vpop.f32.mrb[0].mxu0
      %v2033 = vpop.f32.mrb[0].mxu0
      %v2034 = vadd.f32 0.0, %v2033
      %v2035 = vpop.f32.mrb[0].mxu0
      %2036 = vdwg.mxu0
      %v2037 = vadd.f32 %v1904, %v2015
      %v2038 = vadd.f32 %v1905, %v2018
      %v2039 = vadd.f32 %v1906, %v2023
      %v2040 = vadd.f32 %v1907, %v2026
      %v2041 = vadd.f32 %v1908, %v2031
      %v2042 = vadd.f32 %v1909, %v2034
      %2043 = vrot.lane.b32.xlu0 %v1693, 16
      %v2044 = vpop.permute.xlu0 %2043
      %vm2045 = vcmp.ne.s16.totalorder %v2044, 0
      %v2046 = vsel %vm2045, %v1634, 0
      %v2047 = vsel %vm2045, %v1644, 0
      %v2048 = vsel %vm2045, %v1637, 0
      %v2049 = vsel %vm2045, %v1647, 0
      %v2050 = vsel %vm2045, %v1640, 0
      %v2051 = vsel %vm2045, %v1650, 0
      %s2052 = scalar_lea.vmem %s3, 72
      %v2053 = vld [vmem:[%s2052] sm:$0xf]
      %v2054 = vld [vmem:[%s2052 + $0x4] sm:$0xf]
      %v2055 = vld [vmem:[%s2052 + $0x8] sm:$0xf]
      %v2056 = vld [vmem:[%s2052 + $0xc] sm:$0xf]
      %v2057 = vld [vmem:[%s2052 + $0x10] sm:$0xf]
      %v2058 = vld [vmem:[%s2052 + $0x14] sm:$0xf]
      %v2065 = vunpack.c.l.b16 %v2053
      %v2066 = vunpack.c.l.b16 %v2054
      %v2067 = vunpack.c.l.b16 %v2055
      %v2068 = vunpack.c.l.b16 %v2056
      %v2069 = vunpack.c.l.b16 %v2057
      %v2070 = vunpack.c.l.b16 %v2058
      %v2071 = vpack.c.b16 %v2066, %v2065
      %v2072 = vpack.c.b16 %v2068, %v2067
      %v2073 = vpack.c.b16 %v2070, %v2069
      %2080 = vrot.lane.b32.xlu0 %v2046, 112
      %v2081 = vpop.permute.xlu0 %2080
      %2082 = vrot.lane.b32.xlu0 %v2047, 112
      %v2083 = vpop.permute.xlu0 %2082
      %2084 = vrot.lane.b32.xlu0 %v2048, 112
      %v2085 = vpop.permute.xlu0 %2084
      %2086 = vrot.lane.b32.xlu0 %v2049, 112
      %v2087 = vpop.permute.xlu0 %2086
      %2088 = vrot.lane.b32.xlu0 %v2050, 112
      %v2089 = vpop.permute.xlu0 %2088
      %2090 = vrot.lane.b32.xlu0 %v2051, 112
      %v2091 = vpop.permute.xlu0 %2090
      %v2092 = vsel %vm829, %v2081, %v2083
      %v2093 = vsel %vm829, %v2085, %v2087
      %v2094 = vsel %vm829, %v2089, %v2091
      %v2099 = vsel %vm1719, %v2071, 0
      %v2102 = vsel %vm1719, %v2072, 0
      %v2105 = vsel %vm1719, %v2073, 0
      %2107 = vmatprep.subr.bf16.mxu0 0
      %2108 = vmatpush1.bf16.msra.mxu0 %v2092
      %2109 = vmatprep.subr.bf16.mxu0 0
      %2110 = vmatpush1.bf16.msra.mxu0 %v2093
      %2111 = vmatprep.subr.bf16.mxu0 0
      %2112 = vmatpush1.bf16.msra.mxu0 %v2094
      %2113 = vmatprep.subr.bf16.mxu0 0
      %2114 = vmatpush1.bf16.msra.mxu0 0
      %2115 = vmatprep.subr.bf16.mxu0 0
      %2116 = vmatpush1.bf16.msra.mxu0 0
      %2117 = vmatprep.subr.bf16.mxu0 0
      %2118 = vmatpush1.bf16.msra.mxu0 0
      %2119 = vmatprep.subr.bf16.mxu0 0
      %2120 = vmatpush1.bf16.msra.mxu0 0
      %2121 = vmatprep.subr.bf16.mxu0 0
      %2122 = vmatpush1.bf16.msra.mxu0 0
      %2123 = vmatprep.subr.bf16.mxu0 0
      %2124 = vmatpush1.bf16.msra.mxu0 0
      %2125 = vmatprep.subr.bf16.mxu0 0
      %2126 = vmatpush1.bf16.msra.mxu0 0
      %2127 = vmatprep.subr.bf16.mxu0 0
      %2128 = vmatpush1.bf16.msra.mxu0 0
      %2129 = vmatprep.subr.bf16.mxu0 0
      %2130 = vmatpush1.bf16.msra.mxu0 0
      %2131 = vmatprep.subr.bf16.mxu0 0
      %2132 = vmatpush1.bf16.msra.mxu0 0
      %2133 = vmatprep.subr.bf16.mxu0 0
      %2134 = vmatpush1.bf16.msra.mxu0 0
      %2135 = vmatprep.subr.bf16.mxu0 0
      %2136 = vmatpush1.bf16.msra.mxu0 0
      %2137 = vmatprep.subr.bf16.mxu0 0
      %2138 = vmatpush1.bf16.msra.mxu0 0
      %2139 = vmatprep.mubr.bf16.mxu0 0
      %2140 = vmatmul.mubr.bf16.gmra.mrb[0].mxu0 %v2099
      %v2141 = vpop.f32.mrb[0].mxu0
      %v2142 = vadd.f32 0.0, %v2141
      %v2143 = vpop.f32.mrb[0].mxu0
      %v2144 = vpop.f32.mrb[0].mxu0
      %v2145 = vadd.f32 0.0, %v2144
      %v2146 = vpop.f32.mrb[0].mxu0
      %2147 = vmatprep.mubr.bf16.mxu0 0
      %2148 = vmatmul.mubr.bf16.gmra.mrb[0].mxu0 %v2102
      %v2149 = vpop.f32.mrb[0].mxu0
      %v2150 = vadd.f32 0.0, %v2149
      %v2151 = vpop.f32.mrb[0].mxu0
      %v2152 = vpop.f32.mrb[0].mxu0
      %v2153 = vadd.f32 0.0, %v2152
      %v2154 = vpop.f32.mrb[0].mxu0
      %2155 = vmatprep.mubr.bf16.mxu0 0
      %2156 = vmatmul.mubr.bf16.gmra.mrb[0].mxu0 %v2105
      %v2157 = vpop.f32.mrb[0].mxu0
      %v2158 = vadd.f32 0.0, %v2157
      %v2159 = vpop.f32.mrb[0].mxu0
      %v2160 = vpop.f32.mrb[0].mxu0
      %v2161 = vadd.f32 0.0, %v2160
      %v2162 = vpop.f32.mrb[0].mxu0
      %2163 = vdwg.mxu0
      %v2164 = vadd.f32 %v2037, %v2142
      %v2165 = vadd.f32 %v2038, %v2145
      %v2166 = vadd.f32 %v2039, %v2150
      %v2167 = vadd.f32 %v2040, %v2153
      %v2168 = vadd.f32 %v2041, %v2158
      %v2169 = vadd.f32 %v2042, %v2161
      %s2170 = scalar_lea.vmem %s3, 96
      %v2171 = vld [vmem:[%s2170] sm:$0xf]
      %v2172 = vld [vmem:[%s2170 + $0x4] sm:$0xf]
      %v2173 = vld [vmem:[%s2170 + $0x8] sm:$0xf]
      %v2174 = vld [vmem:[%s2170 + $0xc] sm:$0xf]
      %v2175 = vld [vmem:[%s2170 + $0x10] sm:$0xf]
      %v2176 = vld [vmem:[%s2170 + $0x14] sm:$0xf]
      %v2183 = vunpack.c.l.b16 %v2171
      %v2184 = vunpack.c.l.b16 %v2172
      %v2185 = vunpack.c.l.b16 %v2173
      %v2186 = vunpack.c.l.b16 %v2174
      %v2187 = vunpack.c.l.b16 %v2175
      %v2188 = vunpack.c.l.b16 %v2176
      %v2189 = vpack.c.b16 %v2184, %v2183
      %v2190 = vpack.c.b16 %v2186, %v2185
      %v2191 = vpack.c.b16 %v2188, %v2187
      %2192 = vrot.lane.b32.xlu0 %v1634, 111
      %v2193 = vpop.permute.xlu0 %2192
      %2194 = vrot.lane.b32.xlu0 %v1644, 111
      %v2195 = vpop.permute.xlu0 %2194
      %2196 = vrot.lane.b32.xlu0 %v1637, 111
      %v2197 = vpop.permute.xlu0 %2196
      %2198 = vrot.lane.b32.xlu0 %v1647, 111
      %v2199 = vpop.permute.xlu0 %2198
      %2200 = vrot.lane.b32.xlu0 %v1640, 111
      %v2201 = vpop.permute.xlu0 %2200
      %2202 = vrot.lane.b32.xlu0 %v1650, 111
      %v2203 = vpop.permute.xlu0 %2202
      %v2204 = vsel %vm947, %v2193, %v2195
      %v2205 = vsel %vm947, %v2197, %v2199
      %v2206 = vsel %vm947, %v2201, %v2203
      %v2211 = vsel %vm1719, %v2189, 0
      %v2214 = vsel %vm1719, %v2190, 0
      %v2217 = vsel %vm1719, %v2191, 0
      %2219 = vmatprep.subr.bf16.mxu0 0
      %2220 = vmatpush1.bf16.msra.mxu0 %v2204
      %2221 = vmatprep.subr.bf16.mxu0 0
      %2222 = vmatpush1.bf16.msra.mxu0 %v2205
      %2223 = vmatprep.subr.bf16.mxu0 0
      %2224 = vmatpush1.bf16.msra.mxu0 %v2206
      %2225 = vmatprep.subr.bf16.mxu0 0
      %2226 = vmatpush1.bf16.msra.mxu0 0
      %2227 = vmatprep.subr.bf16.mxu0 0
      %2228 = vmatpush1.bf16.msra.mxu0 0
      %2229 = vmatprep.subr.bf16.mxu0 0
      %2230 = vmatpush1.bf16.msra.mxu0 0
      %2231 = vmatprep.subr.bf16.mxu0 0
      %2232 = vmatpush1.bf16.msra.mxu0 0
      %2233 = vmatprep.subr.bf16.mxu0 0
      %2234 = vmatpush1.bf16.msra.mxu0 0
      %2235 = vmatprep.subr.bf16.mxu0 0
      %2236 = vmatpush1.bf16.msra.mxu0 0
      %2237 = vmatprep.subr.bf16.mxu0 0
      %2238 = vmatpush1.bf16.msra.mxu0 0
      %2239 = vmatprep.subr.bf16.mxu0 0
      %2240 = vmatpush1.bf16.msra.mxu0 0
      %2241 = vmatprep.subr.bf16.mxu0 0
      %2242 = vmatpush1.bf16.msra.mxu0 0
      %2243 = vmatprep.subr.bf16.mxu0 0
      %2244 = vmatpush1.bf16.msra.mxu0 0
      %2245 = vmatprep.subr.bf16.mxu0 0
      %2246 = vmatpush1.bf16.msra.mxu0 0
      %2247 = vmatprep.subr.bf16.mxu0 0
      %2248 = vmatpush1.bf16.msra.mxu0 0
      %2249 = vmatprep.subr.bf16.mxu0 0
      %2250 = vmatpush1.bf16.msra.mxu0 0
      %2251 = vmatprep.mubr.bf16.mxu0 0
      %2252 = vmatmul.mubr.bf16.gmra.mrb[0].mxu0 %v2211
      %v2253 = vpop.f32.mrb[0].mxu0
      %v2254 = vadd.f32 0.0, %v2253
      %v2255 = vpop.f32.mrb[0].mxu0
      %v2256 = vpop.f32.mrb[0].mxu0
      %v2257 = vadd.f32 0.0, %v2256
      %v2258 = vpop.f32.mrb[0].mxu0
      %2259 = vmatprep.mubr.bf16.mxu0 0
      %2260 = vmatmul.mubr.bf16.gmra.mrb[0].mxu0 %v2214
      %v2261 = vpop.f32.mrb[0].mxu0
      %v2262 = vadd.f32 0.0, %v2261
      %v2263 = vpop.f32.mrb[0].mxu0
      %v2264 = vpop.f32.mrb[0].mxu0
      %v2265 = vadd.f32 0.0, %v2264
      %v2266 = vpop.f32.mrb[0].mxu0
      %2267 = vmatprep.mubr.bf16.mxu0 0
      %2268 = vmatmul.mubr.bf16.gmra.mrb[0].mxu0 %v2217
      %v2269 = vpop.f32.mrb[0].mxu0
      %v2270 = vadd.f32 0.0, %v2269
      %v2271 = vpop.f32.mrb[0].mxu0
      %v2272 = vpop.f32.mrb[0].mxu0
      %v2273 = vadd.f32 0.0, %v2272
      %v2274 = vpop.f32.mrb[0].mxu0
      %2275 = vdwg.mxu0
      %v2276 = vadd.f32 %v2164, %v2254
      %v2277 = vadd.f32 %v2165, %v2257
      %v2278 = vadd.f32 %v2166, %v2262
      %v2279 = vadd.f32 %v2167, %v2265
      %v2280 = vadd.f32 %v2168, %v2270
      %v2281 = vadd.f32 %v2169, %v2273
      %2282 = vrot.lane.b32.xlu0 %v1915, 18
      %v2283 = vpop.permute.xlu0 %2282
      %vm2284 = vcmp.ne.s16.totalorder %v2283, 0
      %v2285 = vsel %vm2284, %v1634, 0
      %v2286 = vsel %vm2284, %v1644, 0
      %v2287 = vsel %vm2284, %v1637, 0
      %v2288 = vsel %vm2284, %v1647, 0
      %v2289 = vsel %vm2284, %v1640, 0
      %v2290 = vsel %vm2284, %v1650, 0
      %s2291 = scalar_lea.vmem %s3, 120
      %v2292 = vld [vmem:[%s2291] sm:$0xf]
      %v2293 = vld [vmem:[%s2291 + $0x4] sm:$0xf]
      %v2294 = vld [vmem:[%s2291 + $0x8] sm:$0xf]
      %v2295 = vld [vmem:[%s2291 + $0xc] sm:$0xf]
      %v2296 = vld [vmem:[%s2291 + $0x10] sm:$0xf]
      %v2297 = vld [vmem:[%s2291 + $0x14] sm:$0xf]
      %v2304 = vunpack.c.l.b16 %v2292
      %v2305 = vunpack.c.l.b16 %v2293
      %v2306 = vunpack.c.l.b16 %v2294
      %v2307 = vunpack.c.l.b16 %v2295
      %v2308 = vunpack.c.l.b16 %v2296
      %v2309 = vunpack.c.l.b16 %v2297
      %v2310 = vpack.c.b16 %v2305, %v2304
      %v2311 = vpack.c.b16 %v2307, %v2306
      %v2312 = vpack.c.b16 %v2309, %v2308
      %2319 = vrot.lane.b32.xlu0 %v2285, 110
      %v2320 = vpop.permute.xlu0 %2319
      %2321 = vrot.lane.b32.xlu0 %v2286, 110
      %v2322 = vpop.permute.xlu0 %2321
      %2323 = vrot.lane.b32.xlu0 %v2287, 110
      %v2324 = vpop.permute.xlu0 %2323
      %2325 = vrot.lane.b32.xlu0 %v2288, 110
      %v2326 = vpop.permute.xlu0 %2325
      %2327 = vrot.lane.b32.xlu0 %v2289, 110
      %v2328 = vpop.permute.xlu0 %2327
      %2329 = vrot.lane.b32.xlu0 %v2290, 110
      %v2330 = vpop.permute.xlu0 %2329
      %v2331 = vsel %vm1077, %v2320, %v2322
      %v2332 = vsel %vm1077, %v2324, %v2326
      %v2333 = vsel %vm1077, %v2328, %v2330
      %v2338 = vsel %vm1719, %v2310, 0
      %v2341 = vsel %vm1719, %v2311, 0
      %v2344 = vsel %vm1719, %v2312, 0
      %2346 = vmatprep.subr.bf16.mxu0 0
      %2347 = vmatpush1.bf16.msra.mxu0 %v2331
      %2348 = vmatprep.subr.bf16.mxu0 0
      %2349 = vmatpush1.bf16.msra.mxu0 %v2332
      %2350 = vmatprep.subr.bf16.mxu0 0
      %2351 = vmatpush1.bf16.msra.mxu0 %v2333
      %2352 = vmatprep.subr.bf16.mxu0 0
      %2353 = vmatpush1.bf16.msra.mxu0 0
      %2354 = vmatprep.subr.bf16.mxu0 0
      %2355 = vmatpush1.bf16.msra.mxu0 0
      %2356 = vmatprep.subr.bf16.mxu0 0
      %2357 = vmatpush1.bf16.msra.mxu0 0
      %2358 = vmatprep.subr.bf16.mxu0 0
      %2359 = vmatpush1.bf16.msra.mxu0 0
      %2360 = vmatprep.subr.bf16.mxu0 0
      %2361 = vmatpush1.bf16.msra.mxu0 0
      %2362 = vmatprep.subr.bf16.mxu0 0
      %2363 = vmatpush1.bf16.msra.mxu0 0
      %2364 = vmatprep.subr.bf16.mxu0 0
      %2365 = vmatpush1.bf16.msra.mxu0 0
      %2366 = vmatprep.subr.bf16.mxu0 0
      %2367 = vmatpush1.bf16.msra.mxu0 0
      %2368 = vmatprep.subr.bf16.mxu0 0
      %2369 = vmatpush1.bf16.msra.mxu0 0
      %2370 = vmatprep.subr.bf16.mxu0 0
      %2371 = vmatpush1.bf16.msra.mxu0 0
      %2372 = vmatprep.subr.bf16.mxu0 0
      %2373 = vmatpush1.bf16.msra.mxu0 0
      %2374 = vmatprep.subr.bf16.mxu0 0
      %2375 = vmatpush1.bf16.msra.mxu0 0
      %2376 = vmatprep.subr.bf16.mxu0 0
      %2377 = vmatpush1.bf16.msra.mxu0 0
      %2378 = vmatprep.mubr.bf16.mxu0 0
      %2379 = vmatmul.mubr.bf16.gmra.mrb[0].mxu0 %v2338
      %v2380 = vpop.f32.mrb[0].mxu0
      %v2381 = vadd.f32 0.0, %v2380
      %v2382 = vpop.f32.mrb[0].mxu0
      %v2383 = vpop.f32.mrb[0].mxu0
      %v2384 = vadd.f32 0.0, %v2383
      %v2385 = vpop.f32.mrb[0].mxu0
      %2386 = vmatprep.mubr.bf16.mxu0 0
      %2387 = vmatmul.mubr.bf16.gmra.mrb[0].mxu0 %v2341
      %v2388 = vpop.f32.mrb[0].mxu0
      %v2389 = vadd.f32 0.0, %v2388
      %v2390 = vpop.f32.mrb[0].mxu0
      %v2391 = vpop.f32.mrb[0].mxu0
      %v2392 = vadd.f32 0.0, %v2391
      %v2393 = vpop.f32.mrb[0].mxu0
      %2394 = vmatprep.mubr.bf16.mxu0 0
      %2395 = vmatmul.mubr.bf16.gmra.mrb[0].mxu0 %v2344
      %v2396 = vpop.f32.mrb[0].mxu0
      %v2397 = vadd.f32 0.0, %v2396
      %v2398 = vpop.f32.mrb[0].mxu0
      %v2399 = vpop.f32.mrb[0].mxu0
      %v2400 = vadd.f32 0.0, %v2399
      %v2401 = vpop.f32.mrb[0].mxu0
      %2402 = vdwg.mxu0
      %v2403 = vadd.f32 %v2276, %v2381
      %v2404 = vadd.f32 %v2277, %v2384
      %v2405 = vadd.f32 %v2278, %v2389
      %v2406 = vadd.f32 %v2279, %v2392
      %v2407 = vadd.f32 %v2280, %v2397
      %v2408 = vadd.f32 %v2281, %v2400
      %2409 = vrot.lane.b32.xlu0 %v1693, 32
      %v2410 = vpop.permute.xlu0 %2409
      %vm2411 = vcmp.ne.s16.totalorder %v2410, 0
      %v2412 = vsel %vm2411, %v1634, 0
      %v2413 = vsel %vm2411, %v1644, 0
      %v2414 = vsel %vm2411, %v1637, 0
      %v2415 = vsel %vm2411, %v1647, 0
      %v2416 = vsel %vm2411, %v1640, 0
      %v2417 = vsel %vm2411, %v1650, 0
      %s2418 = scalar_lea.vmem %s3, 144
      %v2419 = vld [vmem:[%s2418] sm:$0xf]
      %v2420 = vld [vmem:[%s2418 + $0x4] sm:$0xf]
      %v2421 = vld [vmem:[%s2418 + $0x8] sm:$0xf]
      %v2422 = vld [vmem:[%s2418 + $0xc] sm:$0xf]
      %v2423 = vld [vmem:[%s2418 + $0x10] sm:$0xf]
      %v2424 = vld [vmem:[%s2418 + $0x14] sm:$0xf]
      %v2431 = vunpack.c.l.b16 %v2419
      %v2432 = vunpack.c.l.b16 %v2420
      %v2433 = vunpack.c.l.b16 %v2421
      %v2434 = vunpack.c.l.b16 %v2422
      %v2435 = vunpack.c.l.b16 %v2423
      %v2436 = vunpack.c.l.b16 %v2424
      %v2437 = vpack.c.b16 %v2432, %v2431
      %v2438 = vpack.c.b16 %v2434, %v2433
      %v2439 = vpack.c.b16 %v2436, %v2435
      %2446 = vrot.lane.b32.xlu0 %v2412, 96
      %v2447 = vpop.permute.xlu0 %2446
      %2448 = vrot.lane.b32.xlu0 %v2413, 96
      %v2449 = vpop.permute.xlu0 %2448
      %2450 = vrot.lane.b32.xlu0 %v2414, 96
      %v2451 = vpop.permute.xlu0 %2450
      %2452 = vrot.lane.b32.xlu0 %v2415, 96
      %v2453 = vpop.permute.xlu0 %2452
      %2454 = vrot.lane.b32.xlu0 %v2416, 96
      %v2455 = vpop.permute.xlu0 %2454
      %2456 = vrot.lane.b32.xlu0 %v2417, 96
      %v2457 = vpop.permute.xlu0 %2456
      %v2458 = vsel %vm1207, %v2447, %v2449
      %v2459 = vsel %vm1207, %v2451, %v2453
      %v2460 = vsel %vm1207, %v2455, %v2457
      %v2465 = vsel %vm1719, %v2437, 0
      %v2468 = vsel %vm1719, %v2438, 0
      %v2471 = vsel %vm1719, %v2439, 0
      %2473 = vmatprep.subr.bf16.mxu0 0
      %2474 = vmatpush1.bf16.msra.mxu0 %v2458
      %2475 = vmatprep.subr.bf16.mxu0 0
      %2476 = vmatpush1.bf16.msra.mxu0 %v2459
      %2477 = vmatprep.subr.bf16.mxu0 0
      %2478 = vmatpush1.bf16.msra.mxu0 %v2460
      %2479 = vmatprep.subr.bf16.mxu0 0
      %2480 = vmatpush1.bf16.msra.mxu0 0
      %2481 = vmatprep.subr.bf16.mxu0 0
      %2482 = vmatpush1.bf16.msra.mxu0 0
      %2483 = vmatprep.subr.bf16.mxu0 0
      %2484 = vmatpush1.bf16.msra.mxu0 0
      %2485 = vmatprep.subr.bf16.mxu0 0
      %2486 = vmatpush1.bf16.msra.mxu0 0
      %2487 = vmatprep.subr.bf16.mxu0 0
      %2488 = vmatpush1.bf16.msra.mxu0 0
      %2489 = vmatprep.subr.bf16.mxu0 0
      %2490 = vmatpush1.bf16.msra.mxu0 0
      %2491 = vmatprep.subr.bf16.mxu0 0
      %2492 = vmatpush1.bf16.msra.mxu0 0
      %2493 = vmatprep.subr.bf16.mxu0 0
      %2494 = vmatpush1.bf16.msra.mxu0 0
      %2495 = vmatprep.subr.bf16.mxu0 0
      %2496 = vmatpush1.bf16.msra.mxu0 0
      %2497 = vmatprep.subr.bf16.mxu0 0
      %2498 = vmatpush1.bf16.msra.mxu0 0
      %2499 = vmatprep.subr.bf16.mxu0 0
      %2500 = vmatpush1.bf16.msra.mxu0 0
      %2501 = vmatprep.subr.bf16.mxu0 0
      %2502 = vmatpush1.bf16.msra.mxu0 0
      %2503 = vmatprep.subr.bf16.mxu0 0
      %2504 = vmatpush1.bf16.msra.mxu0 0
      %2505 = vmatprep.mubr.bf16.mxu0 0
      %2506 = vmatmul.mubr.bf16.gmra.mrb[0].mxu0 %v2465
      %v2507 = vpop.f32.mrb[0].mxu0
      %v2508 = vadd.f32 0.0, %v2507
      %v2509 = vpop.f32.mrb[0].mxu0
      %v2510 = vpop.f32.mrb[0].mxu0
      %v2511 = vadd.f32 0.0, %v2510
      %v2512 = vpop.f32.mrb[0].mxu0
      %2513 = vmatprep.mubr.bf16.mxu0 0
      %2514 = vmatmul.mubr.bf16.gmra.mrb[0].mxu0 %v2468
      %v2515 = vpop.f32.mrb[0].mxu0
      %v2516 = vadd.f32 0.0, %v2515
      %v2517 = vpop.f32.mrb[0].mxu0
      %v2518 = vpop.f32.mrb[0].mxu0
      %v2519 = vadd.f32 0.0, %v2518
      %v2520 = vpop.f32.mrb[0].mxu0
      %2521 = vmatprep.mubr.bf16.mxu0 0
      %2522 = vmatmul.mubr.bf16.gmra.mrb[0].mxu0 %v2471
      %v2523 = vpop.f32.mrb[0].mxu0
      %v2524 = vadd.f32 0.0, %v2523
      %v2525 = vpop.f32.mrb[0].mxu0
      %v2526 = vpop.f32.mrb[0].mxu0
      %v2527 = vadd.f32 0.0, %v2526
      %v2528 = vpop.f32.mrb[0].mxu0
      %2529 = vdwg.mxu0
      %v2530 = vadd.f32 %v2403, %v2508
      %v2531 = vadd.f32 %v2404, %v2511
      %v2532 = vadd.f32 %v2405, %v2516
      %v2533 = vadd.f32 %v2406, %v2519
      %v2534 = vadd.f32 %v2407, %v2524
      %v2535 = vadd.f32 %v2408, %v2527
      %s2536 = scalar_lea.vmem %s3, 168
      %v2537 = vld [vmem:[%s2536] sm:$0xf]
      %v2538 = vld [vmem:[%s2536 + $0x4] sm:$0xf]
      %v2539 = vld [vmem:[%s2536 + $0x8] sm:$0xf]
      %v2540 = vld [vmem:[%s2536 + $0xc] sm:$0xf]
      %v2541 = vld [vmem:[%s2536 + $0x10] sm:$0xf]
      %v2542 = vld [vmem:[%s2536 + $0x14] sm:$0xf]
      %v2549 = vunpack.c.l.b16 %v2537
      %v2550 = vunpack.c.l.b16 %v2538
      %v2551 = vunpack.c.l.b16 %v2539
      %v2552 = vunpack.c.l.b16 %v2540
      %v2553 = vunpack.c.l.b16 %v2541
      %v2554 = vunpack.c.l.b16 %v2542
      %v2555 = vpack.c.b16 %v2550, %v2549
      %v2556 = vpack.c.b16 %v2552, %v2551
      %v2557 = vpack.c.b16 %v2554, %v2553
      %2558 = vrot.lane.b32.xlu0 %v1634, 95
      %v2559 = vpop.permute.xlu0 %2558
      %2560 = vrot.lane.b32.xlu0 %v1644, 95
      %v2561 = vpop.permute.xlu0 %2560
      %2562 = vrot.lane.b32.xlu0 %v1637, 95
      %v2563 = vpop.permute.xlu0 %2562
      %2564 = vrot.lane.b32.xlu0 %v1647, 95
      %v2565 = vpop.permute.xlu0 %2564
      %2566 = vrot.lane.b32.xlu0 %v1640, 95
      %v2567 = vpop.permute.xlu0 %2566
      %2568 = vrot.lane.b32.xlu0 %v1650, 95
      %v2569 = vpop.permute.xlu0 %2568
      %v2570 = vsel %vm1325, %v2559, %v2561
      %v2571 = vsel %vm1325, %v2563, %v2565
      %v2572 = vsel %vm1325, %v2567, %v2569
      %v2577 = vsel %vm1719, %v2555, 0
      %v2580 = vsel %vm1719, %v2556, 0
      %v2583 = vsel %vm1719, %v2557, 0
      %2585 = vmatprep.subr.bf16.mxu0 0
      %2586 = vmatpush1.bf16.msra.mxu0 %v2570
      %2587 = vmatprep.subr.bf16.mxu0 0
      %2588 = vmatpush1.bf16.msra.mxu0 %v2571
      %2589 = vmatprep.subr.bf16.mxu0 0
      %2590 = vmatpush1.bf16.msra.mxu0 %v2572
      %2591 = vmatprep.subr.bf16.mxu0 0
      %2592 = vmatpush1.bf16.msra.mxu0 0
      %2593 = vmatprep.subr.bf16.mxu0 0
      %2594 = vmatpush1.bf16.msra.mxu0 0
      %2595 = vmatprep.subr.bf16.mxu0 0
      %2596 = vmatpush1.bf16.msra.mxu0 0
      %2597 = vmatprep.subr.bf16.mxu0 0
      %2598 = vmatpush1.bf16.msra.mxu0 0
      %2599 = vmatprep.subr.bf16.mxu0 0
      %2600 = vmatpush1.bf16.msra.mxu0 0
      %2601 = vmatprep.subr.bf16.mxu0 0
      %2602 = vmatpush1.bf16.msra.mxu0 0
      %2603 = vmatprep.subr.bf16.mxu0 0
      %2604 = vmatpush1.bf16.msra.mxu0 0
      %2605 = vmatprep.subr.bf16.mxu0 0
      %2606 = vmatpush1.bf16.msra.mxu0 0
      %2607 = vmatprep.subr.bf16.mxu0 0
      %2608 = vmatpush1.bf16.msra.mxu0 0
      %2609 = vmatprep.subr.bf16.mxu0 0
      %2610 = vmatpush1.bf16.msra.mxu0 0
      %2611 = vmatprep.subr.bf16.mxu0 0
      %2612 = vmatpush1.bf16.msra.mxu0 0
      %2613 = vmatprep.subr.bf16.mxu0 0
      %2614 = vmatpush1.bf16.msra.mxu0 0
      %2615 = vmatprep.subr.bf16.mxu0 0
      %2616 = vmatpush1.bf16.msra.mxu0 0
      %2617 = vmatprep.mubr.bf16.mxu0 0
      %2618 = vmatmul.mubr.bf16.gmra.mrb[0].mxu0 %v2577
      %v2619 = vpop.f32.mrb[0].mxu0
      %v2620 = vadd.f32 0.0, %v2619
      %v2621 = vpop.f32.mrb[0].mxu0
      %v2622 = vpop.f32.mrb[0].mxu0
      %v2623 = vadd.f32 0.0, %v2622
      %v2624 = vpop.f32.mrb[0].mxu0
      %2625 = vmatprep.mubr.bf16.mxu0 0
      %2626 = vmatmul.mubr.bf16.gmra.mrb[0].mxu0 %v2580
      %v2627 = vpop.f32.mrb[0].mxu0
      %v2628 = vadd.f32 0.0, %v2627
      %v2629 = vpop.f32.mrb[0].mxu0
      %v2630 = vpop.f32.mrb[0].mxu0
      %v2631 = vadd.f32 0.0, %v2630
      %v2632 = vpop.f32.mrb[0].mxu0
      %2633 = vmatprep.mubr.bf16.mxu0 0
      %2634 = vmatmul.mubr.bf16.gmra.mrb[0].mxu0 %v2583
      %v2635 = vpop.f32.mrb[0].mxu0
      %v2636 = vadd.f32 0.0, %v2635
      %v2637 = vpop.f32.mrb[0].mxu0
      %v2638 = vpop.f32.mrb[0].mxu0
      %v2639 = vadd.f32 0.0, %v2638
      %v2640 = vpop.f32.mrb[0].mxu0
      %2641 = vdwg.mxu0
      %v2642 = vadd.f32 %v2530, %v2620
      %v2643 = vadd.f32 %v2531, %v2623
      %v2644 = vadd.f32 %v2532, %v2628
      %v2645 = vadd.f32 %v2533, %v2631
      %v2646 = vadd.f32 %v2534, %v2636
      %v2647 = vadd.f32 %v2535, %v2639
      %2648 = vrot.lane.b32.xlu0 %v1915, 34
      %v2649 = vpop.permute.xlu0 %2648
      %vm2650 = vcmp.ne.s16.totalorder %v2649, 0
      %v2651 = vsel %vm2650, %v1634, 0
      %v2652 = vsel %vm2650, %v1644, 0
      %v2653 = vsel %vm2650, %v1637, 0
      %v2654 = vsel %vm2650, %v1647, 0
      %v2655 = vsel %vm2650, %v1640, 0
      %v2656 = vsel %vm2650, %v1650, 0
      %s2657 = scalar_lea.vmem %s3, 192
      %v2658 = vld [vmem:[%s2657] sm:$0xf]
      %v2659 = vld [vmem:[%s2657 + $0x4] sm:$0xf]
      %v2660 = vld [vmem:[%s2657 + $0x8] sm:$0xf]
      %v2661 = vld [vmem:[%s2657 + $0xc] sm:$0xf]
      %v2662 = vld [vmem:[%s2657 + $0x10] sm:$0xf]
      %v2663 = vld [vmem:[%s2657 + $0x14] sm:$0xf]
      %v2670 = vunpack.c.l.b16 %v2658
      %v2671 = vunpack.c.l.b16 %v2659
      %v2672 = vunpack.c.l.b16 %v2660
      %v2673 = vunpack.c.l.b16 %v2661
      %v2674 = vunpack.c.l.b16 %v2662
      %v2675 = vunpack.c.l.b16 %v2663
      %v2676 = vpack.c.b16 %v2671, %v2670
      %v2677 = vpack.c.b16 %v2673, %v2672
      %v2678 = vpack.c.b16 %v2675, %v2674
      %2685 = vrot.lane.b32.xlu0 %v2651, 94
      %v2686 = vpop.permute.xlu0 %2685
      %2687 = vrot.lane.b32.xlu0 %v2652, 94
      %v2688 = vpop.permute.xlu0 %2687
      %2689 = vrot.lane.b32.xlu0 %v2653, 94
      %v2690 = vpop.permute.xlu0 %2689
      %2691 = vrot.lane.b32.xlu0 %v2654, 94
      %v2692 = vpop.permute.xlu0 %2691
      %2693 = vrot.lane.b32.xlu0 %v2655, 94
      %v2694 = vpop.permute.xlu0 %2693
      %2695 = vrot.lane.b32.xlu0 %v2656, 94
      %v2696 = vpop.permute.xlu0 %2695
      %v2697 = vsel %vm1455, %v2686, %v2688
      %v2698 = vsel %vm1455, %v2690, %v2692
      %v2699 = vsel %vm1455, %v2694, %v2696
      %v2704 = vsel %vm1719, %v2676, 0
      %v2707 = vsel %vm1719, %v2677, 0
      %v2710 = vsel %vm1719, %v2678, 0
      %2712 = vmatprep.subr.bf16.mxu0 0
      %2713 = vmatpush1.bf16.msra.mxu0 %v2697
      %2714 = vmatprep.subr.bf16.mxu0 0
      %2715 = vmatpush1.bf16.msra.mxu0 %v2698
      %2716 = vmatprep.subr.bf16.mxu0 0
      %2717 = vmatpush1.bf16.msra.mxu0 %v2699
      %2718 = vmatprep.subr.bf16.mxu0 0
      %2719 = vmatpush1.bf16.msra.mxu0 0
      %2720 = vmatprep.subr.bf16.mxu0 0
      %2721 = vmatpush1.bf16.msra.mxu0 0
      %2722 = vmatprep.subr.bf16.mxu0 0
      %2723 = vmatpush1.bf16.msra.mxu0 0
      %2724 = vmatprep.subr.bf16.mxu0 0
      %2725 = vmatpush1.bf16.msra.mxu0 0
      %2726 = vmatprep.subr.bf16.mxu0 0
      %2727 = vmatpush1.bf16.msra.mxu0 0
      %2728 = vmatprep.subr.bf16.mxu0 0
      %2729 = vmatpush1.bf16.msra.mxu0 0
      %2730 = vmatprep.subr.bf16.mxu0 0
      %2731 = vmatpush1.bf16.msra.mxu0 0
      %2732 = vmatprep.subr.bf16.mxu0 0
      %2733 = vmatpush1.bf16.msra.mxu0 0
      %2734 = vmatprep.subr.bf16.mxu0 0
      %2735 = vmatpush1.bf16.msra.mxu0 0
      %2736 = vmatprep.subr.bf16.mxu0 0
      %2737 = vmatpush1.bf16.msra.mxu0 0
      %2738 = vmatprep.subr.bf16.mxu0 0
      %2739 = vmatpush1.bf16.msra.mxu0 0
      %2740 = vmatprep.subr.bf16.mxu0 0
      %2741 = vmatpush1.bf16.msra.mxu0 0
      %2742 = vmatprep.subr.bf16.mxu0 0
      %2743 = vmatpush1.bf16.msra.mxu0 0
      %2744 = vmatprep.mubr.bf16.mxu0 0
      %2745 = vmatmul.mubr.bf16.gmra.mrb[0].mxu0 %v2704
      %v2746 = vpop.f32.mrb[0].mxu0
      %v2747 = vadd.f32 0.0, %v2746
      %v2748 = vpop.f32.mrb[0].mxu0
      %v2749 = vpop.f32.mrb[0].mxu0
      %v2750 = vadd.f32 0.0, %v2749
      %v2751 = vpop.f32.mrb[0].mxu0
      %2752 = vmatprep.mubr.bf16.mxu0 0
      %2753 = vmatmul.mubr.bf16.gmra.mrb[0].mxu0 %v2707
      %v2754 = vpop.f32.mrb[0].mxu0
      %v2755 = vadd.f32 0.0, %v2754
      %v2756 = vpop.f32.mrb[0].mxu0
      %v2757 = vpop.f32.mrb[0].mxu0
      %v2758 = vadd.f32 0.0, %v2757
      %v2759 = vpop.f32.mrb[0].mxu0
      %2760 = vmatprep.mubr.bf16.mxu0 0
      %2761 = vmatmul.mubr.bf16.gmra.mrb[0].mxu0 %v2710
      %v2762 = vpop.f32.mrb[0].mxu0
      %v2763 = vadd.f32 0.0, %v2762
      %v2764 = vpop.f32.mrb[0].mxu0
      %v2765 = vpop.f32.mrb[0].mxu0
      %v2766 = vadd.f32 0.0, %v2765
      %v2767 = vpop.f32.mrb[0].mxu0
      %2768 = vdwg.mxu0
      %v2769 = vadd.f32 %v2642, %v2747
      %v2770 = vadd.f32 %v2643, %v2750
      %v2771 = vadd.f32 %v2644, %v2755
      %v2772 = vadd.f32 %v2645, %v2758
      %v2773 = vadd.f32 %v2646, %v2763
      %v2774 = vadd.f32 %v2647, %v2766
      %v2775 = vmul.f32 %v2769, 0.2
      %v2776 = vmul.f32 %v2770, 0.2
      %v2777 = vmul.f32 %v2771, 0.2
      %v2778 = vmul.f32 %v2772, 0.2
      %v2779 = vmul.f32 %v2773, 0.2
      %v2780 = vmul.f32 %v2774, 0.2
      %v2781 = vmax.f32 %v2769, %v2775
      %v2782 = vmax.f32 %v2770, %v2776
      %v2783 = vmax.f32 %v2771, %v2777
      %v2784 = vmax.f32 %v2772, %v2778
      %v2785 = vmax.f32 %v2773, %v2779
      %v2786 = vmax.f32 %v2774, %v2780
      %v2787 = vpack.c.bf16 %v2782, %v2781
      %v2788 = vpack.c.bf16 %v2784, %v2783
      %v2789 = vpack.c.bf16 %v2786, %v2785
      %v2790 = vld [vmem:[%s5] sm:$0x3]
      %v2791 = vld [vmem:[%s6] sm:$0xf]
      %2793 = vset.pattern.permute.xlu0 0
      %2794 = vperm.xlu0 %2793, %v2791
      %v2795 = vpop.permute.xlu0 %2794
      %v2798 = vsel %vm1719, %v2790, 0
      %2800 = vmatprep.subr.bf16.mxu0 0
      %2801 = vmatpush1.bf16.msra.mxu0 %v2787
      %2802 = vmatprep.subr.bf16.mxu0 0
      %2803 = vmatpush1.bf16.msra.mxu0 %v2788
      %2804 = vmatprep.subr.bf16.mxu0 0
      %2805 = vmatpush1.bf16.msra.mxu0 %v2789
      %2806 = vmatprep.subr.bf16.mxu0 0
      %2807 = vmatpush1.bf16.msra.mxu0 0
      %2808 = vmatprep.subr.bf16.mxu0 0
      %2809 = vmatpush1.bf16.msra.mxu0 0
      %2810 = vmatprep.subr.bf16.mxu0 0
      %2811 = vmatpush1.bf16.msra.mxu0 0
      %2812 = vmatprep.subr.bf16.mxu0 0
      %2813 = vmatpush1.bf16.msra.mxu0 0
      %2814 = vmatprep.subr.bf16.mxu0 0
      %2815 = vmatpush1.bf16.msra.mxu0 0
      %2816 = vmatprep.subr.bf16.mxu0 0
      %2817 = vmatpush1.bf16.msra.mxu0 0
      %2818 = vmatprep.subr.bf16.mxu0 0
      %2819 = vmatpush1.bf16.msra.mxu0 0
      %2820 = vmatprep.subr.bf16.mxu0 0
      %2821 = vmatpush1.bf16.msra.mxu0 0
      %2822 = vmatprep.subr.bf16.mxu0 0
      %2823 = vmatpush1.bf16.msra.mxu0 0
      %2824 = vmatprep.subr.bf16.mxu0 0
      %2825 = vmatpush1.bf16.msra.mxu0 0
      %2826 = vmatprep.subr.bf16.mxu0 0
      %2827 = vmatpush1.bf16.msra.mxu0 0
      %2828 = vmatprep.subr.bf16.mxu0 0
      %2829 = vmatpush1.bf16.msra.mxu0 0
      %2830 = vmatprep.subr.bf16.mxu0 0
      %2831 = vmatpush1.bf16.msra.mxu0 0
      %2832 = vmatprep.mubr.bf16.mxu0 0
      %2833 = vmatmul.mubr.bf16.gmra.mrb[0].mxu0 %v2798
      %v2834 = vpop.f32.mrb[0].mxu0
      %v2835 = vadd.f32 %v2795, %v2834
      %v2836 = vpop.f32.mrb[0].mxu0
      %v2837 = vpop.f32.mrb[0].mxu0
      %v2838 = vpop.f32.mrb[0].mxu0
      %2839 = vdwg.mxu0
      %2840 = vst [vmem:[%s298] sm:$0xf] %v2835
      %p2841 = scmp.lt.s32.totalorder %s22, 1
      %s2842 = scalar_select %p2841, %s22, 1
      %p2843 = scmp.lt.s32.totalorder %s23, 1
      %s2844 = scalar_select %p2843, %s23, 1
      %s2845 = smul.addr %s2842, 2
      %s2846 = sadd.s32 %s2844, %s2845
      %s2847 = smul.addr %s2846, 4
      %s2848 = scalar_lea.vmem %s7, %s2847
      // Predicated region
      $region49: #{network_forward.1} parent=47 // pred_check
        %p2849 = pneg %p202
      $region50: #{network_forward.1} parent=47 // pred_check_branch
        %2851 = sbr.rel (%p2849) target = $region52
      $region51: #{network_forward.1} parent=47 // pred_region
        _
      $region52: #{network_forward.1} parent=47 // pred_fallthru
        _
    $region48: #{network_forward.1} parent=5 // pred_fallthru
      _
    %p2852 = scmp.le.s32.totalorder 2, %s13
    // Predicated region
    $region53: #{network_forward.1} parent=5 // pred_check
      %p2853 = pneg %p2852
    $region54: #{network_forward.1} parent=5 // pred_check_branch
      %2855 = sbr.rel (%p2853) target = $region56
    $region55: #{network_forward.1} parent=5 // pred_region
      %s2856 = ssub.s32 %s13, 2
      // Predicated region
      $region57: #{network_forward.1} parent=55 // pred_check
        %p2857 = pneg %p208
      $region58: #{network_forward.1} parent=55 // pred_check_branch
        %2859 = sbr.rel (%p2857) target = $region60
      $region59: #{network_forward.1} parent=55 // pred_region
        %p2860 = scmp.lt.s32.totalorder %s24, 1
        %s2861 = scalar_select %p2860, %s24, 1
        %p2862 = scmp.lt.s32.totalorder %s25, 1
        %s2863 = scalar_select %p2862, %s25, 1
        %s2864 = smul.addr %s2861, 2
        %s2865 = sadd.s32 %s2863, %s2864
        %s2866 = smul.addr %s2865, 4
        %s2867 = scalar_lea.vmem %s7, %s2866
      $region60: #{network_forward.1} parent=55 // pred_fallthru
        _
    $region56: #{network_forward.1} parent=5 // pred_fallthru
      _
  $region6: #{network_forward.1} parent=0 // loop_footer
    %s17 = sadd.s32 1, %s13
  $region7: #{network_forward.1} parent=0 // loop_footer_branch
    %12 = sbr.rel target = $region3
  $region8: #{network_forward.1} parent=0 // loop_exit
    _

</llo_original>
